<compile_context>
chip_gen: v7x
topology: tpu7x:2x2x1
jax: 0.10.0
libtpu: 0.0.40
codegen_flags: <defaults>
</compile_context>

<pallas_src>
import math

import jax
import jax.numpy as jnp
from jax.experimental import pallas as pl
from jax.experimental.pallas import tpu as pltpu


# ---------------------------------------------------------------------------
# Kernel
# ---------------------------------------------------------------------------
def _sign_pred_kernel(
    x_ref,      # (R, M*H*F)       node-feature slab for this graph chunk (matmul dtype)
    w1_ref,     # (M*H*F, M*H*E)   block-diag FFN layer-1 weights
    w2_ref,     # (M*H*E, M*H*E)   block-diag FFN layer-2 weights
    wp1_ref,    # (M*H*E, M*E)     block-diag (per-branch) projection layer-1
    wp2_ref,    # (M*E,   M*E)     block-diag projection layer-2
    v128_ref,   # (6, M*H*E) f32   rows: b1, alpha_hop, b2, bn_scale, bn_shift, alpha_cat
    v64_ref,    # (3, M*E)   f32   rows: bp1, alpha_proj, bp2
    asel_ref,   # (M*E, M)         attention column, block-diag per branch
    bsel_ref,   # (M, M*E)   f32   branch -> E-wide lane gate rows
    ssel_ref,   # (M*E, E)         branch-sum matrix (stacked identities)
    pool_ref,   # (G, G*N)         per-graph mean-pool block (1/N diag blocks), replicated
    wg12_ref,   # (2, E, E)        graph-pred linears 1 & 2
    bg12_ref,   # (2, E)     f32   their biases
    wg3_ref,    # (E, OUTP)        graph-pred linear 3, zero-padded to 128 lanes
    bg3_ref,    # (1, OUTP)  f32
    out_ref,    # (G, OUTP)  f32
):
    f32 = jnp.float32
    mdt = w1_ref.dtype            # MXU operand dtype (bf16 fast path, f32 exact path)

    def prelu(v, a):
        return jnp.where(v >= 0, v, a * v)

    def leaky(v, s):
        return jnp.where(v >= 0, v, s * v)

    def mm(a, b):                 # MXU matmul: dtype-matched operands, f32 accumulate
        return jnp.dot(a.astype(mdt), b.astype(mdt), preferred_element_type=f32)

    vec = v128_ref[...]                               # (6, M*H*E)
    b1, a_hop, b2, bn_s, bn_b, a_cat = [vec[i:i + 1] for i in range(6)]
    pvec = v64_ref[...]                               # (3, M*E)
    bp1, a_proj, bp2 = [pvec[i:i + 1] for i in range(3)]

    # --- SIGN_v2 on both branches: all (branch, hop) FFNs fused via block-diag weights
    z = mm(x_ref[...], w1_ref[...]) + b1              # (R, MHE)
    z = prelu(z, a_hop)                               # per-hop PReLU (f32 VPU)
    z = mm(z, w2_ref[...]) + b2
    z = z * bn_s + bn_b                               # BatchNorm1d (eval, folded)
    z = prelu(z, a_cat)                               # concat PReLU (per branch)

    p = mm(z, wp1_ref[...]) + bp1                     # (R, M*E)
    p = prelu(p, a_proj)
    reps = mm(p, wp2_ref[...]) + bp2                  # (R, M*E) = [rep0 | rep1]

    # --- attention over the 2 branches: softmax of 2 logits == sigmoid of their diff
    s = leaky(mm(reps, asel_ref[...]), 0.3)           # (R, 2)
    d = s[:, 0:1] - s[:, 1:2]                         # (R, 1)
    w0 = 1.0 / (1.0 + jnp.exp(-d))                    # branch-0 mixing weight
    bsel = bsel_ref[...]                              # (2, M*E) gate rows
    gate = w0 * bsel[0:1] + (1.0 - w0) * bsel[1:2]    # (R, M*E)
    node = mm(reps * gate, ssel_ref[...])             # (R, E) mixed node representation

    # --- per-graph mean pool (matmul against the replicated 1/N pooling block)
    pooled = mm(pool_ref[...], node)                  # (G, E)

    # --- graph_pred_module: Linear -> LeakyReLU(0.01) -> Linear -> LeakyReLU(0.01) -> Linear
    wg = wg12_ref[...]
    bg = bg12_ref[...]
    h = leaky(mm(pooled, wg[0]) + bg[0:1], 0.01)
    h = leaky(mm(h, wg[1]) + bg[1:2], 0.01)
    out_ref[...] = mm(h, wg3_ref[...]) + bg3_ref[...]


# ---------------------------------------------------------------------------
# Host-side packing of the per-(branch, hop) parameters into fused tensors
# ---------------------------------------------------------------------------
def _block_diag(blocks):
    rows = sum(b.shape[0] for b in blocks)
    cols = sum(b.shape[1] for b in blocks)
    out = jnp.zeros((rows, cols), blocks[0].dtype)
    r = c = 0
    for b in blocks:
        out = out.at[r:r + b.shape[0], c:c + b.shape[1]].set(b)
        r += b.shape[0]
        c += b.shape[1]
    return out


def _pack(params, mdt):
    """Pack parameters.  Matmul operands are stored in `mdt` (bf16 by default ->
    native MXU format, half the x_cat DMA bytes); bias / BN / PReLU / gate rows
    stay f32 so the VPU/EUP epilogue runs in full precision (v5e has no bf16 VPU)."""
    w1 = params["w1"]                                  # (M, H, F, E)
    M, H, F, E = w1.shape
    MHE, ME = M * H * E, M * E

    w1bd = _block_diag([w1[m, h] for m in range(M) for h in range(H)]).astype(mdt)
    w2bd = _block_diag([params["w2"][m, h] for m in range(M) for h in range(H)]).astype(mdt)
    wp1bd = _block_diag([params["wp1"][m] for m in range(M)]).astype(mdt)
    wp2bd = _block_diag([params["wp2"][m] for m in range(M)]).astype(mdt)

    al = params["alphas"]                              # (M, H + 2)
    v128 = jnp.stack([
        params["b1"].reshape(MHE),
        jnp.repeat(al[:, :H].reshape(-1), E),          # per-hop PReLU alpha, E-wide
        params["b2"].reshape(MHE),
        params["bn_scale"].reshape(MHE),
        params["bn_shift"].reshape(MHE),
        jnp.repeat(al[:, H], H * E),                   # concat PReLU alpha, H*E-wide
    ]).astype(jnp.float32)
    v64 = jnp.stack([
        params["bp1"].reshape(ME),
        jnp.repeat(al[:, H + 1], E),                   # projection PReLU alpha
        params["bp2"].reshape(ME),
    ]).astype(jnp.float32)

    attn_col = params["attn_t"].reshape(E, 1)
    asel = _block_diag([attn_col] * M).astype(mdt)                          # (ME, M)
    bsel = _block_diag([jnp.ones((1, E), jnp.float32)] * M)                 # (M, ME), f32 gate rows
    ssel = jnp.tile(jnp.eye(E, dtype=jnp.float32), (M, 1)).astype(mdt)      # (ME, E)

    wg12 = jnp.stack([params["wg1"], params["wg2"]]).astype(mdt)            # (2, E, E)
    bg12 = jnp.concatenate([params["bg1"], params["bg2"]], axis=0)          # (2, E) f32
    T = params["wg3"].shape[-1]
    OUTP = ((max(T, 1) + 127) // 128) * 128
    wg3p = jnp.zeros((E, OUTP), mdt).at[:, :T].set(params["wg3"].astype(mdt))
    bg3p = jnp.zeros((1, OUTP), jnp.float32).at[:, :T].set(params["bg3"])

    return (w1bd, w2bd, wp1bd, wp2bd, v128, v64, asel, bsel, ssel,
            wg12, bg12, wg3p, bg3p)


# ---------------------------------------------------------------------------
# Chunking heuristics
# ---------------------------------------------------------------------------
_VMEM_SOFT_CAP = 48 << 20       # stay well under v7x's 64 MiB physical VMEM


def _choose_gpb(B, N, target_rows=2048):
    """Graphs per grid step: ~target_rows node rows per step (amortizes the
    ~0.35us fixed per-step pipeline overhead and feeds the MXU a large M dim),
    multiple of 8 so (gpb*N, .) / (gpb, .) blocks satisfy the sublane rule."""
    if B * N <= target_rows or B < 8:
        return B                                   # whole batch in one program
    gpb = (target_rows // max(N, 1)) // 8 * 8
    return max(8, min(gpb, (B // 8) * 8))


# ---------------------------------------------------------------------------
# Forward wrapper
# ---------------------------------------------------------------------------
def sign_pred_forward(data, params, matmul_dtype=jnp.bfloat16):
    B, M, H, N, F = data.shape
    assert M == 2, "SIGN_pred mixes exactly two branches (sign / sign2)"
    E = params["w1"].shape[-1]
    T = params["wg3"].shape[-1]
    MHF, MHE, ME = M * H * F, M * H * E, M * E
    mdt = jnp.dtype(matmul_dtype)

    consts = _pack(params, mdt)
    OUTP = consts[-2].shape[-1]                    # wg3p lane width (>= 128)

    # --- chunk selection: gpb graphs per grid step; batch zero-padded to a multiple
    gpb = _choose_gpb(B, N)
    const_bytes = sum(int(a.size) * a.dtype.itemsize for a in consts)

    def step_vmem(g):                              # rough per-step VMEM footprint
        rows = g * N
        return (2 * rows * MHF * mdt.itemsize            # double-buffered x block
                + 2 * g * OUTP * 4                        # double-buffered out block
                + rows * (2 * MHE + 2 * ME + E) * 4       # live f32 activations
                + 2 * const_bytes)                        # replicated constants

    while gpb > 8 and step_vmem(gpb) > _VMEM_SOFT_CAP:
        gpb = max(8, (gpb // 2) // 8 * 8)
    # TODO(synk): node-level chunking (needed only if a single chunk with B < 8 /
    # huge N still exceeds VMEM) is not implemented.
    B_pad = -(-B // gpb) * gpb
    rows = gpb * N
    vmem_limit = int(min(56 << 20, max(32 << 20, 2 * step_vmem(gpb))))

    # Per-chunk mean-pool block: identical for every chunk -> one replicated array
    # (replaces the old dense O(B^2*N) pooling matrix).
    pool = jnp.kron(jnp.eye(gpb, dtype=jnp.float32),
                    jnp.full((1, N), 1.0 / N, jnp.float32)).astype(mdt)

    # Node-row slab (graph-major then node) matching torch's permute/reshape and
    # its batch = repeat_interleave(arange(B), N) grouping; zero-pad fake graphs.
    x_cat = jnp.transpose(data, (0, 3, 1, 2, 4)).reshape(B * N, MHF)
    if B_pad != B:
        x_cat = jnp.pad(x_cat, ((0, (B_pad - B) * N), (0, 0)))
    x_cat = x_cat.astype(mdt)

    (w1bd, w2bd, wp1bd, wp2bd, v128, v64, asel, bsel, ssel,
     wg12, bg12, wg3p, bg3p) = consts
    operands = (x_cat, w1bd, w2bd, wp1bd, wp2bd, v128, v64, asel, bsel, ssel,
                pool, wg12, bg12, wg3p, bg3p)

    def run(single_buffer_consts):
        pipe = {"pipeline_mode": pl.Buffered(1)} if single_buffer_consts else {}

        def rep(a):        # replicated constant block (fetched once, not per step)
            nd = a.ndim
            return pl.BlockSpec(a.shape, lambda i, _n=nd: (0,) * _n, **pipe)

        in_specs = ([pl.BlockSpec((rows, MHF), lambda i: (i, 0))]
                    + [rep(a) for a in operands[1:]])
        return pl.pallas_call(
            _sign_pred_kernel,
            grid=(B_pad // gpb,),
            in_specs=in_specs,
            out_specs=pl.BlockSpec((gpb, OUTP), lambda i: (i, 0)),
            out_shape=jax.ShapeDtypeStruct((B_pad, OUTP), jnp.float32),
            compiler_params=pltpu.CompilerParams(
                dimension_semantics=("parallel",),
                vmem_limit_bytes=vmem_limit),
        )(*operands)

    try:
        out = run(True)
    except Exception:      # pl.Buffered(1) unsupported -> default double-buffering
        out = run(False)
    return out[:B, :T]                               # (B, T)


# ---------------------------------------------------------------------------
# Parameter init (mirrors the PyTorch module's initializers)
# ---------------------------------------------------------------------------
def init_params(key, *, num_layer=2, num_feat=38, emb_dim=32, num_tasks=2):
    H, F, E, T, M = num_layer, num_feat, emb_dim, num_tasks, 2
    gain = math.sqrt(2.0)  # nn.init.calculate_gain('relu')
    keys = iter(jax.random.split(key, 64))

    def xavier(shape, g=1.0):
        fan_in, fan_out = shape[-2], shape[-1]
        a = g * math.sqrt(6.0 / (fan_in + fan_out))
        return jax.random.uniform(next(keys), shape, jnp.float32, -a, a)

    def torch_linear(shape):  # default nn.Linear init, weight stored (in, out)
        bound = 1.0 / math.sqrt(shape[0])
        w = jax.random.uniform(next(keys), shape, jnp.float32, -bound, bound)
        b = jax.random.uniform(next(keys), (1, shape[1]), jnp.float32, -bound, bound)
        return w, b

    w1 = jnp.stack([jnp.stack([xavier((F, E), gain) for _ in range(H)]) for _ in range(M)])
    w2 = jnp.stack([jnp.stack([xavier((E, E), gain) for _ in range(H)]) for _ in range(M)])
    b1 = jnp.zeros((M, H, 1, E), jnp.float32)
    b2 = jnp.zeros((M, H, 1, E), jnp.float32)
    eps = 1e-5
    bn_scale = jnp.full((M, H, 1, E), 1.0 / math.sqrt(1.0 + eps), jnp.float32)
    bn_shift = jnp.zeros((M, H, 1, E), jnp.float32)
    wp1 = jnp.stack([xavier((H * E, E), gain) for _ in range(M)])
    wp2 = jnp.stack([xavier((E, E), gain) for _ in range(M)])
    bp1 = jnp.zeros((M, 1, E), jnp.float32)
    bp2 = jnp.zeros((M, 1, E), jnp.float32)
    alphas = jnp.full((M, H + 2), 0.25, jnp.float32)        # PReLU init value
    attn_t = xavier((E, 1)).reshape(1, E)                   # glorot on (emb_dim, 1)
    wg1, bg1 = torch_linear((E, E))
    wg2, bg2 = torch_linear((E, E))
    wg3, bg3 = torch_linear((E, T))
    return dict(w1=w1, b1=b1, w2=w2, b2=b2, bn_scale=bn_scale, bn_shift=bn_shift,
                wp1=wp1, bp1=bp1, wp2=wp2, bp2=bp2, attn_t=attn_t,
                wg1=wg1, bg1=bg1, wg2=wg2, bg2=bg2, wg3=wg3, bg3=bg3, alphas=alphas)


# ---------------------------------------------------------------------------
# Pure-JAX reference mirroring the PyTorch forward (eval-mode BN, dropout p=0)
# ---------------------------------------------------------------------------
def reference_forward(data, params):
    B, M, H, N, F = data.shape
    E = params["w1"].shape[-1]
    x = jnp.transpose(data, (1, 2, 0, 3, 4)).reshape(M, H, B * N, F)

    def prelu(v, a):
        return jnp.where(v >= 0, v, a * v)

    def leaky(v, s):
        return jnp.where(v >= 0, v, s * v)

    reps = []
    for m in range(M):
        hidden = []
        for h in range(H):
            z = x[m, h] @ params["w1"][m, h] + params["b1"][m, h]
            z = prelu(z, params["alphas"][m, h])
            z = z @ params["w2"][m, h] + params["b2"][m, h]
            z = z * params["bn_scale"][m, h] + params["bn_shift"][m, h]
            hidden.append(z)
        cat = prelu(jnp.concatenate(hidden, -1), params["alphas"][m, H])
        p = prelu(cat @ params["wp1"][m] + params["bp1"][m], params["alphas"][m, H + 1])
        reps.append(p @ params["wp2"][m] + params["bp2"][m])
    attn = params["attn_t"]
    geom = leaky(jnp.sum(reps[0] * attn, -1, keepdims=True), 0.3)
    cell = leaky(jnp.sum(reps[1] * attn, -1, keepdims=True), 0.3)
    v = jax.nn.softmax(jnp.concatenate([geom, cell], -1), axis=-1)
    node = v[:, :1] * reps[0] + v[:, 1:] * reps[1]
    pooled = node.reshape(B, N, E).mean(axis=1)
    hgp = leaky(pooled @ params["wg1"] + params["bg1"], 0.01)
    hgp = leaky(hgp @ params["wg2"] + params["bg2"], 0.01)
    return hgp @ params["wg3"] + params["bg3"]


if __name__ == "__main__":
    key = jax.random.PRNGKey(0)
    kp, kd = jax.random.split(key)
    B, N, H, F, E, T = 2, 8, 2, 38, 32, 2
    params = init_params(kp, num_layer=H, num_feat=F, emb_dim=E, num_tasks=T)
    data = jax.random.normal(kd, (B, 2, H, N, F), jnp.float32)

    ref = reference_forward(data, params)

    # Exact path (f32 MXU operands): tight check against the f32 reference.
    out_f32 = jax.block_until_ready(
        sign_pred_forward(data, params, matmul_dtype=jnp.float32))
    assert out_f32.shape == (B, T), out_f32.shape
    assert bool(jnp.all(jnp.isfinite(out_f32)))
    assert bool(jnp.allclose(out_f32, ref, atol=2e-3, rtol=2e-3)), (out_f32, ref)

    # Default fast path (bf16 MXU operands, f32 accumulate / epilogue).
    out = jax.block_until_ready(sign_pred_forward(data, params))
    assert out.shape == (B, T), out.shape
    assert bool(jnp.all(jnp.isfinite(out)))
    assert bool(jnp.allclose(out, ref, atol=5e-2, rtol=5e-2)), (out, ref)

    print("KERNEL_OK")
</pallas_src>

<mosaic_0001>
module attributes {stable_mosaic.version = 11 : i64} {
  func.func @_sign_pred_kernel(%arg0: i32, %arg1: memref<16x152xf32, #tpu.memory_space<vmem>>, %arg2: memref<152x128xf32, #tpu.memory_space<vmem>>, %arg3: memref<128x128xf32, #tpu.memory_space<vmem>>, %arg4: memref<128x64xf32, #tpu.memory_space<vmem>>, %arg5: memref<64x64xf32, #tpu.memory_space<vmem>>, %arg6: memref<6x128xf32, #tpu.memory_space<vmem>>, %arg7: memref<3x64xf32, #tpu.memory_space<vmem>>, %arg8: memref<64x2xf32, #tpu.memory_space<vmem>>, %arg9: memref<2x64xf32, #tpu.memory_space<vmem>>, %arg10: memref<64x32xf32, #tpu.memory_space<vmem>>, %arg11: memref<2x16xf32, #tpu.memory_space<vmem>>, %arg12: memref<2x32x32xf32, #tpu.memory_space<vmem>>, %arg13: memref<2x32xf32, #tpu.memory_space<vmem>>, %arg14: memref<32x128xf32, #tpu.memory_space<vmem>>, %arg15: memref<1x128xf32, #tpu.memory_space<vmem>>, %arg16: memref<2x128xf32, #tpu.memory_space<vmem>>) attributes {dimension_semantics = [#tpu.dimension_semantics<parallel>], iteration_bounds = array<i64: 1>, scalar_prefetch = 0 : i64, scratch_operands = 0 : i64, tpu.core_type = #tpu.core_type<tc>, window_params = [{transform_indices = @transform_0, window_bounds = array<i64: 16, 152>}, {pipeline_mode = #tpu.pipeline_mode<synchronous>, transform_indices = @transform_1, window_bounds = array<i64: 152, 128>}, {pipeline_mode = #tpu.pipeline_mode<synchronous>, transform_indices = @transform_2, window_bounds = array<i64: 128, 128>}, {pipeline_mode = #tpu.pipeline_mode<synchronous>, transform_indices = @transform_3, window_bounds = array<i64: 128, 64>}, {pipeline_mode = #tpu.pipeline_mode<synchronous>, transform_indices = @transform_4, window_bounds = array<i64: 64, 64>}, {pipeline_mode = #tpu.pipeline_mode<synchronous>, transform_indices = @transform_5, window_bounds = array<i64: 6, 128>}, {pipeline_mode = #tpu.pipeline_mode<synchronous>, transform_indices = @transform_6, window_bounds = array<i64: 3, 64>}, {pipeline_mode = #tpu.pipeline_mode<synchronous>, transform_indices = @transform_7, window_bounds = array<i64: 64, 2>}, {pipeline_mode = #tpu.pipeline_mode<synchronous>, transform_indices = @transform_8, window_bounds = array<i64: 2, 64>}, {pipeline_mode = #tpu.pipeline_mode<synchronous>, transform_indices = @transform_9, window_bounds = array<i64: 64, 32>}, {pipeline_mode = #tpu.pipeline_mode<synchronous>, transform_indices = @transform_10, window_bounds = array<i64: 2, 16>}, {pipeline_mode = #tpu.pipeline_mode<synchronous>, transform_indices = @transform_11, window_bounds = array<i64: 2, 32, 32>}, {pipeline_mode = #tpu.pipeline_mode<synchronous>, transform_indices = @transform_12, window_bounds = array<i64: 2, 32>}, {pipeline_mode = #tpu.pipeline_mode<synchronous>, transform_indices = @transform_13, window_bounds = array<i64: 32, 128>}, {pipeline_mode = #tpu.pipeline_mode<synchronous>, transform_indices = @transform_14, window_bounds = array<i64: 1, 128>}, {transform_indices = @transform_15, window_bounds = array<i64: 2, 128>}]} {
    %c0 = arith.constant 0 : index
    %c0_0 = arith.constant 0 : index
    %0 = vector.load %arg6[%c0, %c0_0] : memref<6x128xf32, #tpu.memory_space<vmem>>, vector<6x128xf32>
    %1 = vector.extract_strided_slice %0 {offsets = [0, 0], sizes = [1, 128], strides = [1, 1]} : vector<6x128xf32> to vector<1x128xf32>
    %2 = vector.extract_strided_slice %0 {offsets = [1, 0], sizes = [1, 128], strides = [1, 1]} : vector<6x128xf32> to vector<1x128xf32>
    %3 = vector.extract_strided_slice %0 {offsets = [2, 0], sizes = [1, 128], strides = [1, 1]} : vector<6x128xf32> to vector<1x128xf32>
    %4 = vector.extract_strided_slice %0 {offsets = [3, 0], sizes = [1, 128], strides = [1, 1]} : vector<6x128xf32> to vector<1x128xf32>
    %5 = vector.extract_strided_slice %0 {offsets = [4, 0], sizes = [1, 128], strides = [1, 1]} : vector<6x128xf32> to vector<1x128xf32>
    %6 = vector.extract_strided_slice %0 {offsets = [5, 0], sizes = [1, 128], strides = [1, 1]} : vector<6x128xf32> to vector<1x128xf32>
    %c0_1 = arith.constant 0 : index
    %c0_2 = arith.constant 0 : index
    %7 = vector.load %arg7[%c0_1, %c0_2] : memref<3x64xf32, #tpu.memory_space<vmem>>, vector<3x64xf32>
    %8 = vector.extract_strided_slice %7 {offsets = [0, 0], sizes = [1, 64], strides = [1, 1]} : vector<3x64xf32> to vector<1x64xf32>
    %9 = vector.extract_strided_slice %7 {offsets = [1, 0], sizes = [1, 64], strides = [1, 1]} : vector<3x64xf32> to vector<1x64xf32>
    %10 = vector.extract_strided_slice %7 {offsets = [2, 0], sizes = [1, 64], strides = [1, 1]} : vector<3x64xf32> to vector<1x64xf32>
    %c0_3 = arith.constant 0 : index
    %c0_4 = arith.constant 0 : index
    %11 = vector.load %arg1[%c0_3, %c0_4] : memref<16x152xf32, #tpu.memory_space<vmem>>, vector<16x152xf32>
    %c0_5 = arith.constant 0 : index
    %c0_6 = arith.constant 0 : index
    %12 = vector.load %arg2[%c0_5, %c0_6] : memref<152x128xf32, #tpu.memory_space<vmem>>, vector<152x128xf32>
    %cst = arith.constant dense<0.000000e+00> : vector<16x128xf32>
    %13 = tpu.matmul %11, %12, %cst {dimension_numbers = #tpu.dot_dimension_numbers<[1], [0], [0], [1], [0, 0, 1, 1], [], []>} : vector<16x152xf32>, vector<152x128xf32>, vector<16x128xf32> -> vector<16x128xf32>
    %14 = vector.broadcast %1 : vector<1x128xf32> to vector<16x128xf32>
    %15 = arith.addf %13, %14 : vector<16x128xf32>
    %cst_7 = arith.constant 0.000000e+00 : f32
    %16 = vector.broadcast %cst_7 : f32 to vector<16x128xf32>
    %17 = arith.cmpf oge, %15, %16 : vector<16x128xf32>
    %18 = vector.broadcast %2 : vector<1x128xf32> to vector<16x128xf32>
    %19 = arith.mulf %18, %15 : vector<16x128xf32>
    %20 = arith.select %17, %15, %19 : vector<16x128xi1>, vector<16x128xf32>
    %c0_8 = arith.constant 0 : index
    %c0_9 = arith.constant 0 : index
    %21 = vector.load %arg3[%c0_8, %c0_9] : memref<128x128xf32, #tpu.memory_space<vmem>>, vector<128x128xf32>
    %cst_10 = arith.constant dense<0.000000e+00> : vector<16x128xf32>
    %22 = tpu.matmul %20, %21, %cst_10 {dimension_numbers = #tpu.dot_dimension_numbers<[1], [0], [0], [1], [0, 0, 1, 1], [], []>} : vector<16x128xf32>, vector<128x128xf32>, vector<16x128xf32> -> vector<16x128xf32>
    %23 = vector.broadcast %3 : vector<1x128xf32> to vector<16x128xf32>
    %24 = arith.addf %22, %23 : vector<16x128xf32>
    %25 = vector.broadcast %4 : vector<1x128xf32> to vector<16x128xf32>
    %26 = arith.mulf %24, %25 : vector<16x128xf32>
    %27 = vector.broadcast %5 : vector<1x128xf32> to vector<16x128xf32>
    %28 = arith.addf %26, %27 : vector<16x128xf32>
    %cst_11 = arith.constant 0.000000e+00 : f32
    %29 = vector.broadcast %cst_11 : f32 to vector<16x128xf32>
    %30 = arith.cmpf oge, %28, %29 : vector<16x128xf32>
    %31 = vector.broadcast %6 : vector<1x128xf32> to vector<16x128xf32>
    %32 = arith.mulf %31, %28 : vector<16x128xf32>
    %33 = arith.select %30, %28, %32 : vector<16x128xi1>, vector<16x128xf32>
    %c0_12 = arith.constant 0 : index
    %c0_13 = arith.constant 0 : index
    %34 = vector.load %arg4[%c0_12, %c0_13] : memref<128x64xf32, #tpu.memory_space<vmem>>, vector<128x64xf32>
    %cst_14 = arith.constant dense<0.000000e+00> : vector<16x64xf32>
    %35 = tpu.matmul %33, %34, %cst_14 {dimension_numbers = #tpu.dot_dimension_numbers<[1], [0], [0], [1], [0, 0, 1, 1], [], []>} : vector<16x128xf32>, vector<128x64xf32>, vector<16x64xf32> -> vector<16x64xf32>
    %36 = vector.broadcast %8 : vector<1x64xf32> to vector<16x64xf32>
    %37 = arith.addf %35, %36 : vector<16x64xf32>
    %cst_15 = arith.constant 0.000000e+00 : f32
    %38 = vector.broadcast %cst_15 : f32 to vector<16x64xf32>
    %39 = arith.cmpf oge, %37, %38 : vector<16x64xf32>
    %40 = vector.broadcast %9 : vector<1x64xf32> to vector<16x64xf32>
    %41 = arith.mulf %40, %37 : vector<16x64xf32>
    %42 = arith.select %39, %37, %41 : vector<16x64xi1>, vector<16x64xf32>
    %c0_16 = arith.constant 0 : index
    %c0_17 = arith.constant 0 : index
    %43 = vector.load %arg5[%c0_16, %c0_17] : memref<64x64xf32, #tpu.memory_space<vmem>>, vector<64x64xf32>
    %cst_18 = arith.constant dense<0.000000e+00> : vector<16x64xf32>
    %44 = tpu.matmul %42, %43, %cst_18 {dimension_numbers = #tpu.dot_dimension_numbers<[1], [0], [0], [1], [0, 0, 1, 1], [], []>} : vector<16x64xf32>, vector<64x64xf32>, vector<16x64xf32> -> vector<16x64xf32>
    %45 = vector.broadcast %10 : vector<1x64xf32> to vector<16x64xf32>
    %46 = arith.addf %44, %45 : vector<16x64xf32>
    %c0_19 = arith.constant 0 : index
    %c0_20 = arith.constant 0 : index
    %47 = vector.load %arg8[%c0_19, %c0_20] : memref<64x2xf32, #tpu.memory_space<vmem>>, vector<64x2xf32>
    %cst_21 = arith.constant dense<0.000000e+00> : vector<16x2xf32>
    %48 = tpu.matmul %46, %47, %cst_21 {dimension_numbers = #tpu.dot_dimension_numbers<[1], [0], [0], [1], [0, 0, 1, 1], [], []>} : vector<16x64xf32>, vector<64x2xf32>, vector<16x2xf32> -> vector<16x2xf32>
    %cst_22 = arith.constant 0.000000e+00 : f32
    %49 = vector.broadcast %cst_22 : f32 to vector<16x2xf32>
    %50 = arith.cmpf oge, %48, %49 : vector<16x2xf32>
    %cst_23 = arith.constant 3.000000e-01 : f32
    %51 = vector.broadcast %cst_23 : f32 to vector<16x2xf32>
    %52 = arith.mulf %51, %48 : vector<16x2xf32>
    %53 = arith.select %50, %48, %52 : vector<16x2xi1>, vector<16x2xf32>
    %54 = vector.extract_strided_slice %53 {offsets = [0, 0], sizes = [16, 1], strides = [1, 1]} : vector<16x2xf32> to vector<16x1xf32>
    %55 = vector.extract_strided_slice %53 {offsets = [0, 1], sizes = [16, 1], strides = [1, 1]} : vector<16x2xf32> to vector<16x1xf32>
    %56 = arith.subf %54, %55 : vector<16x1xf32>
    %cst_24 = arith.constant 0.000000e+00 : f32
    %57 = vector.broadcast %cst_24 : f32 to vector<16x1xf32>
    %58 = arith.subf %57, %56 : vector<16x1xf32>
    %59 = math.exp %58 : vector<16x1xf32>
    %cst_25 = arith.constant 1.000000e+00 : f32
    %60 = vector.broadcast %cst_25 : f32 to vector<16x1xf32>
    %61 = arith.addf %60, %59 : vector<16x1xf32>
    %cst_26 = arith.constant 1.000000e+00 : f32
    %62 = vector.broadcast %cst_26 : f32 to vector<16x1xf32>
    %63 = arith.divf %62, %61 : vector<16x1xf32>
    %c0_27 = arith.constant 0 : index
    %c0_28 = arith.constant 0 : index
    %64 = vector.load %arg9[%c0_27, %c0_28] : memref<2x64xf32, #tpu.memory_space<vmem>>, vector<2x64xf32>
    %65 = vector.extract_strided_slice %64 {offsets = [0, 0], sizes = [1, 64], strides = [1, 1]} : vector<2x64xf32> to vector<1x64xf32>
    %66 = vector.broadcast %63 : vector<16x1xf32> to vector<16x64xf32>
    %67 = vector.broadcast %65 : vector<1x64xf32> to vector<16x64xf32>
    %68 = arith.mulf %66, %67 : vector<16x64xf32>
    %cst_29 = arith.constant 1.000000e+00 : f32
    %69 = vector.broadcast %cst_29 : f32 to vector<16x1xf32>
    %70 = arith.subf %69, %63 : vector<16x1xf32>
    %71 = vector.extract_strided_slice %64 {offsets = [1, 0], sizes = [1, 64], strides = [1, 1]} : vector<2x64xf32> to vector<1x64xf32>
    %72 = vector.broadcast %70 : vector<16x1xf32> to vector<16x64xf32>
    %73 = vector.broadcast %71 : vector<1x64xf32> to vector<16x64xf32>
    %74 = arith.mulf %72, %73 : vector<16x64xf32>
    %75 = arith.addf %68, %74 : vector<16x64xf32>
    %76 = arith.mulf %46, %75 : vector<16x64xf32>
    %c0_30 = arith.constant 0 : index
    %c0_31 = arith.constant 0 : index
    %77 = vector.load %arg10[%c0_30, %c0_31] : memref<64x32xf32, #tpu.memory_space<vmem>>, vector<64x32xf32>
    %cst_32 = arith.constant dense<0.000000e+00> : vector<16x32xf32>
    %78 = tpu.matmul %76, %77, %cst_32 {dimension_numbers = #tpu.dot_dimension_numbers<[1], [0], [0], [1], [0, 0, 1, 1], [], []>} : vector<16x64xf32>, vector<64x32xf32>, vector<16x32xf32> -> vector<16x32xf32>
    %c0_33 = arith.constant 0 : index
    %c0_34 = arith.constant 0 : index
    %79 = vector.load %arg11[%c0_33, %c0_34] : memref<2x16xf32, #tpu.memory_space<vmem>>, vector<2x16xf32>
    %cst_35 = arith.constant dense<0.000000e+00> : vector<2x32xf32>
    %80 = tpu.matmul %79, %78, %cst_35 {dimension_numbers = #tpu.dot_dimension_numbers<[1], [0], [0], [1], [0, 0, 1, 1], [], []>} : vector<2x16xf32>, vector<16x32xf32>, vector<2x32xf32> -> vector<2x32xf32>
    %c0_36 = arith.constant 0 : index
    %c0_37 = arith.constant 0 : index
    %c0_38 = arith.constant 0 : index
    %81 = vector.load %arg12[%c0_36, %c0_37, %c0_38] : memref<2x32x32xf32, #tpu.memory_space<vmem>>, vector<2x32x32xf32>
    %c0_39 = arith.constant 0 : index
    %c0_40 = arith.constant 0 : index
    %82 = vector.load %arg13[%c0_39, %c0_40] : memref<2x32xf32, #tpu.memory_space<vmem>>, vector<2x32xf32>
    %83 = vector.extract_strided_slice %81 {offsets = [0, 0, 0], sizes = [1, 32, 32], strides = [1, 1, 1]} : vector<2x32x32xf32> to vector<1x32x32xf32>
    %84 = vector.shape_cast %83 : vector<1x32x32xf32> to vector<32x32xf32>
    %cst_41 = arith.constant dense<0.000000e+00> : vector<2x32xf32>
    %85 = tpu.matmul %80, %84, %cst_41 {dimension_numbers = #tpu.dot_dimension_numbers<[1], [0], [0], [1], [0, 0, 1, 1], [], []>} : vector<2x32xf32>, vector<32x32xf32>, vector<2x32xf32> -> vector<2x32xf32>
    %86 = vector.extract_strided_slice %82 {offsets = [0, 0], sizes = [1, 32], strides = [1, 1]} : vector<2x32xf32> to vector<1x32xf32>
    %87 = vector.broadcast %86 : vector<1x32xf32> to vector<2x32xf32>
    %88 = arith.addf %85, %87 : vector<2x32xf32>
    %cst_42 = arith.constant 0.000000e+00 : f32
    %89 = vector.broadcast %cst_42 : f32 to vector<2x32xf32>
    %90 = arith.cmpf oge, %88, %89 : vector<2x32xf32>
    %cst_43 = arith.constant 0.00999999977 : f32
    %91 = vector.broadcast %cst_43 : f32 to vector<2x32xf32>
    %92 = arith.mulf %91, %88 : vector<2x32xf32>
    %93 = arith.select %90, %88, %92 : vector<2x32xi1>, vector<2x32xf32>
    %94 = vector.extract_strided_slice %81 {offsets = [1, 0, 0], sizes = [1, 32, 32], strides = [1, 1, 1]} : vector<2x32x32xf32> to vector<1x32x32xf32>
    %95 = vector.shape_cast %94 : vector<1x32x32xf32> to vector<32x32xf32>
    %cst_44 = arith.constant dense<0.000000e+00> : vector<2x32xf32>
    %96 = tpu.matmul %93, %95, %cst_44 {dimension_numbers = #tpu.dot_dimension_numbers<[1], [0], [0], [1], [0, 0, 1, 1], [], []>} : vector<2x32xf32>, vector<32x32xf32>, vector<2x32xf32> -> vector<2x32xf32>
    %97 = vector.extract_strided_slice %82 {offsets = [1, 0], sizes = [1, 32], strides = [1, 1]} : vector<2x32xf32> to vector<1x32xf32>
    %98 = vector.broadcast %97 : vector<1x32xf32> to vector<2x32xf32>
    %99 = arith.addf %96, %98 : vector<2x32xf32>
    %cst_45 = arith.constant 0.000000e+00 : f32
    %100 = vector.broadcast %cst_45 : f32 to vector<2x32xf32>
    %101 = arith.cmpf oge, %99, %100 : vector<2x32xf32>
    %cst_46 = arith.constant 0.00999999977 : f32
    %102 = vector.broadcast %cst_46 : f32 to vector<2x32xf32>
    %103 = arith.mulf %102, %99 : vector<2x32xf32>
    %104 = arith.select %101, %99, %103 : vector<2x32xi1>, vector<2x32xf32>
    %c0_47 = arith.constant 0 : index
    %c0_48 = arith.constant 0 : index
    %105 = vector.load %arg14[%c0_47, %c0_48] : memref<32x128xf32, #tpu.memory_space<vmem>>, vector<32x128xf32>
    %cst_49 = arith.constant dense<0.000000e+00> : vector<2x128xf32>
    %106 = tpu.matmul %104, %105, %cst_49 {dimension_numbers = #tpu.dot_dimension_numbers<[1], [0], [0], [1], [0, 0, 1, 1], [], []>} : vector<2x32xf32>, vector<32x128xf32>, vector<2x128xf32> -> vector<2x128xf32>
    %c0_50 = arith.constant 0 : index
    %c0_51 = arith.constant 0 : index
    %107 = vector.load %arg15[%c0_50, %c0_51] : memref<1x128xf32, #tpu.memory_space<vmem>>, vector<1x128xf32>
    %108 = vector.broadcast %107 : vector<1x128xf32> to vector<2x128xf32>
    %109 = arith.addf %106, %108 : vector<2x128xf32>
    %c0_52 = arith.constant 0 : index
    %c0_53 = arith.constant 0 : index
    %110 = vector.load %arg16[%c0_52, %c0_53] : memref<2x128xf32, #tpu.memory_space<vmem>>, vector<2x128xf32>
    tpu.vector_store %arg16[%c0_52, %c0_53], %109 {strides = array<i32>} : memref<2x128xf32, #tpu.memory_space<vmem>>, vector<2x128xf32>,
    return
  }
  func.func @transform_0(%arg0: i32) -> (i32, i32) {
    %c0_i32 = arith.constant 0 : i32
    %c0_i32_0 = arith.constant 0 : i32
    return %arg0, %c0_i32 : i32, i32
  }
  func.func @transform_1(%arg0: i32) -> (i32, i32) {
    %c0_i32 = arith.constant 0 : i32
    %c0_i32_0 = arith.constant 0 : i32
    %c0_i32_1 = arith.constant 0 : i32
    return %c0_i32, %c0_i32_0 : i32, i32
  }
  func.func @transform_2(%arg0: i32) -> (i32, i32) {
    %c0_i32 = arith.constant 0 : i32
    %c0_i32_0 = arith.constant 0 : i32
    %c0_i32_1 = arith.constant 0 : i32
    return %c0_i32, %c0_i32_0 : i32, i32
  }
  func.func @transform_3(%arg0: i32) -> (i32, i32) {
    %c0_i32 = arith.constant 0 : i32
    %c0_i32_0 = arith.constant 0 : i32
    %c0_i32_1 = arith.constant 0 : i32
    return %c0_i32, %c0_i32_0 : i32, i32
  }
  func.func @transform_4(%arg0: i32) -> (i32, i32) {
    %c0_i32 = arith.constant 0 : i32
    %c0_i32_0 = arith.constant 0 : i32
    %c0_i32_1 = arith.constant 0 : i32
    return %c0_i32, %c0_i32_0 : i32, i32
  }
  func.func @transform_5(%arg0: i32) -> (i32, i32) {
    %c0_i32 = arith.constant 0 : i32
    %c0_i32_0 = arith.constant 0 : i32
    %c0_i32_1 = arith.constant 0 : i32
    return %c0_i32, %c0_i32_0 : i32, i32
  }
  func.func @transform_6(%arg0: i32) -> (i32, i32) {
    %c0_i32 = arith.constant 0 : i32
    %c0_i32_0 = arith.constant 0 : i32
    %c0_i32_1 = arith.constant 0 : i32
    return %c0_i32, %c0_i32_0 : i32, i32
  }
  func.func @transform_7(%arg0: i32) -> (i32, i32) {
    %c0_i32 = arith.constant 0 : i32
    %c0_i32_0 = arith.constant 0 : i32
    %c0_i32_1 = arith.constant 0 : i32
    return %c0_i32, %c0_i32_0 : i32, i32
  }
  func.func @transform_8(%arg0: i32) -> (i32, i32) {
    %c0_i32 = arith.constant 0 : i32
    %c0_i32_0 = arith.constant 0 : i32
    %c0_i32_1 = arith.constant 0 : i32
    return %c0_i32, %c0_i32_0 : i32, i32
  }
  func.func @transform_9(%arg0: i32) -> (i32, i32) {
    %c0_i32 = arith.constant 0 : i32
    %c0_i32_0 = arith.constant 0 : i32
    %c0_i32_1 = arith.constant 0 : i32
    return %c0_i32, %c0_i32_0 : i32, i32
  }
  func.func @transform_10(%arg0: i32) -> (i32, i32) {
    %c0_i32 = arith.constant 0 : i32
    %c0_i32_0 = arith.constant 0 : i32
    %c0_i32_1 = arith.constant 0 : i32
    return %c0_i32, %c0_i32_0 : i32, i32
  }
  func.func @transform_11(%arg0: i32) -> (i32, i32, i32) {
    %c0_i32 = arith.constant 0 : i32
    %c0_i32_0 = arith.constant 0 : i32
    %c0_i32_1 = arith.constant 0 : i32
    %c0_i32_2 = arith.constant 0 : i32
    return %c0_i32, %c0_i32_0, %c0_i32_1 : i32, i32, i32
  }
  func.func @transform_12(%arg0: i32) -> (i32, i32) {
    %c0_i32 = arith.constant 0 : i32
    %c0_i32_0 = arith.constant 0 : i32
    %c0_i32_1 = arith.constant 0 : i32
    return %c0_i32, %c0_i32_0 : i32, i32
  }
  func.func @transform_13(%arg0: i32) -> (i32, i32) {
    %c0_i32 = arith.constant 0 : i32
    %c0_i32_0 = arith.constant 0 : i32
    %c0_i32_1 = arith.constant 0 : i32
    return %c0_i32, %c0_i32_0 : i32, i32
  }
  func.func @transform_14(%arg0: i32) -> (i32, i32) {
    %c0_i32 = arith.constant 0 : i32
    %c0_i32_0 = arith.constant 0 : i32
    %c0_i32_1 = arith.constant 0 : i32
    return %c0_i32, %c0_i32_0 : i32, i32
  }
  func.func @transform_15(%arg0: i32) -> (i32, i32) {
    %c0_i32 = arith.constant 0 : i32
    %c0_i32_0 = arith.constant 0 : i32
    return %arg0, %c0_i32 : i32, i32
  }
}

module attributes {stable_mosaic.version = 11 : i64} {
  func.func @_sign_pred_kernel(%arg0: i32, %arg1: memref<16x152xf32, #tpu.memory_space<vmem>>, %arg2: memref<152x128xf32, #tpu.memory_space<vmem>>, %arg3: memref<128x128xf32, #tpu.memory_space<vmem>>, %arg4: memref<128x64xf32, #tpu.memory_space<vmem>>, %arg5: memref<64x64xf32, #tpu.memory_space<vmem>>, %arg6: memref<6x128xf32, #tpu.memory_space<vmem>>, %arg7: memref<3x64xf32, #tpu.memory_space<vmem>>, %arg8: memref<64x2xf32, #tpu.memory_space<vmem>>, %arg9: memref<2x64xf32, #tpu.memory_space<vmem>>, %arg10: memref<64x32xf32, #tpu.memory_space<vmem>>, %arg11: memref<2x16xf32, #tpu.memory_space<vmem>>, %arg12: memref<2x32x32xf32, #tpu.memory_space<vmem>>, %arg13: memref<2x32xf32, #tpu.memory_space<vmem>>, %arg14: memref<32x128xf32, #tpu.memory_space<vmem>>, %arg15: memref<1x128xf32, #tpu.memory_space<vmem>>, %arg16: memref<2x128xf32, #tpu.memory_space<vmem>>) attributes {dimension_semantics = [#tpu.dimension_semantics<parallel>], iteration_bounds = array<i64: 1>, scalar_prefetch = 0 : i64, scratch_operands = 0 : i64, tpu.core_type = #tpu.core_type<tc>, window_params = [{transform_indices = @transform_0, window_bounds = array<i64: 16, 152>}, {pipeline_mode = #tpu.pipeline_mode<synchronous>, transform_indices = @transform_1, window_bounds = array<i64: 152, 128>}, {pipeline_mode = #tpu.pipeline_mode<synchronous>, transform_indices = @transform_2, window_bounds = array<i64: 128, 128>}, {pipeline_mode = #tpu.pipeline_mode<synchronous>, transform_indices = @transform_3, window_bounds = array<i64: 128, 64>}, {pipeline_mode = #tpu.pipeline_mode<synchronous>, transform_indices = @transform_4, window_bounds = array<i64: 64, 64>}, {pipeline_mode = #tpu.pipeline_mode<synchronous>, transform_indices = @transform_5, window_bounds = array<i64: 6, 128>}, {pipeline_mode = #tpu.pipeline_mode<synchronous>, transform_indices = @transform_6, window_bounds = array<i64: 3, 64>}, {pipeline_mode = #tpu.pipeline_mode<synchronous>, transform_indices = @transform_7, window_bounds = array<i64: 64, 2>}, {pipeline_mode = #tpu.pipeline_mode<synchronous>, transform_indices = @transform_8, window_bounds = array<i64: 2, 64>}, {pipeline_mode = #tpu.pipeline_mode<synchronous>, transform_indices = @transform_9, window_bounds = array<i64: 64, 32>}, {pipeline_mode = #tpu.pipeline_mode<synchronous>, transform_indices = @transform_10, window_bounds = array<i64: 2, 16>}, {pipeline_mode = #tpu.pipeline_mode<synchronous>, transform_indices = @transform_11, window_bounds = array<i64: 2, 32, 32>}, {pipeline_mode = #tpu.pipeline_mode<synchronous>, transform_indices = @transform_12, window_bounds = array<i64: 2, 32>}, {pipeline_mode = #tpu.pipeline_mode<synchronous>, transform_indices = @transform_13, window_bounds = array<i64: 32, 128>}, {pipeline_mode = #tpu.pipeline_mode<synchronous>, transform_indices = @transform_14, window_bounds = array<i64: 1, 128>}, {transform_indices = @transform_15, window_bounds = array<i64: 2, 128>}]} {
    %c0 = arith.constant 0 : index
    %c0_0 = arith.constant 0 : index
    %0 = vector.load %arg6[%c0, %c0_0] : memref<6x128xf32, #tpu.memory_space<vmem>>, vector<6x128xf32>
    %1 = vector.extract_strided_slice %0 {offsets = [0, 0], sizes = [1, 128], strides = [1, 1]} : vector<6x128xf32> to vector<1x128xf32>
    %2 = vector.extract_strided_slice %0 {offsets = [1, 0], sizes = [1, 128], strides = [1, 1]} : vector<6x128xf32> to vector<1x128xf32>
    %3 = vector.extract_strided_slice %0 {offsets = [2, 0], sizes = [1, 128], strides = [1, 1]} : vector<6x128xf32> to vector<1x128xf32>
    %4 = vector.extract_strided_slice %0 {offsets = [3, 0], sizes = [1, 128], strides = [1, 1]} : vector<6x128xf32> to vector<1x128xf32>
    %5 = vector.extract_strided_slice %0 {offsets = [4, 0], sizes = [1, 128], strides = [1, 1]} : vector<6x128xf32> to vector<1x128xf32>
    %6 = vector.extract_strided_slice %0 {offsets = [5, 0], sizes = [1, 128], strides = [1, 1]} : vector<6x128xf32> to vector<1x128xf32>
    %c0_1 = arith.constant 0 : index
    %c0_2 = arith.constant 0 : index
    %7 = vector.load %arg7[%c0_1, %c0_2] : memref<3x64xf32, #tpu.memory_space<vmem>>, vector<3x64xf32>
    %8 = vector.extract_strided_slice %7 {offsets = [0, 0], sizes = [1, 64], strides = [1, 1]} : vector<3x64xf32> to vector<1x64xf32>
    %9 = vector.extract_strided_slice %7 {offsets = [1, 0], sizes = [1, 64], strides = [1, 1]} : vector<3x64xf32> to vector<1x64xf32>
    %10 = vector.extract_strided_slice %7 {offsets = [2, 0], sizes = [1, 64], strides = [1, 1]} : vector<3x64xf32> to vector<1x64xf32>
    %c0_3 = arith.constant 0 : index
    %c0_4 = arith.constant 0 : index
    %11 = vector.load %arg1[%c0_3, %c0_4] : memref<16x152xf32, #tpu.memory_space<vmem>>, vector<16x152xf32>
    %c0_5 = arith.constant 0 : index
    %c0_6 = arith.constant 0 : index
    %12 = vector.load %arg2[%c0_5, %c0_6] : memref<152x128xf32, #tpu.memory_space<vmem>>, vector<152x128xf32>
    %cst = arith.constant dense<0.000000e+00> : vector<16x128xf32>
    %13 = tpu.matmul %11, %12, %cst {dimension_numbers = #tpu.dot_dimension_numbers<[1], [0], [0], [1], [0, 0, 1, 1], [], []>} : vector<16x152xf32>, vector<152x128xf32>, vector<16x128xf32> -> vector<16x128xf32>
    %14 = vector.broadcast %1 : vector<1x128xf32> to vector<16x128xf32>
    %15 = arith.addf %13, %14 : vector<16x128xf32>
    %cst_7 = arith.constant 0.000000e+00 : f32
    %16 = vector.broadcast %cst_7 : f32 to vector<16x128xf32>
    %17 = arith.cmpf oge, %15, %16 : vector<16x128xf32>
    %18 = vector.broadcast %2 : vector<1x128xf32> to vector<16x128xf32>
    %19 = arith.mulf %18, %15 : vector<16x128xf32>
    %20 = arith.select %17, %15, %19 : vector<16x128xi1>, vector<16x128xf32>
    %c0_8 = arith.constant 0 : index
    %c0_9 = arith.constant 0 : index
    %21 = vector.load %arg3[%c0_8, %c0_9] : memref<128x128xf32, #tpu.memory_space<vmem>>, vector<128x128xf32>
    %cst_10 = arith.constant dense<0.000000e+00> : vector<16x128xf32>
    %22 = tpu.matmul %20, %21, %cst_10 {dimension_numbers = #tpu.dot_dimension_numbers<[1], [0], [0], [1], [0, 0, 1, 1], [], []>} : vector<16x128xf32>, vector<128x128xf32>, vector<16x128xf32> -> vector<16x128xf32>
    %23 = vector.broadcast %3 : vector<1x128xf32> to vector<16x128xf32>
    %24 = arith.addf %22, %23 : vector<16x128xf32>
    %25 = vector.broadcast %4 : vector<1x128xf32> to vector<16x128xf32>
    %26 = arith.mulf %24, %25 : vector<16x128xf32>
    %27 = vector.broadcast %5 : vector<1x128xf32> to vector<16x128xf32>
    %28 = arith.addf %26, %27 : vector<16x128xf32>
    %cst_11 = arith.constant 0.000000e+00 : f32
    %29 = vector.broadcast %cst_11 : f32 to vector<16x128xf32>
    %30 = arith.cmpf oge, %28, %29 : vector<16x128xf32>
    %31 = vector.broadcast %6 : vector<1x128xf32> to vector<16x128xf32>
    %32 = arith.mulf %31, %28 : vector<16x128xf32>
    %33 = arith.select %30, %28, %32 : vector<16x128xi1>, vector<16x128xf32>
    %c0_12 = arith.constant 0 : index
    %c0_13 = arith.constant 0 : index
    %34 = vector.load %arg4[%c0_12, %c0_13] : memref<128x64xf32, #tpu.memory_space<vmem>>, vector<128x64xf32>
    %cst_14 = arith.constant dense<0.000000e+00> : vector<16x64xf32>
    %35 = tpu.matmul %33, %34, %cst_14 {dimension_numbers = #tpu.dot_dimension_numbers<[1], [0], [0], [1], [0, 0, 1, 1], [], []>} : vector<16x128xf32>, vector<128x64xf32>, vector<16x64xf32> -> vector<16x64xf32>
    %36 = vector.broadcast %8 : vector<1x64xf32> to vector<16x64xf32>
    %37 = arith.addf %35, %36 : vector<16x64xf32>
    %cst_15 = arith.constant 0.000000e+00 : f32
    %38 = vector.broadcast %cst_15 : f32 to vector<16x64xf32>
    %39 = arith.cmpf oge, %37, %38 : vector<16x64xf32>
    %40 = vector.broadcast %9 : vector<1x64xf32> to vector<16x64xf32>
    %41 = arith.mulf %40, %37 : vector<16x64xf32>
    %42 = arith.select %39, %37, %41 : vector<16x64xi1>, vector<16x64xf32>
    %c0_16 = arith.constant 0 : index
    %c0_17 = arith.constant 0 : index
    %43 = vector.load %arg5[%c0_16, %c0_17] : memref<64x64xf32, #tpu.memory_space<vmem>>, vector<64x64xf32>
    %cst_18 = arith.constant dense<0.000000e+00> : vector<16x64xf32>
    %44 = tpu.matmul %42, %43, %cst_18 {dimension_numbers = #tpu.dot_dimension_numbers<[1], [0], [0], [1], [0, 0, 1, 1], [], []>} : vector<16x64xf32>, vector<64x64xf32>, vector<16x64xf32> -> vector<16x64xf32>
    %45 = vector.broadcast %10 : vector<1x64xf32> to vector<16x64xf32>
    %46 = arith.addf %44, %45 : vector<16x64xf32>
    %c0_19 = arith.constant 0 : index
    %c0_20 = arith.constant 0 : index
    %47 = vector.load %arg8[%c0_19, %c0_20] : memref<64x2xf32, #tpu.memory_space<vmem>>, vector<64x2xf32>
    %cst_21 = arith.constant dense<0.000000e+00> : vector<16x2xf32>
    %48 = tpu.matmul %46, %47, %cst_21 {dimension_numbers = #tpu.dot_dimension_numbers<[1], [0], [0], [1], [0, 0, 1, 1], [], []>} : vector<16x64xf32>, vector<64x2xf32>, vector<16x2xf32> -> vector<16x2xf32>
    %cst_22 = arith.constant 0.000000e+00 : f32
    %49 = vector.broadcast %cst_22 : f32 to vector<16x2xf32>
    %50 = arith.cmpf oge, %48, %49 : vector<16x2xf32>
    %cst_23 = arith.constant 3.000000e-01 : f32
    %51 = vector.broadcast %cst_23 : f32 to vector<16x2xf32>
    %52 = arith.mulf %51, %48 : vector<16x2xf32>
    %53 = arith.select %50, %48, %52 : vector<16x2xi1>, vector<16x2xf32>
    %54 = vector.extract_strided_slice %53 {offsets = [0, 0], sizes = [16, 1], strides = [1, 1]} : vector<16x2xf32> to vector<16x1xf32>
    %55 = vector.extract_strided_slice %53 {offsets = [0, 1], sizes = [16, 1], strides = [1, 1]} : vector<16x2xf32> to vector<16x1xf32>
    %56 = arith.subf %54, %55 : vector<16x1xf32>
    %cst_24 = arith.constant 0.000000e+00 : f32
    %57 = vector.broadcast %cst_24 : f32 to vector<16x1xf32>
    %58 = arith.subf %57, %56 : vector<16x1xf32>
    %59 = math.exp %58 : vector<16x1xf32>
    %cst_25 = arith.constant 1.000000e+00 : f32
    %60 = vector.broadcast %cst_25 : f32 to vector<16x1xf32>
    %61 = arith.addf %60, %59 : vector<16x1xf32>
    %cst_26 = arith.constant 1.000000e+00 : f32
    %62 = vector.broadcast %cst_26 : f32 to vector<16x1xf32>
    %63 = arith.divf %62, %61 : vector<16x1xf32>
    %c0_27 = arith.constant 0 : index
    %c0_28 = arith.constant 0 : index
    %64 = vector.load %arg9[%c0_27, %c0_28] : memref<2x64xf32, #tpu.memory_space<vmem>>, vector<2x64xf32>
    %65 = vector.extract_strided_slice %64 {offsets = [0, 0], sizes = [1, 64], strides = [1, 1]} : vector<2x64xf32> to vector<1x64xf32>
    %66 = vector.broadcast %63 : vector<16x1xf32> to vector<16x64xf32>
    %67 = vector.broadcast %65 : vector<1x64xf32> to vector<16x64xf32>
    %68 = arith.mulf %66, %67 : vector<16x64xf32>
    %cst_29 = arith.constant 1.000000e+00 : f32
    %69 = vector.broadcast %cst_29 : f32 to vector<16x1xf32>
    %70 = arith.subf %69, %63 : vector<16x1xf32>
    %71 = vector.extract_strided_slice %64 {offsets = [1, 0], sizes = [1, 64], strides = [1, 1]} : vector<2x64xf32> to vector<1x64xf32>
    %72 = vector.broadcast %70 : vector<16x1xf32> to vector<16x64xf32>
    %73 = vector.broadcast %71 : vector<1x64xf32> to vector<16x64xf32>
    %74 = arith.mulf %72, %73 : vector<16x64xf32>
    %75 = arith.addf %68, %74 : vector<16x64xf32>
    %76 = arith.mulf %46, %75 : vector<16x64xf32>
    %c0_30 = arith.constant 0 : index
    %c0_31 = arith.constant 0 : index
    %77 = vector.load %arg10[%c0_30, %c0_31] : memref<64x32xf32, #tpu.memory_space<vmem>>, vector<64x32xf32>
    %cst_32 = arith.constant dense<0.000000e+00> : vector<16x32xf32>
    %78 = tpu.matmul %76, %77, %cst_32 {dimension_numbers = #tpu.dot_dimension_numbers<[1], [0], [0], [1], [0, 0, 1, 1], [], []>} : vector<16x64xf32>, vector<64x32xf32>, vector<16x32xf32> -> vector<16x32xf32>
    %c0_33 = arith.constant 0 : index
    %c0_34 = arith.constant 0 : index
    %79 = vector.load %arg11[%c0_33, %c0_34] : memref<2x16xf32, #tpu.memory_space<vmem>>, vector<2x16xf32>
    %cst_35 = arith.constant dense<0.000000e+00> : vector<2x32xf32>
    %80 = tpu.matmul %79, %78, %cst_35 {dimension_numbers = #tpu.dot_dimension_numbers<[1], [0], [0], [1], [0, 0, 1, 1], [], []>} : vector<2x16xf32>, vector<16x32xf32>, vector<2x32xf32> -> vector<2x32xf32>
    %c0_36 = arith.constant 0 : index
    %c0_37 = arith.constant 0 : index
    %c0_38 = arith.constant 0 : index
    %81 = vector.load %arg12[%c0_36, %c0_37, %c0_38] : memref<2x32x32xf32, #tpu.memory_space<vmem>>, vector<2x32x32xf32>
    %c0_39 = arith.constant 0 : index
    %c0_40 = arith.constant 0 : index
    %82 = vector.load %arg13[%c0_39, %c0_40] : memref<2x32xf32, #tpu.memory_space<vmem>>, vector<2x32xf32>
    %83 = vector.extract_strided_slice %81 {offsets = [0, 0, 0], sizes = [1, 32, 32], strides = [1, 1, 1]} : vector<2x32x32xf32> to vector<1x32x32xf32>
    %84 = vector.shape_cast %83 : vector<1x32x32xf32> to vector<32x32xf32>
    %cst_41 = arith.constant dense<0.000000e+00> : vector<2x32xf32>
    %85 = tpu.matmul %80, %84, %cst_41 {dimension_numbers = #tpu.dot_dimension_numbers<[1], [0], [0], [1], [0, 0, 1, 1], [], []>} : vector<2x32xf32>, vector<32x32xf32>, vector<2x32xf32> -> vector<2x32xf32>
    %86 = vector.extract_strided_slice %82 {offsets = [0, 0], sizes = [1, 32], strides = [1, 1]} : vector<2x32xf32> to vector<1x32xf32>
    %87 = vector.broadcast %86 : vector<1x32xf32> to vector<2x32xf32>
    %88 = arith.addf %85, %87 : vector<2x32xf32>
    %cst_42 = arith.constant 0.000000e+00 : f32
    %89 = vector.broadcast %cst_42 : f32 to vector<2x32xf32>
    %90 = arith.cmpf oge, %88, %89 : vector<2x32xf32>
    %cst_43 = arith.constant 0.00999999977 : f32
    %91 = vector.broadcast %cst_43 : f32 to vector<2x32xf32>
    %92 = arith.mulf %91, %88 : vector<2x32xf32>
    %93 = arith.select %90, %88, %92 : vector<2x32xi1>, vector<2x32xf32>
    %94 = vector.extract_strided_slice %81 {offsets = [1, 0, 0], sizes = [1, 32, 32], strides = [1, 1, 1]} : vector<2x32x32xf32> to vector<1x32x32xf32>
    %95 = vector.shape_cast %94 : vector<1x32x32xf32> to vector<32x32xf32>
    %cst_44 = arith.constant dense<0.000000e+00> : vector<2x32xf32>
    %96 = tpu.matmul %93, %95, %cst_44 {dimension_numbers = #tpu.dot_dimension_numbers<[1], [0], [0], [1], [0, 0, 1, 1], [], []>} : vector<2x32xf32>, vector<32x32xf32>, vector<2x32xf32> -> vector<2x32xf32>
    %97 = vector.extract_strided_slice %82 {offsets = [1, 0], sizes = [1, 32], strides = [1, 1]} : vector<2x32xf32> to vector<1x32xf32>
    %98 = vector.broadcast %97 : vector<1x32xf32> to vector<2x32xf32>
    %99 = arith.addf %96, %98 : vector<2x32xf32>
    %cst_45 = arith.constant 0.000000e+00 : f32
    %100 = vector.broadcast %cst_45 : f32 to vector<2x32xf32>
    %101 = arith.cmpf oge, %99, %100 : vector<2x32xf32>
    %cst_46 = arith.constant 0.00999999977 : f32
    %102 = vector.broadcast %cst_46 : f32 to vector<2x32xf32>
    %103 = arith.mulf %102, %99 : vector<2x32xf32>
    %104 = arith.select %101, %99, %103 : vector<2x32xi1>, vector<2x32xf32>
    %c0_47 = arith.constant 0 : index
    %c0_48 = arith.constant 0 : index
    %105 = vector.load %arg14[%c0_47, %c0_48] : memref<32x128xf32, #tpu.memory_space<vmem>>, vector<32x128xf32>
    %cst_49 = arith.constant dense<0.000000e+00> : vector<2x128xf32>
    %106 = tpu.matmul %104, %105, %cst_49 {dimension_numbers = #tpu.dot_dimension_numbers<[1], [0], [0], [1], [0, 0, 1, 1], [], []>} : vector<2x32xf32>, vector<32x128xf32>, vector<2x128xf32> -> vector<2x128xf32>
    %c0_50 = arith.constant 0 : index
    %c0_51 = arith.constant 0 : index
    %107 = vector.load %arg15[%c0_50, %c0_51] : memref<1x128xf32, #tpu.memory_space<vmem>>, vector<1x128xf32>
    %108 = vector.broadcast %107 : vector<1x128xf32> to vector<2x128xf32>
    %109 = arith.addf %106, %108 : vector<2x128xf32>
    %c0_52 = arith.constant 0 : index
    %c0_53 = arith.constant 0 : index
    %110 = vector.load %arg16[%c0_52, %c0_53] : memref<2x128xf32, #tpu.memory_space<vmem>>, vector<2x128xf32>
    tpu.vector_store %arg16[%c0_52, %c0_53], %109 {strides = array<i32>} : memref<2x128xf32, #tpu.memory_space<vmem>>, vector<2x128xf32>,
    return
  }
  func.func @transform_0(%arg0: i32) -> (i32, i32) {
    %c0_i32 = arith.constant 0 : i32
    %c0_i32_0 = arith.constant 0 : i32
    return %arg0, %c0_i32 : i32, i32
  }
  func.func @transform_1(%arg0: i32) -> (i32, i32) {
    %c0_i32 = arith.constant 0 : i32
    %c0_i32_0 = arith.constant 0 : i32
    %c0_i32_1 = arith.constant 0 : i32
    return %c0_i32, %c0_i32_0 : i32, i32
  }
  func.func @transform_2(%arg0: i32) -> (i32, i32) {
    %c0_i32 = arith.constant 0 : i32
    %c0_i32_0 = arith.constant 0 : i32
    %c0_i32_1 = arith.constant 0 : i32
    return %c0_i32, %c0_i32_0 : i32, i32
  }
  func.func @transform_3(%arg0: i32) -> (i32, i32) {
    %c0_i32 = arith.constant 0 : i32
    %c0_i32_0 = arith.constant 0 : i32
    %c0_i32_1 = arith.constant 0 : i32
    return %c0_i32, %c0_i32_0 : i32, i32
  }
  func.func @transform_4(%arg0: i32) -> (i32, i32) {
    %c0_i32 = arith.constant 0 : i32
    %c0_i32_0 = arith.constant 0 : i32
    %c0_i32_1 = arith.constant 0 : i32
    return %c0_i32, %c0_i32_0 : i32, i32
  }
  func.func @transform_5(%arg0: i32) -> (i32, i32) {
    %c0_i32 = arith.constant 0 : i32
    %c0_i32_0 = arith.constant 0 : i32
    %c0_i32_1 = arith.constant 0 : i32
    return %c0_i32, %c0_i32_0 : i32, i32
  }
  func.func @transform_6(%arg0: i32) -> (i32, i32) {
    %c0_i32 = arith.constant 0 : i32
    %c0_i32_0 = arith.constant 0 : i32
    %c0_i32_1 = arith.constant 0 : i32
    return %c0_i32, %c0_i32_0 : i32, i32
  }
  func.func @transform_7(%arg0: i32) -> (i32, i32) {
    %c0_i32 = arith.constant 0 : i32
    %c0_i32_0 = arith.constant 0 : i32
    %c0_i32_1 = arith.constant 0 : i32
    return %c0_i32, %c0_i32_0 : i32, i32
  }
  func.func @transform_8(%arg0: i32) -> (i32, i32) {
    %c0_i32 = arith.constant 0 : i32
    %c0_i32_0 = arith.constant 0 : i32
    %c0_i32_1 = arith.constant 0 : i32
    return %c0_i32, %c0_i32_0 : i32, i32
  }
  func.func @transform_9(%arg0: i32) -> (i32, i32) {
    %c0_i32 = arith.constant 0 : i32
    %c0_i32_0 = arith.constant 0 : i32
    %c0_i32_1 = arith.constant 0 : i32
    return %c0_i32, %c0_i32_0 : i32, i32
  }
  func.func @transform_10(%arg0: i32) -> (i32, i32) {
    %c0_i32 = arith.constant 0 : i32
    %c0_i32_0 = arith.constant 0 : i32
    %c0_i32_1 = arith.constant 0 : i32
    return %c0_i32, %c0_i32_0 : i32, i32
  }
  func.func @transform_11(%arg0: i32) -> (i32, i32, i32) {
    %c0_i32 = arith.constant 0 : i32
    %c0_i32_0 = arith.constant 0 : i32
    %c0_i32_1 = arith.constant 0 : i32
    %c0_i32_2 = arith.constant 0 : i32
    return %c0_i32, %c0_i32_0, %c0_i32_1 : i32, i32, i32
  }
  func.func @transform_12(%arg0: i32) -> (i32, i32) {
    %c0_i32 = arith.constant 0 : i32
    %c0_i32_0 = arith.constant 0 : i32
    %c0_i32_1 = arith.constant 0 : i32
    return %c0_i32, %c0_i32_0 : i32, i32
  }
  func.func @transform_13(%arg0: i32) -> (i32, i32) {
    %c0_i32 = arith.constant 0 : i32
    %c0_i32_0 = arith.constant 0 : i32
    %c0_i32_1 = arith.constant 0 : i32
    return %c0_i32, %c0_i32_0 : i32, i32
  }
  func.func @transform_14(%arg0: i32) -> (i32, i32) {
    %c0_i32 = arith.constant 0 : i32
    %c0_i32_0 = arith.constant 0 : i32
    %c0_i32_1 = arith.constant 0 : i32
    return %c0_i32, %c0_i32_0 : i32, i32
  }
  func.func @transform_15(%arg0: i32) -> (i32, i32) {
    %c0_i32 = arith.constant 0 : i32
    %c0_i32_0 = arith.constant 0 : i32
    return %arg0, %c0_i32 : i32, i32
  }
}

</mosaic_0001>

<llo_original>
// kernel: tpu_custom_call.1
$region0: #{tpu_custom_call.1}
  #allocation0 [shape = 'u32[]', space=smem, size = 0x4, offset = 0x4, fixed_abs, tag = 'smem constant byte address 0x4 - core index']
  #allocation1 [shape = 'u32[144,128]{1,0:T(1,128)}', space=vmem, size = 0x12000, scoped, tag = 'internal scratch']
  %s0 = inlined_call_operand.hbm [shape: f32[16,152], index: 0, kind: input, shape index: {}]
  %s1 = inlined_call_operand.vmem [shape: f32[152,128], index: 1, kind: input, shape index: {}]
  %s2 = inlined_call_operand.vmem [shape: f32[128,128], index: 2, kind: input, shape index: {}]
  %s3 = inlined_call_operand.vmem [shape: f32[128,64], index: 3, kind: input, shape index: {}]
  %s4 = inlined_call_operand.hbm [shape: f32[64,64], index: 4, kind: input, shape index: {}]
  %s5 = inlined_call_operand.hbm [shape: f32[6,128], index: 5, kind: input, shape index: {}]
  %s6 = inlined_call_operand.hbm [shape: f32[3,64], index: 6, kind: input, shape index: {}]
  %s7 = inlined_call_operand.vmem [shape: f32[64,2], index: 7, kind: input, shape index: {}]
  %s8 = inlined_call_operand.vmem [shape: f32[2,64], index: 8, kind: input, shape index: {}]
  %s9 = inlined_call_operand.vmem [shape: f32[64,32], index: 9, kind: input, shape index: {}]
  %s10 = inlined_call_operand.vmem [shape: f32[2,16], index: 10, kind: input, shape index: {}]
  %s11 = inlined_call_operand.hbm [shape: f32[2,32,32], index: 11, kind: input, shape index: {}]
  %s12 = inlined_call_operand.vmem [shape: f32[2,32], index: 12, kind: input, shape index: {}]
  %s13 = inlined_call_operand.hbm [shape: f32[32,128], index: 13, kind: input, shape index: {}]
  %s14 = inlined_call_operand.vmem [shape: f32[1,128], index: 14, kind: input, shape index: {}]
  %s15 = inlined_call_operand.hbm [shape: f32[2,128], index: 15, kind: output, shape index: {}]
  %s16 = sld [smem:[#allocation0]]
  $region94: #{tpu_custom_call.1} parent=0
    _
  %s18 = ssub.s32 1, %s16
  %s19 = scalar_select 0, %s18, %s16
  $region1: #{tpu_custom_call.1} parent=0
    #allocation2 [shape = 'u8[16384]{0}', space=vmem, size = 0x4000, scoped, tag = 'input window, operand 0, single buffered']
    #allocation3 [shape = 's32[1]{0}', space=sflag, size = 0x4, scoped, tag = 'scoped memory for tpu_custom_call.1']
    #allocation4 [shape = 's32[1]{0}', space=sflag, size = 0x4, scoped, tag = 'scoped memory for tpu_custom_call.1']
    #allocation5 [shape = 'u8[32768]{0}', space=vmem, size = 0x8000, scoped, tag = 'input window, operand 4, single buffered']
    #allocation6 [shape = 's32[1]{0}', space=sflag, size = 0x4, scoped, tag = 'scoped memory for tpu_custom_call.1']
    #allocation7 [shape = 'u8[4096]{0}', space=vmem, size = 0x1000, scoped, tag = 'input window, operand 5, single buffered']
    #allocation8 [shape = 'u8[2048]{0}', space=vmem, size = 0x800, scoped, tag = 'input window, operand 6, single buffered']
    #allocation9 [shape = 's32[1]{0}', space=sflag, size = 0x4, scoped, tag = 'scoped memory for tpu_custom_call.1']
    #allocation10 [shape = 'u8[32768]{0}', space=vmem, size = 0x8000, scoped, tag = 'input window, operand 11, single buffered']
    #allocation11 [shape = 'u8[16384]{0}', space=vmem, size = 0x4000, scoped, tag = 'input window, operand 13, single buffered']
    #allocation12 [shape = 's32[1]{0}', space=sflag, size = 0x4, scoped, tag = 'scoped memory for tpu_custom_call.1']
    #allocation13 [shape = 'u8[1024]{0}', space=vmem, size = 0x400, scoped, tag = 'output window, operand 0, single buffered']
    %20 = vsyncpa [#allocation3], 0
    %21 = vsyncpa [#allocation6], 0
    %22 = vsyncpa [#allocation9], 0
    %23 = vsyncpa [#allocation12], 0
    %24 = vsyncpa [#allocation4], 0
    // Predicated region
    $region2: #{tpu_custom_call.1} parent=1 // pred_check
      _
    $region3: #{tpu_custom_call.1} parent=1 // pred_check_branch
      %26 = sbr.rel (0) target = $region5
    $region4: #{tpu_custom_call.1} parent=1 // pred_region
      %s28 = ssub.s32 512, 512
      %29 = vsyncadd [#allocation3], %s28
      %s30 = sshll.u32 [#allocation2], 4
      %s31 = int_to_ptr.vmem [resolvable:$true] %s30
      %36 = dma.hbm_to_vmem [thread:$0]  %s0, 512, %s31, [#allocation3], 256, 256, 16
    $region5: #{tpu_custom_call.1} parent=1 // pred_fallthru
      _
    // Predicated region
    $region6: #{tpu_custom_call.1} parent=1 // pred_check
      _
    $region7: #{tpu_custom_call.1} parent=1 // pred_check_branch
      %38 = sbr.rel (0) target = $region9
    $region8: #{tpu_custom_call.1} parent=1 // pred_region
      _
    $region9: #{tpu_custom_call.1} parent=1 // pred_fallthru
      _
    // Predicated region
    $region10: #{tpu_custom_call.1} parent=1 // pred_check
      _
    $region11: #{tpu_custom_call.1} parent=1 // pred_check_branch
      %40 = sbr.rel (0) target = $region13
    $region12: #{tpu_custom_call.1} parent=1 // pred_region
      _
    $region13: #{tpu_custom_call.1} parent=1 // pred_fallthru
      _
    // Predicated region
    $region14: #{tpu_custom_call.1} parent=1 // pred_check
      _
    $region15: #{tpu_custom_call.1} parent=1 // pred_check_branch
      %42 = sbr.rel (0) target = $region17
    $region16: #{tpu_custom_call.1} parent=1 // pred_region
      _
    $region17: #{tpu_custom_call.1} parent=1 // pred_fallthru
      _
    // Predicated region
    $region18: #{tpu_custom_call.1} parent=1 // pred_check
      _
    $region19: #{tpu_custom_call.1} parent=1 // pred_check_branch
      %44 = sbr.rel (0) target = $region21
    $region20: #{tpu_custom_call.1} parent=1 // pred_region
      %s46 = ssub.s32 1024, 1024
      %47 = vsyncadd [#allocation6], %s46
      %s48 = sshll.u32 [#allocation5], 4
      %s49 = int_to_ptr.vmem [resolvable:$true] %s48
      %54 = dma.hbm_to_vmem [thread:$0]  %s4, 1024, %s49, [#allocation6], 128, 128, 8
    $region21: #{tpu_custom_call.1} parent=1 // pred_fallthru
      _
    // Predicated region
    $region22: #{tpu_custom_call.1} parent=1 // pred_check
      _
    $region23: #{tpu_custom_call.1} parent=1 // pred_check_branch
      %56 = sbr.rel (0) target = $region25
    $region24: #{tpu_custom_call.1} parent=1 // pred_region
      %s58 = ssub.s32 128, 128
      %59 = vsyncadd [#allocation6], %s58
      %s61 = sshll.u32 [#allocation7], 4
      %s62 = int_to_ptr.vmem [resolvable:$true] %s61
      %64 = dma.hbm_to_vmem [thread:$0]  %s5, 128, %s62, [#allocation6]
    $region25: #{tpu_custom_call.1} parent=1 // pred_fallthru
      _
    // Predicated region
    $region26: #{tpu_custom_call.1} parent=1 // pred_check
      _
    $region27: #{tpu_custom_call.1} parent=1 // pred_check_branch
      %66 = sbr.rel (0) target = $region29
    $region28: #{tpu_custom_call.1} parent=1 // pred_region
      %s68 = ssub.s32 64, 64
      %69 = vsyncadd [#allocation9], %s68
      %s71 = sshll.u32 [#allocation8], 4
      %s72 = int_to_ptr.vmem [resolvable:$true] %s71
      %74 = dma.hbm_to_vmem [thread:$0]  %s6, 64, %s72, [#allocation9]
    $region29: #{tpu_custom_call.1} parent=1 // pred_fallthru
      _
    // Predicated region
    $region30: #{tpu_custom_call.1} parent=1 // pred_check
      _
    $region31: #{tpu_custom_call.1} parent=1 // pred_check_branch
      %76 = sbr.rel (0) target = $region33
    $region32: #{tpu_custom_call.1} parent=1 // pred_region
      _
    $region33: #{tpu_custom_call.1} parent=1 // pred_fallthru
      _
    // Predicated region
    $region34: #{tpu_custom_call.1} parent=1 // pred_check
      _
    $region35: #{tpu_custom_call.1} parent=1 // pred_check_branch
      %78 = sbr.rel (0) target = $region37
    $region36: #{tpu_custom_call.1} parent=1 // pred_region
      _
    $region37: #{tpu_custom_call.1} parent=1 // pred_fallthru
      _
    // Predicated region
    $region38: #{tpu_custom_call.1} parent=1 // pred_check
      _
    $region39: #{tpu_custom_call.1} parent=1 // pred_check_branch
      %80 = sbr.rel (0) target = $region41
    $region40: #{tpu_custom_call.1} parent=1 // pred_region
      _
    $region41: #{tpu_custom_call.1} parent=1 // pred_fallthru
      _
    // Predicated region
    $region42: #{tpu_custom_call.1} parent=1 // pred_check
      _
    $region43: #{tpu_custom_call.1} parent=1 // pred_check_branch
      %82 = sbr.rel (0) target = $region45
    $region44: #{tpu_custom_call.1} parent=1 // pred_region
      _
    $region45: #{tpu_custom_call.1} parent=1 // pred_fallthru
      _
    // Predicated region
    $region46: #{tpu_custom_call.1} parent=1 // pred_check
      _
    $region47: #{tpu_custom_call.1} parent=1 // pred_check_branch
      %84 = sbr.rel (0) target = $region49
    $region48: #{tpu_custom_call.1} parent=1 // pred_region
      %s86 = ssub.s32 1024, 1024
      %87 = vsyncadd [#allocation9], %s86
      %s88 = sshll.u32 [#allocation10], 4
      %s89 = int_to_ptr.vmem [resolvable:$true] %s88
      %94 = dma.hbm_to_vmem [thread:$0]  %s11, 1024, %s89, [#allocation9], 128, 128, 8
    $region49: #{tpu_custom_call.1} parent=1 // pred_fallthru
      _
    // Predicated region
    $region50: #{tpu_custom_call.1} parent=1 // pred_check
      _
    $region51: #{tpu_custom_call.1} parent=1 // pred_check_branch
      %96 = sbr.rel (0) target = $region53
    $region52: #{tpu_custom_call.1} parent=1 // pred_region
      _
    $region53: #{tpu_custom_call.1} parent=1 // pred_fallthru
      _
    // Predicated region
    $region54: #{tpu_custom_call.1} parent=1 // pred_check
      _
    $region55: #{tpu_custom_call.1} parent=1 // pred_check_branch
      %98 = sbr.rel (0) target = $region57
    $region56: #{tpu_custom_call.1} parent=1 // pred_region
      %s100 = ssub.s32 512, 512
      %101 = vsyncadd [#allocation12], %s100
      %s102 = sshll.u32 [#allocation11], 4
      %s103 = int_to_ptr.vmem [resolvable:$true] %s102
      %108 = dma.hbm_to_vmem [thread:$0]  %s13, 512, %s103, [#allocation12], 128, 128, 8
    $region57: #{tpu_custom_call.1} parent=1 // pred_fallthru
      _
    // Predicated region
    $region58: #{tpu_custom_call.1} parent=1 // pred_check
      _
    $region59: #{tpu_custom_call.1} parent=1 // pred_check_branch
      %110 = sbr.rel (0) target = $region61
    $region60: #{tpu_custom_call.1} parent=1 // pred_region
      _
    $region61: #{tpu_custom_call.1} parent=1 // pred_fallthru
      _
    // Predicated region
    $region62: #{tpu_custom_call.1} parent=1 // pred_check
      _
    $region63: #{tpu_custom_call.1} parent=1 // pred_check_branch
      %112 = sbr.rel (0) target = $region65
    $region64: #{tpu_custom_call.1} parent=1 // pred_region
      %113 = dma.done [#allocation3], 512
    $region65: #{tpu_custom_call.1} parent=1 // pred_fallthru
      _
    // Predicated region
    $region66: #{tpu_custom_call.1} parent=1 // pred_check
      _
    $region67: #{tpu_custom_call.1} parent=1 // pred_check_branch
      %115 = sbr.rel (0) target = $region69
    $region68: #{tpu_custom_call.1} parent=1 // pred_region
      %116 = dma.done [#allocation6], 1024
    $region69: #{tpu_custom_call.1} parent=1 // pred_fallthru
      _
    // Predicated region
    $region70: #{tpu_custom_call.1} parent=1 // pred_check
      _
    $region71: #{tpu_custom_call.1} parent=1 // pred_check_branch
      %118 = sbr.rel (0) target = $region73
    $region72: #{tpu_custom_call.1} parent=1 // pred_region
      %119 = dma.done [#allocation6], 128
    $region73: #{tpu_custom_call.1} parent=1 // pred_fallthru
      _
    // Predicated region
    $region74: #{tpu_custom_call.1} parent=1 // pred_check
      _
    $region75: #{tpu_custom_call.1} parent=1 // pred_check_branch
      %121 = sbr.rel (0) target = $region77
    $region76: #{tpu_custom_call.1} parent=1 // pred_region
      %122 = dma.done [#allocation9], 64
    $region77: #{tpu_custom_call.1} parent=1 // pred_fallthru
      _
    // Predicated region
    $region78: #{tpu_custom_call.1} parent=1 // pred_check
      _
    $region79: #{tpu_custom_call.1} parent=1 // pred_check_branch
      %124 = sbr.rel (0) target = $region81
    $region80: #{tpu_custom_call.1} parent=1 // pred_region
      %125 = dma.done [#allocation9], 1024
    $region81: #{tpu_custom_call.1} parent=1 // pred_fallthru
      _
    // Predicated region
    $region82: #{tpu_custom_call.1} parent=1 // pred_check
      _
    $region83: #{tpu_custom_call.1} parent=1 // pred_check_branch
      %127 = sbr.rel (0) target = $region85
    $region84: #{tpu_custom_call.1} parent=1 // pred_region
      %128 = dma.done [#allocation12], 512
    $region85: #{tpu_custom_call.1} parent=1 // pred_fallthru
      _
    %v129 = vld [vmem:[#allocation7] sm:$0x3f]
    %v130 = vld [vmem:[#allocation8] sm:$0x7]
    %v131 = vld [vmem:[#allocation2] sm:$0xff]
    %v132 = vld [vmem:[#allocation2 + $0x8] sm:$0xff]
    %v133 = vld [vmem:[#allocation2 + $0x10] sm:$0xff]
    %v134 = vld [vmem:[#allocation2 + $0x18] sm:$0xff]
    %v135 = vld [vmem:[%s1] sm:$0xff]
    %v136 = vld [vmem:[%s1 + $0x8] sm:$0xff]
    %v137 = vld [vmem:[%s1 + $0x10] sm:$0xff]
    %v138 = vld [vmem:[%s1 + $0x18] sm:$0xff]
    %v139 = vld [vmem:[%s1 + $0x20] sm:$0xff]
    %v140 = vld [vmem:[%s1 + $0x28] sm:$0xff]
    %v141 = vld [vmem:[%s1 + $0x30] sm:$0xff]
    %v142 = vld [vmem:[%s1 + $0x38] sm:$0xff]
    %v143 = vld [vmem:[%s1 + $0x40] sm:$0xff]
    %v144 = vld [vmem:[%s1 + $0x48] sm:$0xff]
    %v145 = vld [vmem:[%s1 + $0x50] sm:$0xff]
    %v146 = vld [vmem:[%s1 + $0x58] sm:$0xff]
    %v147 = vld [vmem:[%s1 + $0x60] sm:$0xff]
    %v148 = vld [vmem:[%s1 + $0x68] sm:$0xff]
    %v149 = vld [vmem:[%s1 + $0x70] sm:$0xff]
    %v150 = vld [vmem:[%s1 + $0x78] sm:$0xff]
    %v151 = vld [vmem:[%s1 + $0x80] sm:$0xff]
    %v152 = vld [vmem:[%s1 + $0x88] sm:$0xff]
    %v153 = vld [vmem:[%s1 + $0x90] sm:$0xff]
    %v154 = vlaneseq
    %v155 = vshrl.u32 %v154, 7
    %v156 = vsub.s32 0, %v155
    %v157 = vrot.slane %v129, %v156
    %vm158 = vcmask 195584
    %v160 = vsel %vm158, %v132, 0
    %v163 = vsel %vm158, %v134, 0
    %165 = vmatprep.subr.mxu0 0.0
    %166 = vmatpush1.msra.mxu0 %v135
    %167 = vmatprep.subr.mxu0 0.0
    %168 = vmatpush1.msra.mxu0 %v136
    %169 = vmatprep.subr.mxu0 0.0
    %170 = vmatpush1.msra.mxu0 %v137
    %171 = vmatprep.subr.mxu0 0.0
    %172 = vmatpush1.msra.mxu0 %v138
    %173 = vmatprep.subr.mxu0 0.0
    %174 = vmatpush1.msra.mxu0 %v139
    %175 = vmatprep.subr.mxu0 0.0
    %176 = vmatpush1.msra.mxu0 %v140
    %177 = vmatprep.subr.mxu0 0.0
    %178 = vmatpush1.msra.mxu0 %v141
    %179 = vmatprep.subr.mxu0 0.0
    %180 = vmatpush1.msra.mxu0 %v142
    %181 = vmatprep.subr.mxu0 0.0
    %182 = vmatpush1.msra.mxu0 %v143
    %183 = vmatprep.subr.mxu0 0.0
    %184 = vmatpush1.msra.mxu0 %v144
    %185 = vmatprep.subr.mxu0 0.0
    %186 = vmatpush1.msra.mxu0 %v145
    %187 = vmatprep.subr.mxu0 0.0
    %188 = vmatpush1.msra.mxu0 %v146
    %189 = vmatprep.subr.mxu0 0.0
    %190 = vmatpush1.msra.mxu0 %v147
    %191 = vmatprep.subr.mxu0 0.0
    %192 = vmatpush1.msra.mxu0 %v148
    %193 = vmatprep.subr.mxu0 0.0
    %194 = vmatpush1.msra.mxu0 %v149
    %195 = vmatprep.subr.mxu0 0.0
    %196 = vmatpush1.msra.mxu0 %v150
    %197 = vmatprep.subr.mxu0 0.0
    %198 = vmatpush1.msra.mxu0 %v151
    %199 = vmatprep.subr.mxu0 0.0
    %200 = vmatpush1.msra.mxu0 %v152
    %201 = vmatprep.subr.mxu0 0.0
    %202 = vmatpush1.msra.mxu0 %v153
    %203 = vmatprep.subr.mxu0 0.0
    %204 = vmatpush1.msra.mxu0 0.0
    %205 = vmatprep.subr.mxu0 0.0
    %206 = vmatpush1.msra.mxu0 0.0
    %207 = vmatprep.subr.mxu0 0.0
    %208 = vmatpush1.msra.mxu0 0.0
    %209 = vmatprep.subr.mxu0 0.0
    %210 = vmatpush1.msra.mxu0 0.0
    %211 = vmatprep.subr.mxu0 0.0
    %212 = vmatpush1.msra.mxu0 0.0
    %213 = vmatprep.subr.mxu0 0.0
    %214 = vmatpush1.msra.mxu0 0.0
    %215 = vmatprep.subr.mxu0 0.0
    %216 = vmatpush1.msra.mxu0 0.0
    %217 = vmatprep.subr.mxu0 0.0
    %218 = vmatpush1.msra.mxu0 0.0
    %219 = vmatprep.subr.mxu0 0.0
    %220 = vmatpush1.msra.mxu0 0.0
    %221 = vmatprep.subr.mxu0 0.0
    %222 = vmatpush1.msra.mxu0 0.0
    %223 = vmatprep.subr.mxu0 0.0
    %224 = vmatpush1.msra.mxu0 0.0
    %225 = vmatprep.subr.mxu0 0.0
    %226 = vmatpush1.msra.mxu0 0.0
    %227 = vmatprep.subr.mxu0 0.0
    %228 = vmatpush1.msra.mxu0 0.0
    %229 = vmatprep.mubr.f32.mxu0 %v160
    %230 = vmatmul.mubr.f32.gmra.mrb[0].mxu0 %v131
    %v231 = vpop.f32.mrb[0].mxu0
    %v232 = vadd.f32 %v157, %v231
    %v233 = vpop.f32.mrb[0].mxu0
    %234 = vmatprep.mubr.f32.mxu0 %v163
    %235 = vmatmul.mubr.f32.gmra.mrb[0].mxu0 %v133
    %v236 = vpop.f32.mrb[0].mxu0
    %v237 = vadd.f32 %v157, %v236
    %v238 = vpop.f32.mrb[0].mxu0
    %239 = vdwg.mxu0
    %vm240 = vcmp.ge.f32.partialorder %v232, 0.0
    %vm241 = vcmp.ge.f32.partialorder %v237, 0.0
    %v242 = vlaneseq
    %v243 = vshrl.u32 %v242, 7
    %v244 = vsub.s32 1, %v243
    %v245 = vrot.slane %v129, %v244
    %v246 = vmul.f32 %v245, %v232
    %v247 = vmul.f32 %v245, %v237
    %v248 = vsel %vm240, %v232, %v246
    %v249 = vsel %vm241, %v237, %v247
    %v250 = vld [vmem:[%s2] sm:$0xff]
    %v251 = vld [vmem:[%s2 + $0x8] sm:$0xff]
    %v252 = vld [vmem:[%s2 + $0x10] sm:$0xff]
    %v253 = vld [vmem:[%s2 + $0x18] sm:$0xff]
    %v254 = vld [vmem:[%s2 + $0x20] sm:$0xff]
    %v255 = vld [vmem:[%s2 + $0x28] sm:$0xff]
    %v256 = vld [vmem:[%s2 + $0x30] sm:$0xff]
    %v257 = vld [vmem:[%s2 + $0x38] sm:$0xff]
    %v258 = vld [vmem:[%s2 + $0x40] sm:$0xff]
    %v259 = vld [vmem:[%s2 + $0x48] sm:$0xff]
    %v260 = vld [vmem:[%s2 + $0x50] sm:$0xff]
    %v261 = vld [vmem:[%s2 + $0x58] sm:$0xff]
    %v262 = vld [vmem:[%s2 + $0x60] sm:$0xff]
    %v263 = vld [vmem:[%s2 + $0x68] sm:$0xff]
    %v264 = vld [vmem:[%s2 + $0x70] sm:$0xff]
    %v265 = vld [vmem:[%s2 + $0x78] sm:$0xff]
    %v266 = vlaneseq
    %v267 = vshrl.u32 %v266, 7
    %v268 = vsub.s32 2, %v267
    %v269 = vrot.slane %v129, %v268
    %270 = vmatprep.subr.mxu0 0.0
    %271 = vmatpush1.msra.mxu0 %v250
    %272 = vmatprep.subr.mxu0 0.0
    %273 = vmatpush1.msra.mxu0 %v251
    %274 = vmatprep.subr.mxu0 0.0
    %275 = vmatpush1.msra.mxu0 %v252
    %276 = vmatprep.subr.mxu0 0.0
    %277 = vmatpush1.msra.mxu0 %v253
    %278 = vmatprep.subr.mxu0 0.0
    %279 = vmatpush1.msra.mxu0 %v254
    %280 = vmatprep.subr.mxu0 0.0
    %281 = vmatpush1.msra.mxu0 %v255
    %282 = vmatprep.subr.mxu0 0.0
    %283 = vmatpush1.msra.mxu0 %v256
    %284 = vmatprep.subr.mxu0 0.0
    %285 = vmatpush1.msra.mxu0 %v257
    %286 = vmatprep.subr.mxu0 0.0
    %287 = vmatpush1.msra.mxu0 %v258
    %288 = vmatprep.subr.mxu0 0.0
    %289 = vmatpush1.msra.mxu0 %v259
    %290 = vmatprep.subr.mxu0 0.0
    %291 = vmatpush1.msra.mxu0 %v260
    %292 = vmatprep.subr.mxu0 0.0
    %293 = vmatpush1.msra.mxu0 %v261
    %294 = vmatprep.subr.mxu0 0.0
    %295 = vmatpush1.msra.mxu0 %v262
    %296 = vmatprep.subr.mxu0 0.0
    %297 = vmatpush1.msra.mxu0 %v263
    %298 = vmatprep.subr.mxu0 0.0
    %299 = vmatpush1.msra.mxu0 %v264
    %300 = vmatprep.subr.mxu0 0.0
    %301 = vmatpush1.msra.mxu0 %v265
    %302 = vmatprep.subr.mxu0 0.0
    %303 = vmatpush1.msra.mxu0 0.0
    %304 = vmatprep.subr.mxu0 0.0
    %305 = vmatpush1.msra.mxu0 0.0
    %306 = vmatprep.subr.mxu0 0.0
    %307 = vmatpush1.msra.mxu0 0.0
    %308 = vmatprep.subr.mxu0 0.0
    %309 = vmatpush1.msra.mxu0 0.0
    %310 = vmatprep.subr.mxu0 0.0
    %311 = vmatpush1.msra.mxu0 0.0
    %312 = vmatprep.subr.mxu0 0.0
    %313 = vmatpush1.msra.mxu0 0.0
    %314 = vmatprep.subr.mxu0 0.0
    %315 = vmatpush1.msra.mxu0 0.0
    %316 = vmatprep.subr.mxu0 0.0
    %317 = vmatpush1.msra.mxu0 0.0
    %318 = vmatprep.subr.mxu0 0.0
    %319 = vmatpush1.msra.mxu0 0.0
    %320 = vmatprep.subr.mxu0 0.0
    %321 = vmatpush1.msra.mxu0 0.0
    %322 = vmatprep.subr.mxu0 0.0
    %323 = vmatpush1.msra.mxu0 0.0
    %324 = vmatprep.subr.mxu0 0.0
    %325 = vmatpush1.msra.mxu0 0.0
    %326 = vmatprep.subr.mxu0 0.0
    %327 = vmatpush1.msra.mxu0 0.0
    %328 = vmatprep.subr.mxu0 0.0
    %329 = vmatpush1.msra.mxu0 0.0
    %330 = vmatprep.subr.mxu0 0.0
    %331 = vmatpush1.msra.mxu0 0.0
    %332 = vmatprep.subr.mxu0 0.0
    %333 = vmatpush1.msra.mxu0 0.0
    %334 = vmatprep.mubr.f32.mxu0 0.0
    %335 = vmatmul.mubr.f32.gmra.mrb[0].mxu0 %v248
    %v336 = vpop.f32.mrb[0].mxu0
    %v337 = vadd.f32 %v269, %v336
    %v338 = vpop.f32.mrb[0].mxu0
    %339 = vmatprep.mubr.f32.mxu0 0.0
    %340 = vmatmul.mubr.f32.gmra.mrb[0].mxu0 %v249
    %v341 = vpop.f32.mrb[0].mxu0
    %v342 = vadd.f32 %v269, %v341
    %v343 = vpop.f32.mrb[0].mxu0
    %344 = vdwg.mxu0
    %v345 = vlaneseq
    %v346 = vshrl.u32 %v345, 7
    %v347 = vsub.s32 3, %v346
    %v348 = vrot.slane %v129, %v347
    %v349 = vmul.f32 %v337, %v348
    %v350 = vmul.f32 %v342, %v348
    %v351 = vlaneseq
    %v352 = vshrl.u32 %v351, 7
    %v353 = vsub.s32 4, %v352
    %v354 = vrot.slane %v129, %v353
    %v355 = vadd.f32 %v349, %v354
    %v356 = vadd.f32 %v350, %v354
    %vm357 = vcmp.ge.f32.partialorder %v355, 0.0
    %vm358 = vcmp.ge.f32.partialorder %v356, 0.0
    %v359 = vlaneseq
    %v360 = vshrl.u32 %v359, 7
    %v361 = vsub.s32 5, %v360
    %v362 = vrot.slane %v129, %v361
    %v363 = vmul.f32 %v362, %v355
    %v364 = vmul.f32 %v362, %v356
    %v365 = vsel %vm357, %v355, %v363
    %v366 = vsel %vm358, %v356, %v364
    %v367 = vld [vmem:[%s3] sm:$0xff]
    %v368 = vld [vmem:[%s3 + $0x8] sm:$0xff]
    %v369 = vld [vmem:[%s3 + $0x10] sm:$0xff]
    %v370 = vld [vmem:[%s3 + $0x18] sm:$0xff]
    %v371 = vld [vmem:[%s3 + $0x20] sm:$0xff]
    %v372 = vld [vmem:[%s3 + $0x28] sm:$0xff]
    %v373 = vld [vmem:[%s3 + $0x30] sm:$0xff]
    %v374 = vld [vmem:[%s3 + $0x38] sm:$0xff]
    %v375 = vld [vmem:[%s3 + $0x40] sm:$0xff]
    %v376 = vld [vmem:[%s3 + $0x48] sm:$0xff]
    %v377 = vld [vmem:[%s3 + $0x50] sm:$0xff]
    %v378 = vld [vmem:[%s3 + $0x58] sm:$0xff]
    %v379 = vld [vmem:[%s3 + $0x60] sm:$0xff]
    %v380 = vld [vmem:[%s3 + $0x68] sm:$0xff]
    %v381 = vld [vmem:[%s3 + $0x70] sm:$0xff]
    %v382 = vld [vmem:[%s3 + $0x78] sm:$0xff]
    %v383 = vlaneseq
    %v384 = vshrl.u32 %v383, 7
    %v385 = vsub.s32 0, %v384
    %v386 = vrot.slane %v130, %v385
    %387 = vmatprep.subr.mxu0 0.0
    %388 = vmatpush1.msra.mxu0 %v367
    %389 = vmatprep.subr.mxu0 0.0
    %390 = vmatpush1.msra.mxu0 %v368
    %391 = vmatprep.subr.mxu0 0.0
    %392 = vmatpush1.msra.mxu0 %v369
    %393 = vmatprep.subr.mxu0 0.0
    %394 = vmatpush1.msra.mxu0 %v370
    %395 = vmatprep.subr.mxu0 0.0
    %396 = vmatpush1.msra.mxu0 %v371
    %397 = vmatprep.subr.mxu0 0.0
    %398 = vmatpush1.msra.mxu0 %v372
    %399 = vmatprep.subr.mxu0 0.0
    %400 = vmatpush1.msra.mxu0 %v373
    %401 = vmatprep.subr.mxu0 0.0
    %402 = vmatpush1.msra.mxu0 %v374
    %403 = vmatprep.subr.mxu0 0.0
    %404 = vmatpush1.msra.mxu0 %v375
    %405 = vmatprep.subr.mxu0 0.0
    %406 = vmatpush1.msra.mxu0 %v376
    %407 = vmatprep.subr.mxu0 0.0
    %408 = vmatpush1.msra.mxu0 %v377
    %409 = vmatprep.subr.mxu0 0.0
    %410 = vmatpush1.msra.mxu0 %v378
    %411 = vmatprep.subr.mxu0 0.0
    %412 = vmatpush1.msra.mxu0 %v379
    %413 = vmatprep.subr.mxu0 0.0
    %414 = vmatpush1.msra.mxu0 %v380
    %415 = vmatprep.subr.mxu0 0.0
    %416 = vmatpush1.msra.mxu0 %v381
    %417 = vmatprep.subr.mxu0 0.0
    %418 = vmatpush1.msra.mxu0 %v382
    %419 = vmatprep.subr.mxu0 0.0
    %420 = vmatpush1.msra.mxu0 0.0
    %421 = vmatprep.subr.mxu0 0.0
    %422 = vmatpush1.msra.mxu0 0.0
    %423 = vmatprep.subr.mxu0 0.0
    %424 = vmatpush1.msra.mxu0 0.0
    %425 = vmatprep.subr.mxu0 0.0
    %426 = vmatpush1.msra.mxu0 0.0
    %427 = vmatprep.subr.mxu0 0.0
    %428 = vmatpush1.msra.mxu0 0.0
    %429 = vmatprep.subr.mxu0 0.0
    %430 = vmatpush1.msra.mxu0 0.0
    %431 = vmatprep.subr.mxu0 0.0
    %432 = vmatpush1.msra.mxu0 0.0
    %433 = vmatprep.subr.mxu0 0.0
    %434 = vmatpush1.msra.mxu0 0.0
    %435 = vmatprep.subr.mxu0 0.0
    %436 = vmatpush1.msra.mxu0 0.0
    %437 = vmatprep.subr.mxu0 0.0
    %438 = vmatpush1.msra.mxu0 0.0
    %439 = vmatprep.subr.mxu0 0.0
    %440 = vmatpush1.msra.mxu0 0.0
    %441 = vmatprep.subr.mxu0 0.0
    %442 = vmatpush1.msra.mxu0 0.0
    %443 = vmatprep.subr.mxu0 0.0
    %444 = vmatpush1.msra.mxu0 0.0
    %445 = vmatprep.subr.mxu0 0.0
    %446 = vmatpush1.msra.mxu0 0.0
    %447 = vmatprep.subr.mxu0 0.0
    %448 = vmatpush1.msra.mxu0 0.0
    %449 = vmatprep.subr.mxu0 0.0
    %450 = vmatpush1.msra.mxu0 0.0
    %451 = vmatprep.mubr.f32.mxu0 0.0
    %452 = vmatmul.mubr.f32.gmra.mrb[0].mxu0 %v365
    %v453 = vpop.f32.mrb[0].mxu0
    %v454 = vadd.f32 %v386, %v453
    %v455 = vpop.f32.mrb[0].mxu0
    %456 = vmatprep.mubr.f32.mxu0 0.0
    %457 = vmatmul.mubr.f32.gmra.mrb[0].mxu0 %v366
    %v458 = vpop.f32.mrb[0].mxu0
    %v459 = vadd.f32 %v386, %v458
    %v460 = vpop.f32.mrb[0].mxu0
    %461 = vdwg.mxu0
    %vm462 = vcmp.ge.f32.partialorder %v454, 0.0
    %vm463 = vcmp.ge.f32.partialorder %v459, 0.0
    %v464 = vlaneseq
    %v465 = vshrl.u32 %v464, 7
    %v466 = vsub.s32 1, %v465
    %v467 = vrot.slane %v130, %v466
    %v468 = vmul.f32 %v467, %v454
    %v469 = vmul.f32 %v467, %v459
    %v470 = vsel %vm462, %v454, %v468
    %v471 = vsel %vm463, %v459, %v469
    %v472 = vld [vmem:[#allocation5] sm:$0xff]
    %v473 = vld [vmem:[#allocation5 + $0x8] sm:$0xff]
    %v474 = vld [vmem:[#allocation5 + $0x10] sm:$0xff]
    %v475 = vld [vmem:[#allocation5 + $0x18] sm:$0xff]
    %v476 = vld [vmem:[#allocation5 + $0x20] sm:$0xff]
    %v477 = vld [vmem:[#allocation5 + $0x28] sm:$0xff]
    %v478 = vld [vmem:[#allocation5 + $0x30] sm:$0xff]
    %v479 = vld [vmem:[#allocation5 + $0x38] sm:$0xff]
    %v480 = vlaneseq
    %v481 = vshrl.u32 %v480, 7
    %v482 = vsub.s32 2, %v481
    %v483 = vrot.slane %v130, %v482
    %vm484 = vcmask 523264
    %v486 = vsel %vm484, %v470, 0
    %v489 = vsel %vm484, %v471, 0
    %491 = vmatprep.subr.mxu0 0.0
    %492 = vmatpush1.msra.mxu0 %v472
    %493 = vmatprep.subr.mxu0 0.0
    %494 = vmatpush1.msra.mxu0 %v473
    %495 = vmatprep.subr.mxu0 0.0
    %496 = vmatpush1.msra.mxu0 %v474
    %497 = vmatprep.subr.mxu0 0.0
    %498 = vmatpush1.msra.mxu0 %v475
    %499 = vmatprep.subr.mxu0 0.0
    %500 = vmatpush1.msra.mxu0 %v476
    %501 = vmatprep.subr.mxu0 0.0
    %502 = vmatpush1.msra.mxu0 %v477
    %503 = vmatprep.subr.mxu0 0.0
    %504 = vmatpush1.msra.mxu0 %v478
    %505 = vmatprep.subr.mxu0 0.0
    %506 = vmatpush1.msra.mxu0 %v479
    %507 = vmatprep.subr.mxu0 0.0
    %508 = vmatpush1.msra.mxu0 0.0
    %509 = vmatprep.subr.mxu0 0.0
    %510 = vmatpush1.msra.mxu0 0.0
    %511 = vmatprep.subr.mxu0 0.0
    %512 = vmatpush1.msra.mxu0 0.0
    %513 = vmatprep.subr.mxu0 0.0
    %514 = vmatpush1.msra.mxu0 0.0
    %515 = vmatprep.subr.mxu0 0.0
    %516 = vmatpush1.msra.mxu0 0.0
    %517 = vmatprep.subr.mxu0 0.0
    %518 = vmatpush1.msra.mxu0 0.0
    %519 = vmatprep.subr.mxu0 0.0
    %520 = vmatpush1.msra.mxu0 0.0
    %521 = vmatprep.subr.mxu0 0.0
    %522 = vmatpush1.msra.mxu0 0.0
    %523 = vmatprep.subr.mxu0 0.0
    %524 = vmatpush1.msra.mxu0 0.0
    %525 = vmatprep.subr.mxu0 0.0
    %526 = vmatpush1.msra.mxu0 0.0
    %527 = vmatprep.subr.mxu0 0.0
    %528 = vmatpush1.msra.mxu0 0.0
    %529 = vmatprep.subr.mxu0 0.0
    %530 = vmatpush1.msra.mxu0 0.0
    %531 = vmatprep.subr.mxu0 0.0
    %532 = vmatpush1.msra.mxu0 0.0
    %533 = vmatprep.subr.mxu0 0.0
    %534 = vmatpush1.msra.mxu0 0.0
    %535 = vmatprep.subr.mxu0 0.0
    %536 = vmatpush1.msra.mxu0 0.0
    %537 = vmatprep.subr.mxu0 0.0
    %538 = vmatpush1.msra.mxu0 0.0
    %539 = vmatprep.subr.mxu0 0.0
    %540 = vmatpush1.msra.mxu0 0.0
    %541 = vmatprep.subr.mxu0 0.0
    %542 = vmatpush1.msra.mxu0 0.0
    %543 = vmatprep.subr.mxu0 0.0
    %544 = vmatpush1.msra.mxu0 0.0
    %545 = vmatprep.subr.mxu0 0.0
    %546 = vmatpush1.msra.mxu0 0.0
    %547 = vmatprep.subr.mxu0 0.0
    %548 = vmatpush1.msra.mxu0 0.0
    %549 = vmatprep.subr.mxu0 0.0
    %550 = vmatpush1.msra.mxu0 0.0
    %551 = vmatprep.subr.mxu0 0.0
    %552 = vmatpush1.msra.mxu0 0.0
    %553 = vmatprep.subr.mxu0 0.0
    %554 = vmatpush1.msra.mxu0 0.0
    %555 = vmatprep.mubr.f32.mxu0 0.0
    %556 = vmatmul.mubr.f32.gmra.mrb[0].mxu0 %v486
    %v557 = vpop.f32.mrb[0].mxu0
    %v558 = vadd.f32 %v483, %v557
    %v559 = vpop.f32.mrb[0].mxu0
    %560 = vmatprep.mubr.f32.mxu0 0.0
    %561 = vmatmul.mubr.f32.gmra.mrb[0].mxu0 %v489
    %v562 = vpop.f32.mrb[0].mxu0
    %v563 = vadd.f32 %v483, %v562
    %v564 = vpop.f32.mrb[0].mxu0
    %565 = vdwg.mxu0
    %v566 = vld [vmem:[%s7] sm:$0xff]
    %v567 = vld [vmem:[%s7 + $0x8] sm:$0xff]
    %v568 = vld [vmem:[%s7 + $0x10] sm:$0xff]
    %v569 = vld [vmem:[%s7 + $0x18] sm:$0xff]
    %v570 = vld [vmem:[%s7 + $0x20] sm:$0xff]
    %v571 = vld [vmem:[%s7 + $0x28] sm:$0xff]
    %v572 = vld [vmem:[%s7 + $0x30] sm:$0xff]
    %v573 = vld [vmem:[%s7 + $0x38] sm:$0xff]
    %v575 = vsel %vm484, %v558, 0
    %v578 = vsel %vm484, %v563, 0
    %580 = vmatprep.subr.mxu0 0.0
    %581 = vmatpush1.msra.mxu0 %v566
    %582 = vmatprep.subr.mxu0 0.0
    %583 = vmatpush1.msra.mxu0 %v567
    %584 = vmatprep.subr.mxu0 0.0
    %585 = vmatpush1.msra.mxu0 %v568
    %586 = vmatprep.subr.mxu0 0.0
    %587 = vmatpush1.msra.mxu0 %v569
    %588 = vmatprep.subr.mxu0 0.0
    %589 = vmatpush1.msra.mxu0 %v570
    %590 = vmatprep.subr.mxu0 0.0
    %591 = vmatpush1.msra.mxu0 %v571
    %592 = vmatprep.subr.mxu0 0.0
    %593 = vmatpush1.msra.mxu0 %v572
    %594 = vmatprep.subr.mxu0 0.0
    %595 = vmatpush1.msra.mxu0 %v573
    %596 = vmatprep.subr.mxu0 0.0
    %597 = vmatpush1.msra.mxu0 0.0
    %598 = vmatprep.subr.mxu0 0.0
    %599 = vmatpush1.msra.mxu0 0.0
    %600 = vmatprep.subr.mxu0 0.0
    %601 = vmatpush1.msra.mxu0 0.0
    %602 = vmatprep.subr.mxu0 0.0
    %603 = vmatpush1.msra.mxu0 0.0
    %604 = vmatprep.subr.mxu0 0.0
    %605 = vmatpush1.msra.mxu0 0.0
    %606 = vmatprep.subr.mxu0 0.0
    %607 = vmatpush1.msra.mxu0 0.0
    %608 = vmatprep.subr.mxu0 0.0
    %609 = vmatpush1.msra.mxu0 0.0
    %610 = vmatprep.subr.mxu0 0.0
    %611 = vmatpush1.msra.mxu0 0.0
    %612 = vmatprep.subr.mxu0 0.0
    %613 = vmatpush1.msra.mxu0 0.0
    %614 = vmatprep.subr.mxu0 0.0
    %615 = vmatpush1.msra.mxu0 0.0
    %616 = vmatprep.subr.mxu0 0.0
    %617 = vmatpush1.msra.mxu0 0.0
    %618 = vmatprep.subr.mxu0 0.0
    %619 = vmatpush1.msra.mxu0 0.0
    %620 = vmatprep.subr.mxu0 0.0
    %621 = vmatpush1.msra.mxu0 0.0
    %622 = vmatprep.subr.mxu0 0.0
    %623 = vmatpush1.msra.mxu0 0.0
    %624 = vmatprep.subr.mxu0 0.0
    %625 = vmatpush1.msra.mxu0 0.0
    %626 = vmatprep.subr.mxu0 0.0
    %627 = vmatpush1.msra.mxu0 0.0
    %628 = vmatprep.subr.mxu0 0.0
    %629 = vmatpush1.msra.mxu0 0.0
    %630 = vmatprep.subr.mxu0 0.0
    %631 = vmatpush1.msra.mxu0 0.0
    %632 = vmatprep.subr.mxu0 0.0
    %633 = vmatpush1.msra.mxu0 0.0
    %634 = vmatprep.subr.mxu0 0.0
    %635 = vmatpush1.msra.mxu0 0.0
    %636 = vmatprep.subr.mxu0 0.0
    %637 = vmatpush1.msra.mxu0 0.0
    %638 = vmatprep.subr.mxu0 0.0
    %639 = vmatpush1.msra.mxu0 0.0
    %640 = vmatprep.subr.mxu0 0.0
    %641 = vmatpush1.msra.mxu0 0.0
    %642 = vmatprep.subr.mxu0 0.0
    %643 = vmatpush1.msra.mxu0 0.0
    %644 = vmatprep.mubr.f32.mxu0 0.0
    %645 = vmatmul.mubr.f32.gmra.mrb[0].mxu0 %v575
    %v646 = vpop.f32.mrb[0].mxu0
    %v647 = vadd.f32 0.0, %v646
    %v648 = vpop.f32.mrb[0].mxu0
    %649 = vmatprep.mubr.f32.mxu0 0.0
    %650 = vmatmul.mubr.f32.gmra.mrb[0].mxu0 %v578
    %v651 = vpop.f32.mrb[0].mxu0
    %v652 = vadd.f32 0.0, %v651
    %v653 = vpop.f32.mrb[0].mxu0
    %654 = vdwg.mxu0
    %vm655 = vcmp.ge.f32.partialorder %v647, 0.0
    %vm656 = vcmp.ge.f32.partialorder %v652, 0.0
    %v657 = vmul.f32 %v647, 0.3
    %v658 = vmul.f32 %v652, 0.3
    %v659 = vsel %vm655, %v647, %v657
    %v660 = vsel %vm656, %v652, %v658
    %663 = vrot.lane.b32.xlu0 %v659, 127
    %v664 = vpop.permute.xlu0 %663
    %665 = vrot.lane.b32.xlu0 %v660, 127
    %v666 = vpop.permute.xlu0 %665
    %v669 = vsub.f32 %v659, %v664
    %v670 = vsub.f32 %v660, %v666
    %v671 = vsub.f32 0.0, %v669
    %v672 = vsub.f32 0.0, %v670
    %v673 = vmul.f32 %v671, 1.442695
    %v674 = vpow.pop %v673
    %v675 = vmul.f32 %v672, 1.442695
    %v676 = vpow.pop %v675
    %v677 = vadd.f32 %v674, 1.0
    %v678 = vadd.f32 %v676, 1.0
    %v679 = vrcp.pop %v677
    %v680 = vmul.f32 1.0, %v679
    %v681 = vrcp.pop %v678
    %v682 = vmul.f32 1.0, %v681
    %v683 = vld [vmem:[%s8] sm:$0x3]
    %685 = vset.pattern.permute.xlu0 0
    %686 = vperm.xlu0 %685, %v680
    %v687 = vpop.permute.xlu0 %686
    %690 = vset.pattern.permute.xlu0 0
    %691 = vperm.xlu0 %690, %v682
    %v692 = vpop.permute.xlu0 %691
    %v694 = vlaneseq
    %v695 = vshrl.u32 %v694, 7
    %v696 = vsub.s32 0, %v695
    %v697 = vrot.slane %v683, %v696
    %v698 = vmul.f32 %v687, %v697
    %v699 = vmul.f32 %v692, %v697
    %v700 = vsub.f32 1.0, %v680
    %v701 = vsub.f32 1.0, %v682
    %703 = vset.pattern.permute.xlu0 0
    %704 = vperm.xlu0 %703, %v700
    %v705 = vpop.permute.xlu0 %704
    %708 = vset.pattern.permute.xlu0 0
    %709 = vperm.xlu0 %708, %v701
    %v710 = vpop.permute.xlu0 %709
    %v712 = vlaneseq
    %v713 = vshrl.u32 %v712, 7
    %v714 = vsub.s32 1, %v713
    %v715 = vrot.slane %v683, %v714
    %v716 = vmul.f32 %v705, %v715
    %v717 = vmul.f32 %v710, %v715
    %v718 = vadd.f32 %v698, %v716
    %v719 = vadd.f32 %v699, %v717
    %v720 = vmul.f32 %v558, %v718
    %v721 = vmul.f32 %v563, %v719
    %v722 = vld [vmem:[%s9] sm:$0xff]
    %v723 = vld [vmem:[%s9 + $0x8] sm:$0xff]
    %v724 = vld [vmem:[%s9 + $0x10] sm:$0xff]
    %v725 = vld [vmem:[%s9 + $0x18] sm:$0xff]
    %v726 = vld [vmem:[%s9 + $0x20] sm:$0xff]
    %v727 = vld [vmem:[%s9 + $0x28] sm:$0xff]
    %v728 = vld [vmem:[%s9 + $0x30] sm:$0xff]
    %v729 = vld [vmem:[%s9 + $0x38] sm:$0xff]
    %v731 = vsel %vm484, %v720, 0
    %v734 = vsel %vm484, %v721, 0
    %736 = vmatprep.subr.mxu0 0.0
    %737 = vmatpush1.msra.mxu0 %v722
    %738 = vmatprep.subr.mxu0 0.0
    %739 = vmatpush1.msra.mxu0 %v723
    %740 = vmatprep.subr.mxu0 0.0
    %741 = vmatpush1.msra.mxu0 %v724
    %742 = vmatprep.subr.mxu0 0.0
    %743 = vmatpush1.msra.mxu0 %v725
    %744 = vmatprep.subr.mxu0 0.0
    %745 = vmatpush1.msra.mxu0 %v726
    %746 = vmatprep.subr.mxu0 0.0
    %747 = vmatpush1.msra.mxu0 %v727
    %748 = vmatprep.subr.mxu0 0.0
    %749 = vmatpush1.msra.mxu0 %v728
    %750 = vmatprep.subr.mxu0 0.0
    %751 = vmatpush1.msra.mxu0 %v729
    %752 = vmatprep.subr.mxu0 0.0
    %753 = vmatpush1.msra.mxu0 0.0
    %754 = vmatprep.subr.mxu0 0.0
    %755 = vmatpush1.msra.mxu0 0.0
    %756 = vmatprep.subr.mxu0 0.0
    %757 = vmatpush1.msra.mxu0 0.0
    %758 = vmatprep.subr.mxu0 0.0
    %759 = vmatpush1.msra.mxu0 0.0
    %760 = vmatprep.subr.mxu0 0.0
    %761 = vmatpush1.msra.mxu0 0.0
    %762 = vmatprep.subr.mxu0 0.0
    %763 = vmatpush1.msra.mxu0 0.0
    %764 = vmatprep.subr.mxu0 0.0
    %765 = vmatpush1.msra.mxu0 0.0
    %766 = vmatprep.subr.mxu0 0.0
    %767 = vmatpush1.msra.mxu0 0.0
    %768 = vmatprep.subr.mxu0 0.0
    %769 = vmatpush1.msra.mxu0 0.0
    %770 = vmatprep.subr.mxu0 0.0
    %771 = vmatpush1.msra.mxu0 0.0
    %772 = vmatprep.subr.mxu0 0.0
    %773 = vmatpush1.msra.mxu0 0.0
    %774 = vmatprep.subr.mxu0 0.0
    %775 = vmatpush1.msra.mxu0 0.0
    %776 = vmatprep.subr.mxu0 0.0
    %777 = vmatpush1.msra.mxu0 0.0
    %778 = vmatprep.subr.mxu0 0.0
    %779 = vmatpush1.msra.mxu0 0.0
    %780 = vmatprep.subr.mxu0 0.0
    %781 = vmatpush1.msra.mxu0 0.0
    %782 = vmatprep.subr.mxu0 0.0
    %783 = vmatpush1.msra.mxu0 0.0
    %784 = vmatprep.subr.mxu0 0.0
    %785 = vmatpush1.msra.mxu0 0.0
    %786 = vmatprep.subr.mxu0 0.0
    %787 = vmatpush1.msra.mxu0 0.0
    %788 = vmatprep.subr.mxu0 0.0
    %789 = vmatpush1.msra.mxu0 0.0
    %790 = vmatprep.subr.mxu0 0.0
    %791 = vmatpush1.msra.mxu0 0.0
    %792 = vmatprep.subr.mxu0 0.0
    %793 = vmatpush1.msra.mxu0 0.0
    %794 = vmatprep.subr.mxu0 0.0
    %795 = vmatpush1.msra.mxu0 0.0
    %796 = vmatprep.subr.mxu0 0.0
    %797 = vmatpush1.msra.mxu0 0.0
    %798 = vmatprep.subr.mxu0 0.0
    %799 = vmatpush1.msra.mxu0 0.0
    %800 = vmatprep.mubr.f32.mxu0 0.0
    %801 = vmatmul.mubr.f32.gmra.mrb[0].mxu0 %v731
    %v802 = vpop.f32.mrb[0].mxu0
    %v803 = vadd.f32 0.0, %v802
    %v804 = vpop.f32.mrb[0].mxu0
    %805 = vmatprep.mubr.f32.mxu0 0.0
    %806 = vmatmul.mubr.f32.gmra.mrb[0].mxu0 %v734
    %v807 = vpop.f32.mrb[0].mxu0
    %v808 = vadd.f32 0.0, %v807
    %v809 = vpop.f32.mrb[0].mxu0
    %810 = vdwg.mxu0
    %v811 = vld [vmem:[%s10] sm:$0x3]
    %vm812 = vcmask 130048
    %v814 = vsel %vm812, %v811, 0
    %816 = vmatprep.subr.mxu0 0.0
    %817 = vmatpush1.msra.mxu0 %v803
    %818 = vmatprep.subr.mxu0 0.0
    %819 = vmatpush1.msra.mxu0 %v808
    %820 = vmatprep.subr.mxu0 0.0
    %821 = vmatpush1.msra.mxu0 0.0
    %822 = vmatprep.subr.mxu0 0.0
    %823 = vmatpush1.msra.mxu0 0.0
    %824 = vmatprep.subr.mxu0 0.0
    %825 = vmatpush1.msra.mxu0 0.0
    %826 = vmatprep.subr.mxu0 0.0
    %827 = vmatpush1.msra.mxu0 0.0
    %828 = vmatprep.subr.mxu0 0.0
    %829 = vmatpush1.msra.mxu0 0.0
    %830 = vmatprep.subr.mxu0 0.0
    %831 = vmatpush1.msra.mxu0 0.0
    %832 = vmatprep.subr.mxu0 0.0
    %833 = vmatpush1.msra.mxu0 0.0
    %834 = vmatprep.subr.mxu0 0.0
    %835 = vmatpush1.msra.mxu0 0.0
    %836 = vmatprep.subr.mxu0 0.0
    %837 = vmatpush1.msra.mxu0 0.0
    %838 = vmatprep.subr.mxu0 0.0
    %839 = vmatpush1.msra.mxu0 0.0
    %840 = vmatprep.subr.mxu0 0.0
    %841 = vmatpush1.msra.mxu0 0.0
    %842 = vmatprep.subr.mxu0 0.0
    %843 = vmatpush1.msra.mxu0 0.0
    %844 = vmatprep.subr.mxu0 0.0
    %845 = vmatpush1.msra.mxu0 0.0
    %846 = vmatprep.subr.mxu0 0.0
    %847 = vmatpush1.msra.mxu0 0.0
    %848 = vmatprep.subr.mxu0 0.0
    %849 = vmatpush1.msra.mxu0 0.0
    %850 = vmatprep.subr.mxu0 0.0
    %851 = vmatpush1.msra.mxu0 0.0
    %852 = vmatprep.subr.mxu0 0.0
    %853 = vmatpush1.msra.mxu0 0.0
    %854 = vmatprep.subr.mxu0 0.0
    %855 = vmatpush1.msra.mxu0 0.0
    %856 = vmatprep.subr.mxu0 0.0
    %857 = vmatpush1.msra.mxu0 0.0
    %858 = vmatprep.subr.mxu0 0.0
    %859 = vmatpush1.msra.mxu0 0.0
    %860 = vmatprep.subr.mxu0 0.0
    %861 = vmatpush1.msra.mxu0 0.0
    %862 = vmatprep.subr.mxu0 0.0
    %863 = vmatpush1.msra.mxu0 0.0
    %864 = vmatprep.subr.mxu0 0.0
    %865 = vmatpush1.msra.mxu0 0.0
    %866 = vmatprep.subr.mxu0 0.0
    %867 = vmatpush1.msra.mxu0 0.0
    %868 = vmatprep.subr.mxu0 0.0
    %869 = vmatpush1.msra.mxu0 0.0
    %870 = vmatprep.subr.mxu0 0.0
    %871 = vmatpush1.msra.mxu0 0.0
    %872 = vmatprep.subr.mxu0 0.0
    %873 = vmatpush1.msra.mxu0 0.0
    %874 = vmatprep.subr.mxu0 0.0
    %875 = vmatpush1.msra.mxu0 0.0
    %876 = vmatprep.subr.mxu0 0.0
    %877 = vmatpush1.msra.mxu0 0.0
    %878 = vmatprep.subr.mxu0 0.0
    %879 = vmatpush1.msra.mxu0 0.0
    %880 = vmatprep.mubr.f32.mxu0 0.0
    %881 = vmatmul.mubr.f32.gmra.mrb[0].mxu0 %v814
    %v882 = vpop.f32.mrb[0].mxu0
    %v883 = vadd.f32 0.0, %v882
    %v884 = vpop.f32.mrb[0].mxu0
    %885 = vdwg.mxu0
    %v886 = vld [vmem:[#allocation10] sm:$0xff]
    %v887 = vld [vmem:[#allocation10 + $0x8] sm:$0xff]
    %v888 = vld [vmem:[#allocation10 + $0x10] sm:$0xff]
    %v889 = vld [vmem:[#allocation10 + $0x18] sm:$0xff]
    %v890 = vld [vmem:[#allocation10 + $0x20] sm:$0xff]
    %v891 = vld [vmem:[#allocation10 + $0x28] sm:$0xff]
    %v892 = vld [vmem:[#allocation10 + $0x30] sm:$0xff]
    %v893 = vld [vmem:[#allocation10 + $0x38] sm:$0xff]
    %v894 = vld [vmem:[%s12] sm:$0x3]
    %v895 = vlaneseq
    %v896 = vshrl.u32 %v895, 7
    %v897 = vsub.s32 0, %v896
    %v898 = vrot.slane %v894, %v897
    %vm899 = vcmask 261120
    %v901 = vsel %vm899, %v883, 0
    %903 = vmatprep.subr.mxu0 0.0
    %904 = vmatpush1.msra.mxu0 %v886
    %905 = vmatprep.subr.mxu0 0.0
    %906 = vmatpush1.msra.mxu0 %v887
    %907 = vmatprep.subr.mxu0 0.0
    %908 = vmatpush1.msra.mxu0 %v888
    %909 = vmatprep.subr.mxu0 0.0
    %910 = vmatpush1.msra.mxu0 %v889
    %911 = vmatprep.subr.mxu0 0.0
    %912 = vmatpush1.msra.mxu0 0.0
    %913 = vmatprep.subr.mxu0 0.0
    %914 = vmatpush1.msra.mxu0 0.0
    %915 = vmatprep.subr.mxu0 0.0
    %916 = vmatpush1.msra.mxu0 0.0
    %917 = vmatprep.subr.mxu0 0.0
    %918 = vmatpush1.msra.mxu0 0.0
    %919 = vmatprep.subr.mxu0 0.0
    %920 = vmatpush1.msra.mxu0 0.0
    %921 = vmatprep.subr.mxu0 0.0
    %922 = vmatpush1.msra.mxu0 0.0
    %923 = vmatprep.subr.mxu0 0.0
    %924 = vmatpush1.msra.mxu0 0.0
    %925 = vmatprep.subr.mxu0 0.0
    %926 = vmatpush1.msra.mxu0 0.0
    %927 = vmatprep.subr.mxu0 0.0
    %928 = vmatpush1.msra.mxu0 0.0
    %929 = vmatprep.subr.mxu0 0.0
    %930 = vmatpush1.msra.mxu0 0.0
    %931 = vmatprep.subr.mxu0 0.0
    %932 = vmatpush1.msra.mxu0 0.0
    %933 = vmatprep.subr.mxu0 0.0
    %934 = vmatpush1.msra.mxu0 0.0
    %935 = vmatprep.subr.mxu0 0.0
    %936 = vmatpush1.msra.mxu0 0.0
    %937 = vmatprep.subr.mxu0 0.0
    %938 = vmatpush1.msra.mxu0 0.0
    %939 = vmatprep.subr.mxu0 0.0
    %940 = vmatpush1.msra.mxu0 0.0
    %941 = vmatprep.subr.mxu0 0.0
    %942 = vmatpush1.msra.mxu0 0.0
    %943 = vmatprep.subr.mxu0 0.0
    %944 = vmatpush1.msra.mxu0 0.0
    %945 = vmatprep.subr.mxu0 0.0
    %946 = vmatpush1.msra.mxu0 0.0
    %947 = vmatprep.subr.mxu0 0.0
    %948 = vmatpush1.msra.mxu0 0.0
    %949 = vmatprep.subr.mxu0 0.0
    %950 = vmatpush1.msra.mxu0 0.0
    %951 = vmatprep.subr.mxu0 0.0
    %952 = vmatpush1.msra.mxu0 0.0
    %953 = vmatprep.subr.mxu0 0.0
    %954 = vmatpush1.msra.mxu0 0.0
    %955 = vmatprep.subr.mxu0 0.0
    %956 = vmatpush1.msra.mxu0 0.0
    %957 = vmatprep.subr.mxu0 0.0
    %958 = vmatpush1.msra.mxu0 0.0
    %959 = vmatprep.subr.mxu0 0.0
    %960 = vmatpush1.msra.mxu0 0.0
    %961 = vmatprep.subr.mxu0 0.0
    %962 = vmatpush1.msra.mxu0 0.0
    %963 = vmatprep.subr.mxu0 0.0
    %964 = vmatpush1.msra.mxu0 0.0
    %965 = vmatprep.subr.mxu0 0.0
    %966 = vmatpush1.msra.mxu0 0.0
    %967 = vmatprep.mubr.f32.mxu0 0.0
    %968 = vmatmul.mubr.f32.gmra.mrb[0].mxu0 %v901
    %v969 = vpop.f32.mrb[0].mxu0
    %v970 = vadd.f32 %v898, %v969
    %v971 = vpop.f32.mrb[0].mxu0
    %972 = vdwg.mxu0
    %vm973 = vcmp.ge.f32.partialorder %v970, 0.0
    %v974 = vmul.f32 %v970, 0.01
    %v975 = vsel %vm973, %v970, %v974
    %v976 = vlaneseq
    %v977 = vshrl.u32 %v976, 7
    %v978 = vsub.s32 1, %v977
    %v979 = vrot.slane %v894, %v978
    %v981 = vsel %vm899, %v975, 0
    %983 = vmatprep.subr.mxu0 0.0
    %984 = vmatpush1.msra.mxu0 %v890
    %985 = vmatprep.subr.mxu0 0.0
    %986 = vmatpush1.msra.mxu0 %v891
    %987 = vmatprep.subr.mxu0 0.0
    %988 = vmatpush1.msra.mxu0 %v892
    %989 = vmatprep.subr.mxu0 0.0
    %990 = vmatpush1.msra.mxu0 %v893
    %991 = vmatprep.subr.mxu0 0.0
    %992 = vmatpush1.msra.mxu0 0.0
    %993 = vmatprep.subr.mxu0 0.0
    %994 = vmatpush1.msra.mxu0 0.0
    %995 = vmatprep.subr.mxu0 0.0
    %996 = vmatpush1.msra.mxu0 0.0
    %997 = vmatprep.subr.mxu0 0.0
    %998 = vmatpush1.msra.mxu0 0.0
    %999 = vmatprep.subr.mxu0 0.0
    %1000 = vmatpush1.msra.mxu0 0.0
    %1001 = vmatprep.subr.mxu0 0.0
    %1002 = vmatpush1.msra.mxu0 0.0
    %1003 = vmatprep.subr.mxu0 0.0
    %1004 = vmatpush1.msra.mxu0 0.0
    %1005 = vmatprep.subr.mxu0 0.0
    %1006 = vmatpush1.msra.mxu0 0.0
    %1007 = vmatprep.subr.mxu0 0.0
    %1008 = vmatpush1.msra.mxu0 0.0
    %1009 = vmatprep.subr.mxu0 0.0
    %1010 = vmatpush1.msra.mxu0 0.0
    %1011 = vmatprep.subr.mxu0 0.0
    %1012 = vmatpush1.msra.mxu0 0.0
    %1013 = vmatprep.subr.mxu0 0.0
    %1014 = vmatpush1.msra.mxu0 0.0
    %1015 = vmatprep.subr.mxu0 0.0
    %1016 = vmatpush1.msra.mxu0 0.0
    %1017 = vmatprep.subr.mxu0 0.0
    %1018 = vmatpush1.msra.mxu0 0.0
    %1019 = vmatprep.subr.mxu0 0.0
    %1020 = vmatpush1.msra.mxu0 0.0
    %1021 = vmatprep.subr.mxu0 0.0
    %1022 = vmatpush1.msra.mxu0 0.0
    %1023 = vmatprep.subr.mxu0 0.0
    %1024 = vmatpush1.msra.mxu0 0.0
    %1025 = vmatprep.subr.mxu0 0.0
    %1026 = vmatpush1.msra.mxu0 0.0
    %1027 = vmatprep.subr.mxu0 0.0
    %1028 = vmatpush1.msra.mxu0 0.0
    %1029 = vmatprep.subr.mxu0 0.0
    %1030 = vmatpush1.msra.mxu0 0.0
    %1031 = vmatprep.subr.mxu0 0.0
    %1032 = vmatpush1.msra.mxu0 0.0
    %1033 = vmatprep.subr.mxu0 0.0
    %1034 = vmatpush1.msra.mxu0 0.0
    %1035 = vmatprep.subr.mxu0 0.0
    %1036 = vmatpush1.msra.mxu0 0.0
    %1037 = vmatprep.subr.mxu0 0.0
    %1038 = vmatpush1.msra.mxu0 0.0
    %1039 = vmatprep.subr.mxu0 0.0
    %1040 = vmatpush1.msra.mxu0 0.0
    %1041 = vmatprep.subr.mxu0 0.0
    %1042 = vmatpush1.msra.mxu0 0.0
    %1043 = vmatprep.subr.mxu0 0.0
    %1044 = vmatpush1.msra.mxu0 0.0
    %1045 = vmatprep.subr.mxu0 0.0
    %1046 = vmatpush1.msra.mxu0 0.0
    %1047 = vmatprep.mubr.f32.mxu0 0.0
    %1048 = vmatmul.mubr.f32.gmra.mrb[0].mxu0 %v981
    %v1049 = vpop.f32.mrb[0].mxu0
    %v1050 = vadd.f32 %v979, %v1049
    %v1051 = vpop.f32.mrb[0].mxu0
    %1052 = vdwg.mxu0
    %vm1053 = vcmp.ge.f32.partialorder %v1050, 0.0
    %v1054 = vmul.f32 %v1050, 0.01
    %v1055 = vsel %vm1053, %v1050, %v1054
    %v1056 = vld [vmem:[#allocation11] sm:$0xff]
    %v1057 = vld [vmem:[#allocation11 + $0x8] sm:$0xff]
    %v1058 = vld [vmem:[#allocation11 + $0x10] sm:$0xff]
    %v1059 = vld [vmem:[#allocation11 + $0x18] sm:$0xff]
    %v1060 = vld [vmem:[%s14] sm:$0x1]
    %v1062 = vlaneseq
    %v1063 = vshrl.u32 %v1062, 7
    %v1064 = vsub.s32 0, %v1063
    %v1065 = vrot.slane %v1060, %v1064
    %v1068 = vsel %vm899, %v1055, 0
    %1070 = vmatprep.subr.mxu0 0.0
    %1071 = vmatpush1.msra.mxu0 %v1056
    %1072 = vmatprep.subr.mxu0 0.0
    %1073 = vmatpush1.msra.mxu0 %v1057
    %1074 = vmatprep.subr.mxu0 0.0
    %1075 = vmatpush1.msra.mxu0 %v1058
    %1076 = vmatprep.subr.mxu0 0.0
    %1077 = vmatpush1.msra.mxu0 %v1059
    %1078 = vmatprep.subr.mxu0 0.0
    %1079 = vmatpush1.msra.mxu0 0.0
    %1080 = vmatprep.subr.mxu0 0.0
    %1081 = vmatpush1.msra.mxu0 0.0
    %1082 = vmatprep.subr.mxu0 0.0
    %1083 = vmatpush1.msra.mxu0 0.0
    %1084 = vmatprep.subr.mxu0 0.0
    %1085 = vmatpush1.msra.mxu0 0.0
    %1086 = vmatprep.subr.mxu0 0.0
    %1087 = vmatpush1.msra.mxu0 0.0
    %1088 = vmatprep.subr.mxu0 0.0
    %1089 = vmatpush1.msra.mxu0 0.0
    %1090 = vmatprep.subr.mxu0 0.0
    %1091 = vmatpush1.msra.mxu0 0.0
    %1092 = vmatprep.subr.mxu0 0.0
    %1093 = vmatpush1.msra.mxu0 0.0
    %1094 = vmatprep.subr.mxu0 0.0
    %1095 = vmatpush1.msra.mxu0 0.0
    %1096 = vmatprep.subr.mxu0 0.0
    %1097 = vmatpush1.msra.mxu0 0.0
    %1098 = vmatprep.subr.mxu0 0.0
    %1099 = vmatpush1.msra.mxu0 0.0
    %1100 = vmatprep.subr.mxu0 0.0
    %1101 = vmatpush1.msra.mxu0 0.0
    %1102 = vmatprep.subr.mxu0 0.0
    %1103 = vmatpush1.msra.mxu0 0.0
    %1104 = vmatprep.subr.mxu0 0.0
    %1105 = vmatpush1.msra.mxu0 0.0
    %1106 = vmatprep.subr.mxu0 0.0
    %1107 = vmatpush1.msra.mxu0 0.0
    %1108 = vmatprep.subr.mxu0 0.0
    %1109 = vmatpush1.msra.mxu0 0.0
    %1110 = vmatprep.subr.mxu0 0.0
    %1111 = vmatpush1.msra.mxu0 0.0
    %1112 = vmatprep.subr.mxu0 0.0
    %1113 = vmatpush1.msra.mxu0 0.0
    %1114 = vmatprep.subr.mxu0 0.0
    %1115 = vmatpush1.msra.mxu0 0.0
    %1116 = vmatprep.subr.mxu0 0.0
    %1117 = vmatpush1.msra.mxu0 0.0
    %1118 = vmatprep.subr.mxu0 0.0
    %1119 = vmatpush1.msra.mxu0 0.0
    %1120 = vmatprep.subr.mxu0 0.0
    %1121 = vmatpush1.msra.mxu0 0.0
    %1122 = vmatprep.subr.mxu0 0.0
    %1123 = vmatpush1.msra.mxu0 0.0
    %1124 = vmatprep.subr.mxu0 0.0
    %1125 = vmatpush1.msra.mxu0 0.0
    %1126 = vmatprep.subr.mxu0 0.0
    %1127 = vmatpush1.msra.mxu0 0.0
    %1128 = vmatprep.subr.mxu0 0.0
    %1129 = vmatpush1.msra.mxu0 0.0
    %1130 = vmatprep.subr.mxu0 0.0
    %1131 = vmatpush1.msra.mxu0 0.0
    %1132 = vmatprep.subr.mxu0 0.0
    %1133 = vmatpush1.msra.mxu0 0.0
    %1134 = vmatprep.mubr.f32.mxu0 0.0
    %1135 = vmatmul.mubr.f32.gmra.mrb[0].mxu0 %v1068
    %v1136 = vpop.f32.mrb[0].mxu0
    %v1137 = vadd.f32 %v1065, %v1136
    %v1138 = vpop.f32.mrb[0].mxu0
    %1139 = vdwg.mxu0
    %1140 = vst [vmem:[#allocation13] sm:$0x3] %v1137
    // Predicated region
    $region86: #{tpu_custom_call.1} parent=1 // pred_check
      _
    $region87: #{tpu_custom_call.1} parent=1 // pred_check_branch
      %1142 = sbr.rel (0) target = $region89
    $region88: #{tpu_custom_call.1} parent=1 // pred_region
      %s1144 = ssub.s32 32, 32
      %1145 = vsyncadd [#allocation4], %s1144
      %s1147 = sshll.u32 [#allocation13], 4
      %s1148 = int_to_ptr.vmem [resolvable:$true] %s1147
      %1150 = dma.vmem_to_hbm [thread:$0]  %s1148, 32, %s15, [#allocation4]
    $region89: #{tpu_custom_call.1} parent=1 // pred_fallthru
      _
    // Predicated region
    $region90: #{tpu_custom_call.1} parent=1 // pred_check
      _
    $region91: #{tpu_custom_call.1} parent=1 // pred_check_branch
      %1152 = sbr.rel (0) target = $region93
    $region92: #{tpu_custom_call.1} parent=1 // pred_region
      %1153 = dma.done [#allocation4], 32
    $region93: #{tpu_custom_call.1} parent=1 // pred_fallthru
      _
    %1154 = vsyncpa [#allocation3], 1
    %1155 = vsyncpa [#allocation6], 1
    %1156 = vsyncpa [#allocation9], 1
    %1157 = vsyncpa [#allocation12], 1
    %1158 = vsyncpa [#allocation4], 1

// kernel: tpu_custom_call.1
$region0: #{tpu_custom_call.1}
  #allocation0 [shape = 'u32[]', space=smem, size = 0x4, offset = 0x4, fixed_abs, tag = 'smem constant byte address 0x4 - core index']
  #allocation1 [shape = 'u32[144,128]{1,0:T(1,128)}', space=vmem, size = 0x12000, scoped, tag = 'internal scratch']
  %s0 = inlined_call_operand.hbm [shape: f32[16,152], index: 0, kind: input, shape index: {}]
  %s1 = inlined_call_operand.vmem [shape: f32[152,128], index: 1, kind: input, shape index: {}]
  %s2 = inlined_call_operand.vmem [shape: f32[128,128], index: 2, kind: input, shape index: {}]
  %s3 = inlined_call_operand.vmem [shape: f32[128,64], index: 3, kind: input, shape index: {}]
  %s4 = inlined_call_operand.hbm [shape: f32[64,64], index: 4, kind: input, shape index: {}]
  %s5 = inlined_call_operand.hbm [shape: f32[6,128], index: 5, kind: input, shape index: {}]
  %s6 = inlined_call_operand.hbm [shape: f32[3,64], index: 6, kind: input, shape index: {}]
  %s7 = inlined_call_operand.vmem [shape: f32[64,2], index: 7, kind: input, shape index: {}]
  %s8 = inlined_call_operand.vmem [shape: f32[2,64], index: 8, kind: input, shape index: {}]
  %s9 = inlined_call_operand.vmem [shape: f32[64,32], index: 9, kind: input, shape index: {}]
  %s10 = inlined_call_operand.vmem [shape: f32[2,16], index: 10, kind: input, shape index: {}]
  %s11 = inlined_call_operand.hbm [shape: f32[2,32,32], index: 11, kind: input, shape index: {}]
  %s12 = inlined_call_operand.vmem [shape: f32[2,32], index: 12, kind: input, shape index: {}]
  %s13 = inlined_call_operand.hbm [shape: f32[32,128], index: 13, kind: input, shape index: {}]
  %s14 = inlined_call_operand.vmem [shape: f32[1,128], index: 14, kind: input, shape index: {}]
  %s15 = inlined_call_operand.hbm [shape: f32[2,128], index: 15, kind: output, shape index: {}]
  %s16 = sld [smem:[#allocation0]]
  $region94: #{tpu_custom_call.1} parent=0
    _
  %s18 = ssub.s32 1, %s16
  %s19 = scalar_select 0, %s18, %s16
  $region1: #{tpu_custom_call.1} parent=0
    #allocation2 [shape = 'u8[16384]{0}', space=vmem, size = 0x4000, scoped, tag = 'input window, operand 0, single buffered']
    #allocation3 [shape = 's32[1]{0}', space=sflag, size = 0x4, scoped, tag = 'scoped memory for tpu_custom_call.1']
    #allocation4 [shape = 's32[1]{0}', space=sflag, size = 0x4, scoped, tag = 'scoped memory for tpu_custom_call.1']
    #allocation5 [shape = 'u8[32768]{0}', space=vmem, size = 0x8000, scoped, tag = 'input window, operand 4, single buffered']
    #allocation6 [shape = 's32[1]{0}', space=sflag, size = 0x4, scoped, tag = 'scoped memory for tpu_custom_call.1']
    #allocation7 [shape = 'u8[4096]{0}', space=vmem, size = 0x1000, scoped, tag = 'input window, operand 5, single buffered']
    #allocation8 [shape = 'u8[2048]{0}', space=vmem, size = 0x800, scoped, tag = 'input window, operand 6, single buffered']
    #allocation9 [shape = 's32[1]{0}', space=sflag, size = 0x4, scoped, tag = 'scoped memory for tpu_custom_call.1']
    #allocation10 [shape = 'u8[32768]{0}', space=vmem, size = 0x8000, scoped, tag = 'input window, operand 11, single buffered']
    #allocation11 [shape = 'u8[16384]{0}', space=vmem, size = 0x4000, scoped, tag = 'input window, operand 13, single buffered']
    #allocation12 [shape = 's32[1]{0}', space=sflag, size = 0x4, scoped, tag = 'scoped memory for tpu_custom_call.1']
    #allocation13 [shape = 'u8[1024]{0}', space=vmem, size = 0x400, scoped, tag = 'output window, operand 0, single buffered']
    %20 = vsyncpa [#allocation3], 0
    %21 = vsyncpa [#allocation6], 0
    %22 = vsyncpa [#allocation9], 0
    %23 = vsyncpa [#allocation12], 0
    %24 = vsyncpa [#allocation4], 0
    // Predicated region
    $region2: #{tpu_custom_call.1} parent=1 // pred_check
      _
    $region3: #{tpu_custom_call.1} parent=1 // pred_check_branch
      %26 = sbr.rel (0) target = $region5
    $region4: #{tpu_custom_call.1} parent=1 // pred_region
      %s28 = ssub.s32 512, 512
      %29 = vsyncadd [#allocation3], %s28
      %s30 = sshll.u32 [#allocation2], 4
      %s31 = int_to_ptr.vmem [resolvable:$true] %s30
      %36 = dma.hbm_to_vmem [thread:$0]  %s0, 512, %s31, [#allocation3], 256, 256, 16
    $region5: #{tpu_custom_call.1} parent=1 // pred_fallthru
      _
    // Predicated region
    $region6: #{tpu_custom_call.1} parent=1 // pred_check
      _
    $region7: #{tpu_custom_call.1} parent=1 // pred_check_branch
      %38 = sbr.rel (0) target = $region9
    $region8: #{tpu_custom_call.1} parent=1 // pred_region
      _
    $region9: #{tpu_custom_call.1} parent=1 // pred_fallthru
      _
    // Predicated region
    $region10: #{tpu_custom_call.1} parent=1 // pred_check
      _
    $region11: #{tpu_custom_call.1} parent=1 // pred_check_branch
      %40 = sbr.rel (0) target = $region13
    $region12: #{tpu_custom_call.1} parent=1 // pred_region
      _
    $region13: #{tpu_custom_call.1} parent=1 // pred_fallthru
      _
    // Predicated region
    $region14: #{tpu_custom_call.1} parent=1 // pred_check
      _
    $region15: #{tpu_custom_call.1} parent=1 // pred_check_branch
      %42 = sbr.rel (0) target = $region17
    $region16: #{tpu_custom_call.1} parent=1 // pred_region
      _
    $region17: #{tpu_custom_call.1} parent=1 // pred_fallthru
      _
    // Predicated region
    $region18: #{tpu_custom_call.1} parent=1 // pred_check
      _
    $region19: #{tpu_custom_call.1} parent=1 // pred_check_branch
      %44 = sbr.rel (0) target = $region21
    $region20: #{tpu_custom_call.1} parent=1 // pred_region
      %s46 = ssub.s32 1024, 1024
      %47 = vsyncadd [#allocation6], %s46
      %s48 = sshll.u32 [#allocation5], 4
      %s49 = int_to_ptr.vmem [resolvable:$true] %s48
      %54 = dma.hbm_to_vmem [thread:$0]  %s4, 1024, %s49, [#allocation6], 128, 128, 8
    $region21: #{tpu_custom_call.1} parent=1 // pred_fallthru
      _
    // Predicated region
    $region22: #{tpu_custom_call.1} parent=1 // pred_check
      _
    $region23: #{tpu_custom_call.1} parent=1 // pred_check_branch
      %56 = sbr.rel (0) target = $region25
    $region24: #{tpu_custom_call.1} parent=1 // pred_region
      %s58 = ssub.s32 128, 128
      %59 = vsyncadd [#allocation6], %s58
      %s61 = sshll.u32 [#allocation7], 4
      %s62 = int_to_ptr.vmem [resolvable:$true] %s61
      %64 = dma.hbm_to_vmem [thread:$0]  %s5, 128, %s62, [#allocation6]
    $region25: #{tpu_custom_call.1} parent=1 // pred_fallthru
      _
    // Predicated region
    $region26: #{tpu_custom_call.1} parent=1 // pred_check
      _
    $region27: #{tpu_custom_call.1} parent=1 // pred_check_branch
      %66 = sbr.rel (0) target = $region29
    $region28: #{tpu_custom_call.1} parent=1 // pred_region
      %s68 = ssub.s32 64, 64
      %69 = vsyncadd [#allocation9], %s68
      %s71 = sshll.u32 [#allocation8], 4
      %s72 = int_to_ptr.vmem [resolvable:$true] %s71
      %74 = dma.hbm_to_vmem [thread:$0]  %s6, 64, %s72, [#allocation9]
    $region29: #{tpu_custom_call.1} parent=1 // pred_fallthru
      _
    // Predicated region
    $region30: #{tpu_custom_call.1} parent=1 // pred_check
      _
    $region31: #{tpu_custom_call.1} parent=1 // pred_check_branch
      %76 = sbr.rel (0) target = $region33
    $region32: #{tpu_custom_call.1} parent=1 // pred_region
      _
    $region33: #{tpu_custom_call.1} parent=1 // pred_fallthru
      _
    // Predicated region
    $region34: #{tpu_custom_call.1} parent=1 // pred_check
      _
    $region35: #{tpu_custom_call.1} parent=1 // pred_check_branch
      %78 = sbr.rel (0) target = $region37
    $region36: #{tpu_custom_call.1} parent=1 // pred_region
      _
    $region37: #{tpu_custom_call.1} parent=1 // pred_fallthru
      _
    // Predicated region
    $region38: #{tpu_custom_call.1} parent=1 // pred_check
      _
    $region39: #{tpu_custom_call.1} parent=1 // pred_check_branch
      %80 = sbr.rel (0) target = $region41
    $region40: #{tpu_custom_call.1} parent=1 // pred_region
      _
    $region41: #{tpu_custom_call.1} parent=1 // pred_fallthru
      _
    // Predicated region
    $region42: #{tpu_custom_call.1} parent=1 // pred_check
      _
    $region43: #{tpu_custom_call.1} parent=1 // pred_check_branch
      %82 = sbr.rel (0) target = $region45
    $region44: #{tpu_custom_call.1} parent=1 // pred_region
      _
    $region45: #{tpu_custom_call.1} parent=1 // pred_fallthru
      _
    // Predicated region
    $region46: #{tpu_custom_call.1} parent=1 // pred_check
      _
    $region47: #{tpu_custom_call.1} parent=1 // pred_check_branch
      %84 = sbr.rel (0) target = $region49
    $region48: #{tpu_custom_call.1} parent=1 // pred_region
      %s86 = ssub.s32 1024, 1024
      %87 = vsyncadd [#allocation9], %s86
      %s88 = sshll.u32 [#allocation10], 4
      %s89 = int_to_ptr.vmem [resolvable:$true] %s88
      %94 = dma.hbm_to_vmem [thread:$0]  %s11, 1024, %s89, [#allocation9], 128, 128, 8
    $region49: #{tpu_custom_call.1} parent=1 // pred_fallthru
      _
    // Predicated region
    $region50: #{tpu_custom_call.1} parent=1 // pred_check
      _
    $region51: #{tpu_custom_call.1} parent=1 // pred_check_branch
      %96 = sbr.rel (0) target = $region53
    $region52: #{tpu_custom_call.1} parent=1 // pred_region
      _
    $region53: #{tpu_custom_call.1} parent=1 // pred_fallthru
      _
    // Predicated region
    $region54: #{tpu_custom_call.1} parent=1 // pred_check
      _
    $region55: #{tpu_custom_call.1} parent=1 // pred_check_branch
      %98 = sbr.rel (0) target = $region57
    $region56: #{tpu_custom_call.1} parent=1 // pred_region
      %s100 = ssub.s32 512, 512
      %101 = vsyncadd [#allocation12], %s100
      %s102 = sshll.u32 [#allocation11], 4
      %s103 = int_to_ptr.vmem [resolvable:$true] %s102
      %108 = dma.hbm_to_vmem [thread:$0]  %s13, 512, %s103, [#allocation12], 128, 128, 8
    $region57: #{tpu_custom_call.1} parent=1 // pred_fallthru
      _
    // Predicated region
    $region58: #{tpu_custom_call.1} parent=1 // pred_check
      _
    $region59: #{tpu_custom_call.1} parent=1 // pred_check_branch
      %110 = sbr.rel (0) target = $region61
    $region60: #{tpu_custom_call.1} parent=1 // pred_region
      _
    $region61: #{tpu_custom_call.1} parent=1 // pred_fallthru
      _
    // Predicated region
    $region62: #{tpu_custom_call.1} parent=1 // pred_check
      _
    $region63: #{tpu_custom_call.1} parent=1 // pred_check_branch
      %112 = sbr.rel (0) target = $region65
    $region64: #{tpu_custom_call.1} parent=1 // pred_region
      %113 = dma.done [#allocation3], 512
    $region65: #{tpu_custom_call.1} parent=1 // pred_fallthru
      _
    // Predicated region
    $region66: #{tpu_custom_call.1} parent=1 // pred_check
      _
    $region67: #{tpu_custom_call.1} parent=1 // pred_check_branch
      %115 = sbr.rel (0) target = $region69
    $region68: #{tpu_custom_call.1} parent=1 // pred_region
      %116 = dma.done [#allocation6], 1024
    $region69: #{tpu_custom_call.1} parent=1 // pred_fallthru
      _
    // Predicated region
    $region70: #{tpu_custom_call.1} parent=1 // pred_check
      _
    $region71: #{tpu_custom_call.1} parent=1 // pred_check_branch
      %118 = sbr.rel (0) target = $region73
    $region72: #{tpu_custom_call.1} parent=1 // pred_region
      %119 = dma.done [#allocation6], 128
    $region73: #{tpu_custom_call.1} parent=1 // pred_fallthru
      _
    // Predicated region
    $region74: #{tpu_custom_call.1} parent=1 // pred_check
      _
    $region75: #{tpu_custom_call.1} parent=1 // pred_check_branch
      %121 = sbr.rel (0) target = $region77
    $region76: #{tpu_custom_call.1} parent=1 // pred_region
      %122 = dma.done [#allocation9], 64
    $region77: #{tpu_custom_call.1} parent=1 // pred_fallthru
      _
    // Predicated region
    $region78: #{tpu_custom_call.1} parent=1 // pred_check
      _
    $region79: #{tpu_custom_call.1} parent=1 // pred_check_branch
      %124 = sbr.rel (0) target = $region81
    $region80: #{tpu_custom_call.1} parent=1 // pred_region
      %125 = dma.done [#allocation9], 1024
    $region81: #{tpu_custom_call.1} parent=1 // pred_fallthru
      _
    // Predicated region
    $region82: #{tpu_custom_call.1} parent=1 // pred_check
      _
    $region83: #{tpu_custom_call.1} parent=1 // pred_check_branch
      %127 = sbr.rel (0) target = $region85
    $region84: #{tpu_custom_call.1} parent=1 // pred_region
      %128 = dma.done [#allocation12], 512
    $region85: #{tpu_custom_call.1} parent=1 // pred_fallthru
      _
    %v129 = vld [vmem:[#allocation7] sm:$0x3f]
    %v130 = vld [vmem:[#allocation8] sm:$0x7]
    %v131 = vld [vmem:[#allocation2] sm:$0xff]
    %v132 = vld [vmem:[#allocation2 + $0x8] sm:$0xff]
    %v133 = vld [vmem:[#allocation2 + $0x10] sm:$0xff]
    %v134 = vld [vmem:[#allocation2 + $0x18] sm:$0xff]
    %v135 = vld [vmem:[%s1] sm:$0xff]
    %v136 = vld [vmem:[%s1 + $0x8] sm:$0xff]
    %v137 = vld [vmem:[%s1 + $0x10] sm:$0xff]
    %v138 = vld [vmem:[%s1 + $0x18] sm:$0xff]
    %v139 = vld [vmem:[%s1 + $0x20] sm:$0xff]
    %v140 = vld [vmem:[%s1 + $0x28] sm:$0xff]
    %v141 = vld [vmem:[%s1 + $0x30] sm:$0xff]
    %v142 = vld [vmem:[%s1 + $0x38] sm:$0xff]
    %v143 = vld [vmem:[%s1 + $0x40] sm:$0xff]
    %v144 = vld [vmem:[%s1 + $0x48] sm:$0xff]
    %v145 = vld [vmem:[%s1 + $0x50] sm:$0xff]
    %v146 = vld [vmem:[%s1 + $0x58] sm:$0xff]
    %v147 = vld [vmem:[%s1 + $0x60] sm:$0xff]
    %v148 = vld [vmem:[%s1 + $0x68] sm:$0xff]
    %v149 = vld [vmem:[%s1 + $0x70] sm:$0xff]
    %v150 = vld [vmem:[%s1 + $0x78] sm:$0xff]
    %v151 = vld [vmem:[%s1 + $0x80] sm:$0xff]
    %v152 = vld [vmem:[%s1 + $0x88] sm:$0xff]
    %v153 = vld [vmem:[%s1 + $0x90] sm:$0xff]
    %v154 = vlaneseq
    %v155 = vshrl.u32 %v154, 7
    %v156 = vsub.s32 0, %v155
    %v157 = vrot.slane %v129, %v156
    %vm158 = vcmask 195584
    %v160 = vsel %vm158, %v132, 0
    %v163 = vsel %vm158, %v134, 0
    %165 = vmatprep.subr.mxu0 0.0
    %166 = vmatpush1.msra.mxu0 %v135
    %167 = vmatprep.subr.mxu0 0.0
    %168 = vmatpush1.msra.mxu0 %v136
    %169 = vmatprep.subr.mxu0 0.0
    %170 = vmatpush1.msra.mxu0 %v137
    %171 = vmatprep.subr.mxu0 0.0
    %172 = vmatpush1.msra.mxu0 %v138
    %173 = vmatprep.subr.mxu0 0.0
    %174 = vmatpush1.msra.mxu0 %v139
    %175 = vmatprep.subr.mxu0 0.0
    %176 = vmatpush1.msra.mxu0 %v140
    %177 = vmatprep.subr.mxu0 0.0
    %178 = vmatpush1.msra.mxu0 %v141
    %179 = vmatprep.subr.mxu0 0.0
    %180 = vmatpush1.msra.mxu0 %v142
    %181 = vmatprep.subr.mxu0 0.0
    %182 = vmatpush1.msra.mxu0 %v143
    %183 = vmatprep.subr.mxu0 0.0
    %184 = vmatpush1.msra.mxu0 %v144
    %185 = vmatprep.subr.mxu0 0.0
    %186 = vmatpush1.msra.mxu0 %v145
    %187 = vmatprep.subr.mxu0 0.0
    %188 = vmatpush1.msra.mxu0 %v146
    %189 = vmatprep.subr.mxu0 0.0
    %190 = vmatpush1.msra.mxu0 %v147
    %191 = vmatprep.subr.mxu0 0.0
    %192 = vmatpush1.msra.mxu0 %v148
    %193 = vmatprep.subr.mxu0 0.0
    %194 = vmatpush1.msra.mxu0 %v149
    %195 = vmatprep.subr.mxu0 0.0
    %196 = vmatpush1.msra.mxu0 %v150
    %197 = vmatprep.subr.mxu0 0.0
    %198 = vmatpush1.msra.mxu0 %v151
    %199 = vmatprep.subr.mxu0 0.0
    %200 = vmatpush1.msra.mxu0 %v152
    %201 = vmatprep.subr.mxu0 0.0
    %202 = vmatpush1.msra.mxu0 %v153
    %203 = vmatprep.subr.mxu0 0.0
    %204 = vmatpush1.msra.mxu0 0.0
    %205 = vmatprep.subr.mxu0 0.0
    %206 = vmatpush1.msra.mxu0 0.0
    %207 = vmatprep.subr.mxu0 0.0
    %208 = vmatpush1.msra.mxu0 0.0
    %209 = vmatprep.subr.mxu0 0.0
    %210 = vmatpush1.msra.mxu0 0.0
    %211 = vmatprep.subr.mxu0 0.0
    %212 = vmatpush1.msra.mxu0 0.0
    %213 = vmatprep.subr.mxu0 0.0
    %214 = vmatpush1.msra.mxu0 0.0
    %215 = vmatprep.subr.mxu0 0.0
    %216 = vmatpush1.msra.mxu0 0.0
    %217 = vmatprep.subr.mxu0 0.0
    %218 = vmatpush1.msra.mxu0 0.0
    %219 = vmatprep.subr.mxu0 0.0
    %220 = vmatpush1.msra.mxu0 0.0
    %221 = vmatprep.subr.mxu0 0.0
    %222 = vmatpush1.msra.mxu0 0.0
    %223 = vmatprep.subr.mxu0 0.0
    %224 = vmatpush1.msra.mxu0 0.0
    %225 = vmatprep.subr.mxu0 0.0
    %226 = vmatpush1.msra.mxu0 0.0
    %227 = vmatprep.subr.mxu0 0.0
    %228 = vmatpush1.msra.mxu0 0.0
    %229 = vmatprep.mubr.f32.mxu0 %v160
    %230 = vmatmul.mubr.f32.gmra.mrb[0].mxu0 %v131
    %v231 = vpop.f32.mrb[0].mxu0
    %v232 = vadd.f32 %v157, %v231
    %v233 = vpop.f32.mrb[0].mxu0
    %234 = vmatprep.mubr.f32.mxu0 %v163
    %235 = vmatmul.mubr.f32.gmra.mrb[0].mxu0 %v133
    %v236 = vpop.f32.mrb[0].mxu0
    %v237 = vadd.f32 %v157, %v236
    %v238 = vpop.f32.mrb[0].mxu0
    %239 = vdwg.mxu0
    %vm240 = vcmp.ge.f32.partialorder %v232, 0.0
    %vm241 = vcmp.ge.f32.partialorder %v237, 0.0
    %v242 = vlaneseq
    %v243 = vshrl.u32 %v242, 7
    %v244 = vsub.s32 1, %v243
    %v245 = vrot.slane %v129, %v244
    %v246 = vmul.f32 %v245, %v232
    %v247 = vmul.f32 %v245, %v237
    %v248 = vsel %vm240, %v232, %v246
    %v249 = vsel %vm241, %v237, %v247
    %v250 = vld [vmem:[%s2] sm:$0xff]
    %v251 = vld [vmem:[%s2 + $0x8] sm:$0xff]
    %v252 = vld [vmem:[%s2 + $0x10] sm:$0xff]
    %v253 = vld [vmem:[%s2 + $0x18] sm:$0xff]
    %v254 = vld [vmem:[%s2 + $0x20] sm:$0xff]
    %v255 = vld [vmem:[%s2 + $0x28] sm:$0xff]
    %v256 = vld [vmem:[%s2 + $0x30] sm:$0xff]
    %v257 = vld [vmem:[%s2 + $0x38] sm:$0xff]
    %v258 = vld [vmem:[%s2 + $0x40] sm:$0xff]
    %v259 = vld [vmem:[%s2 + $0x48] sm:$0xff]
    %v260 = vld [vmem:[%s2 + $0x50] sm:$0xff]
    %v261 = vld [vmem:[%s2 + $0x58] sm:$0xff]
    %v262 = vld [vmem:[%s2 + $0x60] sm:$0xff]
    %v263 = vld [vmem:[%s2 + $0x68] sm:$0xff]
    %v264 = vld [vmem:[%s2 + $0x70] sm:$0xff]
    %v265 = vld [vmem:[%s2 + $0x78] sm:$0xff]
    %v266 = vlaneseq
    %v267 = vshrl.u32 %v266, 7
    %v268 = vsub.s32 2, %v267
    %v269 = vrot.slane %v129, %v268
    %270 = vmatprep.subr.mxu0 0.0
    %271 = vmatpush1.msra.mxu0 %v250
    %272 = vmatprep.subr.mxu0 0.0
    %273 = vmatpush1.msra.mxu0 %v251
    %274 = vmatprep.subr.mxu0 0.0
    %275 = vmatpush1.msra.mxu0 %v252
    %276 = vmatprep.subr.mxu0 0.0
    %277 = vmatpush1.msra.mxu0 %v253
    %278 = vmatprep.subr.mxu0 0.0
    %279 = vmatpush1.msra.mxu0 %v254
    %280 = vmatprep.subr.mxu0 0.0
    %281 = vmatpush1.msra.mxu0 %v255
    %282 = vmatprep.subr.mxu0 0.0
    %283 = vmatpush1.msra.mxu0 %v256
    %284 = vmatprep.subr.mxu0 0.0
    %285 = vmatpush1.msra.mxu0 %v257
    %286 = vmatprep.subr.mxu0 0.0
    %287 = vmatpush1.msra.mxu0 %v258
    %288 = vmatprep.subr.mxu0 0.0
    %289 = vmatpush1.msra.mxu0 %v259
    %290 = vmatprep.subr.mxu0 0.0
    %291 = vmatpush1.msra.mxu0 %v260
    %292 = vmatprep.subr.mxu0 0.0
    %293 = vmatpush1.msra.mxu0 %v261
    %294 = vmatprep.subr.mxu0 0.0
    %295 = vmatpush1.msra.mxu0 %v262
    %296 = vmatprep.subr.mxu0 0.0
    %297 = vmatpush1.msra.mxu0 %v263
    %298 = vmatprep.subr.mxu0 0.0
    %299 = vmatpush1.msra.mxu0 %v264
    %300 = vmatprep.subr.mxu0 0.0
    %301 = vmatpush1.msra.mxu0 %v265
    %302 = vmatprep.subr.mxu0 0.0
    %303 = vmatpush1.msra.mxu0 0.0
    %304 = vmatprep.subr.mxu0 0.0
    %305 = vmatpush1.msra.mxu0 0.0
    %306 = vmatprep.subr.mxu0 0.0
    %307 = vmatpush1.msra.mxu0 0.0
    %308 = vmatprep.subr.mxu0 0.0
    %309 = vmatpush1.msra.mxu0 0.0
    %310 = vmatprep.subr.mxu0 0.0
    %311 = vmatpush1.msra.mxu0 0.0
    %312 = vmatprep.subr.mxu0 0.0
    %313 = vmatpush1.msra.mxu0 0.0
    %314 = vmatprep.subr.mxu0 0.0
    %315 = vmatpush1.msra.mxu0 0.0
    %316 = vmatprep.subr.mxu0 0.0
    %317 = vmatpush1.msra.mxu0 0.0
    %318 = vmatprep.subr.mxu0 0.0
    %319 = vmatpush1.msra.mxu0 0.0
    %320 = vmatprep.subr.mxu0 0.0
    %321 = vmatpush1.msra.mxu0 0.0
    %322 = vmatprep.subr.mxu0 0.0
    %323 = vmatpush1.msra.mxu0 0.0
    %324 = vmatprep.subr.mxu0 0.0
    %325 = vmatpush1.msra.mxu0 0.0
    %326 = vmatprep.subr.mxu0 0.0
    %327 = vmatpush1.msra.mxu0 0.0
    %328 = vmatprep.subr.mxu0 0.0
    %329 = vmatpush1.msra.mxu0 0.0
    %330 = vmatprep.subr.mxu0 0.0
    %331 = vmatpush1.msra.mxu0 0.0
    %332 = vmatprep.subr.mxu0 0.0
    %333 = vmatpush1.msra.mxu0 0.0
    %334 = vmatprep.mubr.f32.mxu0 0.0
    %335 = vmatmul.mubr.f32.gmra.mrb[0].mxu0 %v248
    %v336 = vpop.f32.mrb[0].mxu0
    %v337 = vadd.f32 %v269, %v336
    %v338 = vpop.f32.mrb[0].mxu0
    %339 = vmatprep.mubr.f32.mxu0 0.0
    %340 = vmatmul.mubr.f32.gmra.mrb[0].mxu0 %v249
    %v341 = vpop.f32.mrb[0].mxu0
    %v342 = vadd.f32 %v269, %v341
    %v343 = vpop.f32.mrb[0].mxu0
    %344 = vdwg.mxu0
    %v345 = vlaneseq
    %v346 = vshrl.u32 %v345, 7
    %v347 = vsub.s32 3, %v346
    %v348 = vrot.slane %v129, %v347
    %v349 = vmul.f32 %v337, %v348
    %v350 = vmul.f32 %v342, %v348
    %v351 = vlaneseq
    %v352 = vshrl.u32 %v351, 7
    %v353 = vsub.s32 4, %v352
    %v354 = vrot.slane %v129, %v353
    %v355 = vadd.f32 %v349, %v354
    %v356 = vadd.f32 %v350, %v354
    %vm357 = vcmp.ge.f32.partialorder %v355, 0.0
    %vm358 = vcmp.ge.f32.partialorder %v356, 0.0
    %v359 = vlaneseq
    %v360 = vshrl.u32 %v359, 7
    %v361 = vsub.s32 5, %v360
    %v362 = vrot.slane %v129, %v361
    %v363 = vmul.f32 %v362, %v355
    %v364 = vmul.f32 %v362, %v356
    %v365 = vsel %vm357, %v355, %v363
    %v366 = vsel %vm358, %v356, %v364
    %v367 = vld [vmem:[%s3] sm:$0xff]
    %v368 = vld [vmem:[%s3 + $0x8] sm:$0xff]
    %v369 = vld [vmem:[%s3 + $0x10] sm:$0xff]
    %v370 = vld [vmem:[%s3 + $0x18] sm:$0xff]
    %v371 = vld [vmem:[%s3 + $0x20] sm:$0xff]
    %v372 = vld [vmem:[%s3 + $0x28] sm:$0xff]
    %v373 = vld [vmem:[%s3 + $0x30] sm:$0xff]
    %v374 = vld [vmem:[%s3 + $0x38] sm:$0xff]
    %v375 = vld [vmem:[%s3 + $0x40] sm:$0xff]
    %v376 = vld [vmem:[%s3 + $0x48] sm:$0xff]
    %v377 = vld [vmem:[%s3 + $0x50] sm:$0xff]
    %v378 = vld [vmem:[%s3 + $0x58] sm:$0xff]
    %v379 = vld [vmem:[%s3 + $0x60] sm:$0xff]
    %v380 = vld [vmem:[%s3 + $0x68] sm:$0xff]
    %v381 = vld [vmem:[%s3 + $0x70] sm:$0xff]
    %v382 = vld [vmem:[%s3 + $0x78] sm:$0xff]
    %v383 = vlaneseq
    %v384 = vshrl.u32 %v383, 7
    %v385 = vsub.s32 0, %v384
    %v386 = vrot.slane %v130, %v385
    %387 = vmatprep.subr.mxu0 0.0
    %388 = vmatpush1.msra.mxu0 %v367
    %389 = vmatprep.subr.mxu0 0.0
    %390 = vmatpush1.msra.mxu0 %v368
    %391 = vmatprep.subr.mxu0 0.0
    %392 = vmatpush1.msra.mxu0 %v369
    %393 = vmatprep.subr.mxu0 0.0
    %394 = vmatpush1.msra.mxu0 %v370
    %395 = vmatprep.subr.mxu0 0.0
    %396 = vmatpush1.msra.mxu0 %v371
    %397 = vmatprep.subr.mxu0 0.0
    %398 = vmatpush1.msra.mxu0 %v372
    %399 = vmatprep.subr.mxu0 0.0
    %400 = vmatpush1.msra.mxu0 %v373
    %401 = vmatprep.subr.mxu0 0.0
    %402 = vmatpush1.msra.mxu0 %v374
    %403 = vmatprep.subr.mxu0 0.0
    %404 = vmatpush1.msra.mxu0 %v375
    %405 = vmatprep.subr.mxu0 0.0
    %406 = vmatpush1.msra.mxu0 %v376
    %407 = vmatprep.subr.mxu0 0.0
    %408 = vmatpush1.msra.mxu0 %v377
    %409 = vmatprep.subr.mxu0 0.0
    %410 = vmatpush1.msra.mxu0 %v378
    %411 = vmatprep.subr.mxu0 0.0
    %412 = vmatpush1.msra.mxu0 %v379
    %413 = vmatprep.subr.mxu0 0.0
    %414 = vmatpush1.msra.mxu0 %v380
    %415 = vmatprep.subr.mxu0 0.0
    %416 = vmatpush1.msra.mxu0 %v381
    %417 = vmatprep.subr.mxu0 0.0
    %418 = vmatpush1.msra.mxu0 %v382
    %419 = vmatprep.subr.mxu0 0.0
    %420 = vmatpush1.msra.mxu0 0.0
    %421 = vmatprep.subr.mxu0 0.0
    %422 = vmatpush1.msra.mxu0 0.0
    %423 = vmatprep.subr.mxu0 0.0
    %424 = vmatpush1.msra.mxu0 0.0
    %425 = vmatprep.subr.mxu0 0.0
    %426 = vmatpush1.msra.mxu0 0.0
    %427 = vmatprep.subr.mxu0 0.0
    %428 = vmatpush1.msra.mxu0 0.0
    %429 = vmatprep.subr.mxu0 0.0
    %430 = vmatpush1.msra.mxu0 0.0
    %431 = vmatprep.subr.mxu0 0.0
    %432 = vmatpush1.msra.mxu0 0.0
    %433 = vmatprep.subr.mxu0 0.0
    %434 = vmatpush1.msra.mxu0 0.0
    %435 = vmatprep.subr.mxu0 0.0
    %436 = vmatpush1.msra.mxu0 0.0
    %437 = vmatprep.subr.mxu0 0.0
    %438 = vmatpush1.msra.mxu0 0.0
    %439 = vmatprep.subr.mxu0 0.0
    %440 = vmatpush1.msra.mxu0 0.0
    %441 = vmatprep.subr.mxu0 0.0
    %442 = vmatpush1.msra.mxu0 0.0
    %443 = vmatprep.subr.mxu0 0.0
    %444 = vmatpush1.msra.mxu0 0.0
    %445 = vmatprep.subr.mxu0 0.0
    %446 = vmatpush1.msra.mxu0 0.0
    %447 = vmatprep.subr.mxu0 0.0
    %448 = vmatpush1.msra.mxu0 0.0
    %449 = vmatprep.subr.mxu0 0.0
    %450 = vmatpush1.msra.mxu0 0.0
    %451 = vmatprep.mubr.f32.mxu0 0.0
    %452 = vmatmul.mubr.f32.gmra.mrb[0].mxu0 %v365
    %v453 = vpop.f32.mrb[0].mxu0
    %v454 = vadd.f32 %v386, %v453
    %v455 = vpop.f32.mrb[0].mxu0
    %456 = vmatprep.mubr.f32.mxu0 0.0
    %457 = vmatmul.mubr.f32.gmra.mrb[0].mxu0 %v366
    %v458 = vpop.f32.mrb[0].mxu0
    %v459 = vadd.f32 %v386, %v458
    %v460 = vpop.f32.mrb[0].mxu0
    %461 = vdwg.mxu0
    %vm462 = vcmp.ge.f32.partialorder %v454, 0.0
    %vm463 = vcmp.ge.f32.partialorder %v459, 0.0
    %v464 = vlaneseq
    %v465 = vshrl.u32 %v464, 7
    %v466 = vsub.s32 1, %v465
    %v467 = vrot.slane %v130, %v466
    %v468 = vmul.f32 %v467, %v454
    %v469 = vmul.f32 %v467, %v459
    %v470 = vsel %vm462, %v454, %v468
    %v471 = vsel %vm463, %v459, %v469
    %v472 = vld [vmem:[#allocation5] sm:$0xff]
    %v473 = vld [vmem:[#allocation5 + $0x8] sm:$0xff]
    %v474 = vld [vmem:[#allocation5 + $0x10] sm:$0xff]
    %v475 = vld [vmem:[#allocation5 + $0x18] sm:$0xff]
    %v476 = vld [vmem:[#allocation5 + $0x20] sm:$0xff]
    %v477 = vld [vmem:[#allocation5 + $0x28] sm:$0xff]
    %v478 = vld [vmem:[#allocation5 + $0x30] sm:$0xff]
    %v479 = vld [vmem:[#allocation5 + $0x38] sm:$0xff]
    %v480 = vlaneseq
    %v481 = vshrl.u32 %v480, 7
    %v482 = vsub.s32 2, %v481
    %v483 = vrot.slane %v130, %v482
    %vm484 = vcmask 523264
    %v486 = vsel %vm484, %v470, 0
    %v489 = vsel %vm484, %v471, 0
    %491 = vmatprep.subr.mxu0 0.0
    %492 = vmatpush1.msra.mxu0 %v472
    %493 = vmatprep.subr.mxu0 0.0
    %494 = vmatpush1.msra.mxu0 %v473
    %495 = vmatprep.subr.mxu0 0.0
    %496 = vmatpush1.msra.mxu0 %v474
    %497 = vmatprep.subr.mxu0 0.0
    %498 = vmatpush1.msra.mxu0 %v475
    %499 = vmatprep.subr.mxu0 0.0
    %500 = vmatpush1.msra.mxu0 %v476
    %501 = vmatprep.subr.mxu0 0.0
    %502 = vmatpush1.msra.mxu0 %v477
    %503 = vmatprep.subr.mxu0 0.0
    %504 = vmatpush1.msra.mxu0 %v478
    %505 = vmatprep.subr.mxu0 0.0
    %506 = vmatpush1.msra.mxu0 %v479
    %507 = vmatprep.subr.mxu0 0.0
    %508 = vmatpush1.msra.mxu0 0.0
    %509 = vmatprep.subr.mxu0 0.0
    %510 = vmatpush1.msra.mxu0 0.0
    %511 = vmatprep.subr.mxu0 0.0
    %512 = vmatpush1.msra.mxu0 0.0
    %513 = vmatprep.subr.mxu0 0.0
    %514 = vmatpush1.msra.mxu0 0.0
    %515 = vmatprep.subr.mxu0 0.0
    %516 = vmatpush1.msra.mxu0 0.0
    %517 = vmatprep.subr.mxu0 0.0
    %518 = vmatpush1.msra.mxu0 0.0
    %519 = vmatprep.subr.mxu0 0.0
    %520 = vmatpush1.msra.mxu0 0.0
    %521 = vmatprep.subr.mxu0 0.0
    %522 = vmatpush1.msra.mxu0 0.0
    %523 = vmatprep.subr.mxu0 0.0
    %524 = vmatpush1.msra.mxu0 0.0
    %525 = vmatprep.subr.mxu0 0.0
    %526 = vmatpush1.msra.mxu0 0.0
    %527 = vmatprep.subr.mxu0 0.0
    %528 = vmatpush1.msra.mxu0 0.0
    %529 = vmatprep.subr.mxu0 0.0
    %530 = vmatpush1.msra.mxu0 0.0
    %531 = vmatprep.subr.mxu0 0.0
    %532 = vmatpush1.msra.mxu0 0.0
    %533 = vmatprep.subr.mxu0 0.0
    %534 = vmatpush1.msra.mxu0 0.0
    %535 = vmatprep.subr.mxu0 0.0
    %536 = vmatpush1.msra.mxu0 0.0
    %537 = vmatprep.subr.mxu0 0.0
    %538 = vmatpush1.msra.mxu0 0.0
    %539 = vmatprep.subr.mxu0 0.0
    %540 = vmatpush1.msra.mxu0 0.0
    %541 = vmatprep.subr.mxu0 0.0
    %542 = vmatpush1.msra.mxu0 0.0
    %543 = vmatprep.subr.mxu0 0.0
    %544 = vmatpush1.msra.mxu0 0.0
    %545 = vmatprep.subr.mxu0 0.0
    %546 = vmatpush1.msra.mxu0 0.0
    %547 = vmatprep.subr.mxu0 0.0
    %548 = vmatpush1.msra.mxu0 0.0
    %549 = vmatprep.subr.mxu0 0.0
    %550 = vmatpush1.msra.mxu0 0.0
    %551 = vmatprep.subr.mxu0 0.0
    %552 = vmatpush1.msra.mxu0 0.0
    %553 = vmatprep.subr.mxu0 0.0
    %554 = vmatpush1.msra.mxu0 0.0
    %555 = vmatprep.mubr.f32.mxu0 0.0
    %556 = vmatmul.mubr.f32.gmra.mrb[0].mxu0 %v486
    %v557 = vpop.f32.mrb[0].mxu0
    %v558 = vadd.f32 %v483, %v557
    %v559 = vpop.f32.mrb[0].mxu0
    %560 = vmatprep.mubr.f32.mxu0 0.0
    %561 = vmatmul.mubr.f32.gmra.mrb[0].mxu0 %v489
    %v562 = vpop.f32.mrb[0].mxu0
    %v563 = vadd.f32 %v483, %v562
    %v564 = vpop.f32.mrb[0].mxu0
    %565 = vdwg.mxu0
    %v566 = vld [vmem:[%s7] sm:$0xff]
    %v567 = vld [vmem:[%s7 + $0x8] sm:$0xff]
    %v568 = vld [vmem:[%s7 + $0x10] sm:$0xff]
    %v569 = vld [vmem:[%s7 + $0x18] sm:$0xff]
    %v570 = vld [vmem:[%s7 + $0x20] sm:$0xff]
    %v571 = vld [vmem:[%s7 + $0x28] sm:$0xff]
    %v572 = vld [vmem:[%s7 + $0x30] sm:$0xff]
    %v573 = vld [vmem:[%s7 + $0x38] sm:$0xff]
    %v575 = vsel %vm484, %v558, 0
    %v578 = vsel %vm484, %v563, 0
    %580 = vmatprep.subr.mxu0 0.0
    %581 = vmatpush1.msra.mxu0 %v566
    %582 = vmatprep.subr.mxu0 0.0
    %583 = vmatpush1.msra.mxu0 %v567
    %584 = vmatprep.subr.mxu0 0.0
    %585 = vmatpush1.msra.mxu0 %v568
    %586 = vmatprep.subr.mxu0 0.0
    %587 = vmatpush1.msra.mxu0 %v569
    %588 = vmatprep.subr.mxu0 0.0
    %589 = vmatpush1.msra.mxu0 %v570
    %590 = vmatprep.subr.mxu0 0.0
    %591 = vmatpush1.msra.mxu0 %v571
    %592 = vmatprep.subr.mxu0 0.0
    %593 = vmatpush1.msra.mxu0 %v572
    %594 = vmatprep.subr.mxu0 0.0
    %595 = vmatpush1.msra.mxu0 %v573
    %596 = vmatprep.subr.mxu0 0.0
    %597 = vmatpush1.msra.mxu0 0.0
    %598 = vmatprep.subr.mxu0 0.0
    %599 = vmatpush1.msra.mxu0 0.0
    %600 = vmatprep.subr.mxu0 0.0
    %601 = vmatpush1.msra.mxu0 0.0
    %602 = vmatprep.subr.mxu0 0.0
    %603 = vmatpush1.msra.mxu0 0.0
    %604 = vmatprep.subr.mxu0 0.0
    %605 = vmatpush1.msra.mxu0 0.0
    %606 = vmatprep.subr.mxu0 0.0
    %607 = vmatpush1.msra.mxu0 0.0
    %608 = vmatprep.subr.mxu0 0.0
    %609 = vmatpush1.msra.mxu0 0.0
    %610 = vmatprep.subr.mxu0 0.0
    %611 = vmatpush1.msra.mxu0 0.0
    %612 = vmatprep.subr.mxu0 0.0
    %613 = vmatpush1.msra.mxu0 0.0
    %614 = vmatprep.subr.mxu0 0.0
    %615 = vmatpush1.msra.mxu0 0.0
    %616 = vmatprep.subr.mxu0 0.0
    %617 = vmatpush1.msra.mxu0 0.0
    %618 = vmatprep.subr.mxu0 0.0
    %619 = vmatpush1.msra.mxu0 0.0
    %620 = vmatprep.subr.mxu0 0.0
    %621 = vmatpush1.msra.mxu0 0.0
    %622 = vmatprep.subr.mxu0 0.0
    %623 = vmatpush1.msra.mxu0 0.0
    %624 = vmatprep.subr.mxu0 0.0
    %625 = vmatpush1.msra.mxu0 0.0
    %626 = vmatprep.subr.mxu0 0.0
    %627 = vmatpush1.msra.mxu0 0.0
    %628 = vmatprep.subr.mxu0 0.0
    %629 = vmatpush1.msra.mxu0 0.0
    %630 = vmatprep.subr.mxu0 0.0
    %631 = vmatpush1.msra.mxu0 0.0
    %632 = vmatprep.subr.mxu0 0.0
    %633 = vmatpush1.msra.mxu0 0.0
    %634 = vmatprep.subr.mxu0 0.0
    %635 = vmatpush1.msra.mxu0 0.0
    %636 = vmatprep.subr.mxu0 0.0
    %637 = vmatpush1.msra.mxu0 0.0
    %638 = vmatprep.subr.mxu0 0.0
    %639 = vmatpush1.msra.mxu0 0.0
    %640 = vmatprep.subr.mxu0 0.0
    %641 = vmatpush1.msra.mxu0 0.0
    %642 = vmatprep.subr.mxu0 0.0
    %643 = vmatpush1.msra.mxu0 0.0
    %644 = vmatprep.mubr.f32.mxu0 0.0
    %645 = vmatmul.mubr.f32.gmra.mrb[0].mxu0 %v575
    %v646 = vpop.f32.mrb[0].mxu0
    %v647 = vadd.f32 0.0, %v646
    %v648 = vpop.f32.mrb[0].mxu0
    %649 = vmatprep.mubr.f32.mxu0 0.0
    %650 = vmatmul.mubr.f32.gmra.mrb[0].mxu0 %v578
    %v651 = vpop.f32.mrb[0].mxu0
    %v652 = vadd.f32 0.0, %v651
    %v653 = vpop.f32.mrb[0].mxu0
    %654 = vdwg.mxu0
    %vm655 = vcmp.ge.f32.partialorder %v647, 0.0
    %vm656 = vcmp.ge.f32.partialorder %v652, 0.0
    %v657 = vmul.f32 %v647, 0.3
    %v658 = vmul.f32 %v652, 0.3
    %v659 = vsel %vm655, %v647, %v657
    %v660 = vsel %vm656, %v652, %v658
    %663 = vrot.lane.b32.xlu0 %v659, 127
    %v664 = vpop.permute.xlu0 %663
    %665 = vrot.lane.b32.xlu0 %v660, 127
    %v666 = vpop.permute.xlu0 %665
    %v669 = vsub.f32 %v659, %v664
    %v670 = vsub.f32 %v660, %v666
    %v671 = vsub.f32 0.0, %v669
    %v672 = vsub.f32 0.0, %v670
    %v673 = vmul.f32 %v671, 1.442695
    %v674 = vpow.pop %v673
    %v675 = vmul.f32 %v672, 1.442695
    %v676 = vpow.pop %v675
    %v677 = vadd.f32 %v674, 1.0
    %v678 = vadd.f32 %v676, 1.0
    %v679 = vrcp.pop %v677
    %v680 = vmul.f32 1.0, %v679
    %v681 = vrcp.pop %v678
    %v682 = vmul.f32 1.0, %v681
    %v683 = vld [vmem:[%s8] sm:$0x3]
    %685 = vset.pattern.permute.xlu0 0
    %686 = vperm.xlu0 %685, %v680
    %v687 = vpop.permute.xlu0 %686
    %690 = vset.pattern.permute.xlu0 0
    %691 = vperm.xlu0 %690, %v682
    %v692 = vpop.permute.xlu0 %691
    %v694 = vlaneseq
    %v695 = vshrl.u32 %v694, 7
    %v696 = vsub.s32 0, %v695
    %v697 = vrot.slane %v683, %v696
    %v698 = vmul.f32 %v687, %v697
    %v699 = vmul.f32 %v692, %v697
    %v700 = vsub.f32 1.0, %v680
    %v701 = vsub.f32 1.0, %v682
    %703 = vset.pattern.permute.xlu0 0
    %704 = vperm.xlu0 %703, %v700
    %v705 = vpop.permute.xlu0 %704
    %708 = vset.pattern.permute.xlu0 0
    %709 = vperm.xlu0 %708, %v701
    %v710 = vpop.permute.xlu0 %709
    %v712 = vlaneseq
    %v713 = vshrl.u32 %v712, 7
    %v714 = vsub.s32 1, %v713
    %v715 = vrot.slane %v683, %v714
    %v716 = vmul.f32 %v705, %v715
    %v717 = vmul.f32 %v710, %v715
    %v718 = vadd.f32 %v698, %v716
    %v719 = vadd.f32 %v699, %v717
    %v720 = vmul.f32 %v558, %v718
    %v721 = vmul.f32 %v563, %v719
    %v722 = vld [vmem:[%s9] sm:$0xff]
    %v723 = vld [vmem:[%s9 + $0x8] sm:$0xff]
    %v724 = vld [vmem:[%s9 + $0x10] sm:$0xff]
    %v725 = vld [vmem:[%s9 + $0x18] sm:$0xff]
    %v726 = vld [vmem:[%s9 + $0x20] sm:$0xff]
    %v727 = vld [vmem:[%s9 + $0x28] sm:$0xff]
    %v728 = vld [vmem:[%s9 + $0x30] sm:$0xff]
    %v729 = vld [vmem:[%s9 + $0x38] sm:$0xff]
    %v731 = vsel %vm484, %v720, 0
    %v734 = vsel %vm484, %v721, 0
    %736 = vmatprep.subr.mxu0 0.0
    %737 = vmatpush1.msra.mxu0 %v722
    %738 = vmatprep.subr.mxu0 0.0
    %739 = vmatpush1.msra.mxu0 %v723
    %740 = vmatprep.subr.mxu0 0.0
    %741 = vmatpush1.msra.mxu0 %v724
    %742 = vmatprep.subr.mxu0 0.0
    %743 = vmatpush1.msra.mxu0 %v725
    %744 = vmatprep.subr.mxu0 0.0
    %745 = vmatpush1.msra.mxu0 %v726
    %746 = vmatprep.subr.mxu0 0.0
    %747 = vmatpush1.msra.mxu0 %v727
    %748 = vmatprep.subr.mxu0 0.0
    %749 = vmatpush1.msra.mxu0 %v728
    %750 = vmatprep.subr.mxu0 0.0
    %751 = vmatpush1.msra.mxu0 %v729
    %752 = vmatprep.subr.mxu0 0.0
    %753 = vmatpush1.msra.mxu0 0.0
    %754 = vmatprep.subr.mxu0 0.0
    %755 = vmatpush1.msra.mxu0 0.0
    %756 = vmatprep.subr.mxu0 0.0
    %757 = vmatpush1.msra.mxu0 0.0
    %758 = vmatprep.subr.mxu0 0.0
    %759 = vmatpush1.msra.mxu0 0.0
    %760 = vmatprep.subr.mxu0 0.0
    %761 = vmatpush1.msra.mxu0 0.0
    %762 = vmatprep.subr.mxu0 0.0
    %763 = vmatpush1.msra.mxu0 0.0
    %764 = vmatprep.subr.mxu0 0.0
    %765 = vmatpush1.msra.mxu0 0.0
    %766 = vmatprep.subr.mxu0 0.0
    %767 = vmatpush1.msra.mxu0 0.0
    %768 = vmatprep.subr.mxu0 0.0
    %769 = vmatpush1.msra.mxu0 0.0
    %770 = vmatprep.subr.mxu0 0.0
    %771 = vmatpush1.msra.mxu0 0.0
    %772 = vmatprep.subr.mxu0 0.0
    %773 = vmatpush1.msra.mxu0 0.0
    %774 = vmatprep.subr.mxu0 0.0
    %775 = vmatpush1.msra.mxu0 0.0
    %776 = vmatprep.subr.mxu0 0.0
    %777 = vmatpush1.msra.mxu0 0.0
    %778 = vmatprep.subr.mxu0 0.0
    %779 = vmatpush1.msra.mxu0 0.0
    %780 = vmatprep.subr.mxu0 0.0
    %781 = vmatpush1.msra.mxu0 0.0
    %782 = vmatprep.subr.mxu0 0.0
    %783 = vmatpush1.msra.mxu0 0.0
    %784 = vmatprep.subr.mxu0 0.0
    %785 = vmatpush1.msra.mxu0 0.0
    %786 = vmatprep.subr.mxu0 0.0
    %787 = vmatpush1.msra.mxu0 0.0
    %788 = vmatprep.subr.mxu0 0.0
    %789 = vmatpush1.msra.mxu0 0.0
    %790 = vmatprep.subr.mxu0 0.0
    %791 = vmatpush1.msra.mxu0 0.0
    %792 = vmatprep.subr.mxu0 0.0
    %793 = vmatpush1.msra.mxu0 0.0
    %794 = vmatprep.subr.mxu0 0.0
    %795 = vmatpush1.msra.mxu0 0.0
    %796 = vmatprep.subr.mxu0 0.0
    %797 = vmatpush1.msra.mxu0 0.0
    %798 = vmatprep.subr.mxu0 0.0
    %799 = vmatpush1.msra.mxu0 0.0
    %800 = vmatprep.mubr.f32.mxu0 0.0
    %801 = vmatmul.mubr.f32.gmra.mrb[0].mxu0 %v731
    %v802 = vpop.f32.mrb[0].mxu0
    %v803 = vadd.f32 0.0, %v802
    %v804 = vpop.f32.mrb[0].mxu0
    %805 = vmatprep.mubr.f32.mxu0 0.0
    %806 = vmatmul.mubr.f32.gmra.mrb[0].mxu0 %v734
    %v807 = vpop.f32.mrb[0].mxu0
    %v808 = vadd.f32 0.0, %v807
    %v809 = vpop.f32.mrb[0].mxu0
    %810 = vdwg.mxu0
    %v811 = vld [vmem:[%s10] sm:$0x3]
    %vm812 = vcmask 130048
    %v814 = vsel %vm812, %v811, 0
    %816 = vmatprep.subr.mxu0 0.0
    %817 = vmatpush1.msra.mxu0 %v803
    %818 = vmatprep.subr.mxu0 0.0
    %819 = vmatpush1.msra.mxu0 %v808
    %820 = vmatprep.subr.mxu0 0.0
    %821 = vmatpush1.msra.mxu0 0.0
    %822 = vmatprep.subr.mxu0 0.0
    %823 = vmatpush1.msra.mxu0 0.0
    %824 = vmatprep.subr.mxu0 0.0
    %825 = vmatpush1.msra.mxu0 0.0
    %826 = vmatprep.subr.mxu0 0.0
    %827 = vmatpush1.msra.mxu0 0.0
    %828 = vmatprep.subr.mxu0 0.0
    %829 = vmatpush1.msra.mxu0 0.0
    %830 = vmatprep.subr.mxu0 0.0
    %831 = vmatpush1.msra.mxu0 0.0
    %832 = vmatprep.subr.mxu0 0.0
    %833 = vmatpush1.msra.mxu0 0.0
    %834 = vmatprep.subr.mxu0 0.0
    %835 = vmatpush1.msra.mxu0 0.0
    %836 = vmatprep.subr.mxu0 0.0
    %837 = vmatpush1.msra.mxu0 0.0
    %838 = vmatprep.subr.mxu0 0.0
    %839 = vmatpush1.msra.mxu0 0.0
    %840 = vmatprep.subr.mxu0 0.0
    %841 = vmatpush1.msra.mxu0 0.0
    %842 = vmatprep.subr.mxu0 0.0
    %843 = vmatpush1.msra.mxu0 0.0
    %844 = vmatprep.subr.mxu0 0.0
    %845 = vmatpush1.msra.mxu0 0.0
    %846 = vmatprep.subr.mxu0 0.0
    %847 = vmatpush1.msra.mxu0 0.0
    %848 = vmatprep.subr.mxu0 0.0
    %849 = vmatpush1.msra.mxu0 0.0
    %850 = vmatprep.subr.mxu0 0.0
    %851 = vmatpush1.msra.mxu0 0.0
    %852 = vmatprep.subr.mxu0 0.0
    %853 = vmatpush1.msra.mxu0 0.0
    %854 = vmatprep.subr.mxu0 0.0
    %855 = vmatpush1.msra.mxu0 0.0
    %856 = vmatprep.subr.mxu0 0.0
    %857 = vmatpush1.msra.mxu0 0.0
    %858 = vmatprep.subr.mxu0 0.0
    %859 = vmatpush1.msra.mxu0 0.0
    %860 = vmatprep.subr.mxu0 0.0
    %861 = vmatpush1.msra.mxu0 0.0
    %862 = vmatprep.subr.mxu0 0.0
    %863 = vmatpush1.msra.mxu0 0.0
    %864 = vmatprep.subr.mxu0 0.0
    %865 = vmatpush1.msra.mxu0 0.0
    %866 = vmatprep.subr.mxu0 0.0
    %867 = vmatpush1.msra.mxu0 0.0
    %868 = vmatprep.subr.mxu0 0.0
    %869 = vmatpush1.msra.mxu0 0.0
    %870 = vmatprep.subr.mxu0 0.0
    %871 = vmatpush1.msra.mxu0 0.0
    %872 = vmatprep.subr.mxu0 0.0
    %873 = vmatpush1.msra.mxu0 0.0
    %874 = vmatprep.subr.mxu0 0.0
    %875 = vmatpush1.msra.mxu0 0.0
    %876 = vmatprep.subr.mxu0 0.0
    %877 = vmatpush1.msra.mxu0 0.0
    %878 = vmatprep.subr.mxu0 0.0
    %879 = vmatpush1.msra.mxu0 0.0
    %880 = vmatprep.mubr.f32.mxu0 0.0
    %881 = vmatmul.mubr.f32.gmra.mrb[0].mxu0 %v814
    %v882 = vpop.f32.mrb[0].mxu0
    %v883 = vadd.f32 0.0, %v882
    %v884 = vpop.f32.mrb[0].mxu0
    %885 = vdwg.mxu0
    %v886 = vld [vmem:[#allocation10] sm:$0xff]
    %v887 = vld [vmem:[#allocation10 + $0x8] sm:$0xff]
    %v888 = vld [vmem:[#allocation10 + $0x10] sm:$0xff]
    %v889 = vld [vmem:[#allocation10 + $0x18] sm:$0xff]
    %v890 = vld [vmem:[#allocation10 + $0x20] sm:$0xff]
    %v891 = vld [vmem:[#allocation10 + $0x28] sm:$0xff]
    %v892 = vld [vmem:[#allocation10 + $0x30] sm:$0xff]
    %v893 = vld [vmem:[#allocation10 + $0x38] sm:$0xff]
    %v894 = vld [vmem:[%s12] sm:$0x3]
    %v895 = vlaneseq
    %v896 = vshrl.u32 %v895, 7
    %v897 = vsub.s32 0, %v896
    %v898 = vrot.slane %v894, %v897
    %vm899 = vcmask 261120
    %v901 = vsel %vm899, %v883, 0
    %903 = vmatprep.subr.mxu0 0.0
    %904 = vmatpush1.msra.mxu0 %v886
    %905 = vmatprep.subr.mxu0 0.0
    %906 = vmatpush1.msra.mxu0 %v887
    %907 = vmatprep.subr.mxu0 0.0
    %908 = vmatpush1.msra.mxu0 %v888
    %909 = vmatprep.subr.mxu0 0.0
    %910 = vmatpush1.msra.mxu0 %v889
    %911 = vmatprep.subr.mxu0 0.0
    %912 = vmatpush1.msra.mxu0 0.0
    %913 = vmatprep.subr.mxu0 0.0
    %914 = vmatpush1.msra.mxu0 0.0
    %915 = vmatprep.subr.mxu0 0.0
    %916 = vmatpush1.msra.mxu0 0.0
    %917 = vmatprep.subr.mxu0 0.0
    %918 = vmatpush1.msra.mxu0 0.0
    %919 = vmatprep.subr.mxu0 0.0
    %920 = vmatpush1.msra.mxu0 0.0
    %921 = vmatprep.subr.mxu0 0.0
    %922 = vmatpush1.msra.mxu0 0.0
    %923 = vmatprep.subr.mxu0 0.0
    %924 = vmatpush1.msra.mxu0 0.0
    %925 = vmatprep.subr.mxu0 0.0
    %926 = vmatpush1.msra.mxu0 0.0
    %927 = vmatprep.subr.mxu0 0.0
    %928 = vmatpush1.msra.mxu0 0.0
    %929 = vmatprep.subr.mxu0 0.0
    %930 = vmatpush1.msra.mxu0 0.0
    %931 = vmatprep.subr.mxu0 0.0
    %932 = vmatpush1.msra.mxu0 0.0
    %933 = vmatprep.subr.mxu0 0.0
    %934 = vmatpush1.msra.mxu0 0.0
    %935 = vmatprep.subr.mxu0 0.0
    %936 = vmatpush1.msra.mxu0 0.0
    %937 = vmatprep.subr.mxu0 0.0
    %938 = vmatpush1.msra.mxu0 0.0
    %939 = vmatprep.subr.mxu0 0.0
    %940 = vmatpush1.msra.mxu0 0.0
    %941 = vmatprep.subr.mxu0 0.0
    %942 = vmatpush1.msra.mxu0 0.0
    %943 = vmatprep.subr.mxu0 0.0
    %944 = vmatpush1.msra.mxu0 0.0
    %945 = vmatprep.subr.mxu0 0.0
    %946 = vmatpush1.msra.mxu0 0.0
    %947 = vmatprep.subr.mxu0 0.0
    %948 = vmatpush1.msra.mxu0 0.0
    %949 = vmatprep.subr.mxu0 0.0
    %950 = vmatpush1.msra.mxu0 0.0
    %951 = vmatprep.subr.mxu0 0.0
    %952 = vmatpush1.msra.mxu0 0.0
    %953 = vmatprep.subr.mxu0 0.0
    %954 = vmatpush1.msra.mxu0 0.0
    %955 = vmatprep.subr.mxu0 0.0
    %956 = vmatpush1.msra.mxu0 0.0
    %957 = vmatprep.subr.mxu0 0.0
    %958 = vmatpush1.msra.mxu0 0.0
    %959 = vmatprep.subr.mxu0 0.0
    %960 = vmatpush1.msra.mxu0 0.0
    %961 = vmatprep.subr.mxu0 0.0
    %962 = vmatpush1.msra.mxu0 0.0
    %963 = vmatprep.subr.mxu0 0.0
    %964 = vmatpush1.msra.mxu0 0.0
    %965 = vmatprep.subr.mxu0 0.0
    %966 = vmatpush1.msra.mxu0 0.0
    %967 = vmatprep.mubr.f32.mxu0 0.0
    %968 = vmatmul.mubr.f32.gmra.mrb[0].mxu0 %v901
    %v969 = vpop.f32.mrb[0].mxu0
    %v970 = vadd.f32 %v898, %v969
    %v971 = vpop.f32.mrb[0].mxu0
    %972 = vdwg.mxu0
    %vm973 = vcmp.ge.f32.partialorder %v970, 0.0
    %v974 = vmul.f32 %v970, 0.01
    %v975 = vsel %vm973, %v970, %v974
    %v976 = vlaneseq
    %v977 = vshrl.u32 %v976, 7
    %v978 = vsub.s32 1, %v977
    %v979 = vrot.slane %v894, %v978
    %v981 = vsel %vm899, %v975, 0
    %983 = vmatprep.subr.mxu0 0.0
    %984 = vmatpush1.msra.mxu0 %v890
    %985 = vmatprep.subr.mxu0 0.0
    %986 = vmatpush1.msra.mxu0 %v891
    %987 = vmatprep.subr.mxu0 0.0
    %988 = vmatpush1.msra.mxu0 %v892
    %989 = vmatprep.subr.mxu0 0.0
    %990 = vmatpush1.msra.mxu0 %v893
    %991 = vmatprep.subr.mxu0 0.0
    %992 = vmatpush1.msra.mxu0 0.0
    %993 = vmatprep.subr.mxu0 0.0
    %994 = vmatpush1.msra.mxu0 0.0
    %995 = vmatprep.subr.mxu0 0.0
    %996 = vmatpush1.msra.mxu0 0.0
    %997 = vmatprep.subr.mxu0 0.0
    %998 = vmatpush1.msra.mxu0 0.0
    %999 = vmatprep.subr.mxu0 0.0
    %1000 = vmatpush1.msra.mxu0 0.0
    %1001 = vmatprep.subr.mxu0 0.0
    %1002 = vmatpush1.msra.mxu0 0.0
    %1003 = vmatprep.subr.mxu0 0.0
    %1004 = vmatpush1.msra.mxu0 0.0
    %1005 = vmatprep.subr.mxu0 0.0
    %1006 = vmatpush1.msra.mxu0 0.0
    %1007 = vmatprep.subr.mxu0 0.0
    %1008 = vmatpush1.msra.mxu0 0.0
    %1009 = vmatprep.subr.mxu0 0.0
    %1010 = vmatpush1.msra.mxu0 0.0
    %1011 = vmatprep.subr.mxu0 0.0
    %1012 = vmatpush1.msra.mxu0 0.0
    %1013 = vmatprep.subr.mxu0 0.0
    %1014 = vmatpush1.msra.mxu0 0.0
    %1015 = vmatprep.subr.mxu0 0.0
    %1016 = vmatpush1.msra.mxu0 0.0
    %1017 = vmatprep.subr.mxu0 0.0
    %1018 = vmatpush1.msra.mxu0 0.0
    %1019 = vmatprep.subr.mxu0 0.0
    %1020 = vmatpush1.msra.mxu0 0.0
    %1021 = vmatprep.subr.mxu0 0.0
    %1022 = vmatpush1.msra.mxu0 0.0
    %1023 = vmatprep.subr.mxu0 0.0
    %1024 = vmatpush1.msra.mxu0 0.0
    %1025 = vmatprep.subr.mxu0 0.0
    %1026 = vmatpush1.msra.mxu0 0.0
    %1027 = vmatprep.subr.mxu0 0.0
    %1028 = vmatpush1.msra.mxu0 0.0
    %1029 = vmatprep.subr.mxu0 0.0
    %1030 = vmatpush1.msra.mxu0 0.0
    %1031 = vmatprep.subr.mxu0 0.0
    %1032 = vmatpush1.msra.mxu0 0.0
    %1033 = vmatprep.subr.mxu0 0.0
    %1034 = vmatpush1.msra.mxu0 0.0
    %1035 = vmatprep.subr.mxu0 0.0
    %1036 = vmatpush1.msra.mxu0 0.0
    %1037 = vmatprep.subr.mxu0 0.0
    %1038 = vmatpush1.msra.mxu0 0.0
    %1039 = vmatprep.subr.mxu0 0.0
    %1040 = vmatpush1.msra.mxu0 0.0
    %1041 = vmatprep.subr.mxu0 0.0
    %1042 = vmatpush1.msra.mxu0 0.0
    %1043 = vmatprep.subr.mxu0 0.0
    %1044 = vmatpush1.msra.mxu0 0.0
    %1045 = vmatprep.subr.mxu0 0.0
    %1046 = vmatpush1.msra.mxu0 0.0
    %1047 = vmatprep.mubr.f32.mxu0 0.0
    %1048 = vmatmul.mubr.f32.gmra.mrb[0].mxu0 %v981
    %v1049 = vpop.f32.mrb[0].mxu0
    %v1050 = vadd.f32 %v979, %v1049
    %v1051 = vpop.f32.mrb[0].mxu0
    %1052 = vdwg.mxu0
    %vm1053 = vcmp.ge.f32.partialorder %v1050, 0.0
    %v1054 = vmul.f32 %v1050, 0.01
    %v1055 = vsel %vm1053, %v1050, %v1054
    %v1056 = vld [vmem:[#allocation11] sm:$0xff]
    %v1057 = vld [vmem:[#allocation11 + $0x8] sm:$0xff]
    %v1058 = vld [vmem:[#allocation11 + $0x10] sm:$0xff]
    %v1059 = vld [vmem:[#allocation11 + $0x18] sm:$0xff]
    %v1060 = vld [vmem:[%s14] sm:$0x1]
    %v1062 = vlaneseq
    %v1063 = vshrl.u32 %v1062, 7
    %v1064 = vsub.s32 0, %v1063
    %v1065 = vrot.slane %v1060, %v1064
    %v1068 = vsel %vm899, %v1055, 0
    %1070 = vmatprep.subr.mxu0 0.0
    %1071 = vmatpush1.msra.mxu0 %v1056
    %1072 = vmatprep.subr.mxu0 0.0
    %1073 = vmatpush1.msra.mxu0 %v1057
    %1074 = vmatprep.subr.mxu0 0.0
    %1075 = vmatpush1.msra.mxu0 %v1058
    %1076 = vmatprep.subr.mxu0 0.0
    %1077 = vmatpush1.msra.mxu0 %v1059
    %1078 = vmatprep.subr.mxu0 0.0
    %1079 = vmatpush1.msra.mxu0 0.0
    %1080 = vmatprep.subr.mxu0 0.0
    %1081 = vmatpush1.msra.mxu0 0.0
    %1082 = vmatprep.subr.mxu0 0.0
    %1083 = vmatpush1.msra.mxu0 0.0
    %1084 = vmatprep.subr.mxu0 0.0
    %1085 = vmatpush1.msra.mxu0 0.0
    %1086 = vmatprep.subr.mxu0 0.0
    %1087 = vmatpush1.msra.mxu0 0.0
    %1088 = vmatprep.subr.mxu0 0.0
    %1089 = vmatpush1.msra.mxu0 0.0
    %1090 = vmatprep.subr.mxu0 0.0
    %1091 = vmatpush1.msra.mxu0 0.0
    %1092 = vmatprep.subr.mxu0 0.0
    %1093 = vmatpush1.msra.mxu0 0.0
    %1094 = vmatprep.subr.mxu0 0.0
    %1095 = vmatpush1.msra.mxu0 0.0
    %1096 = vmatprep.subr.mxu0 0.0
    %1097 = vmatpush1.msra.mxu0 0.0
    %1098 = vmatprep.subr.mxu0 0.0
    %1099 = vmatpush1.msra.mxu0 0.0
    %1100 = vmatprep.subr.mxu0 0.0
    %1101 = vmatpush1.msra.mxu0 0.0
    %1102 = vmatprep.subr.mxu0 0.0
    %1103 = vmatpush1.msra.mxu0 0.0
    %1104 = vmatprep.subr.mxu0 0.0
    %1105 = vmatpush1.msra.mxu0 0.0
    %1106 = vmatprep.subr.mxu0 0.0
    %1107 = vmatpush1.msra.mxu0 0.0
    %1108 = vmatprep.subr.mxu0 0.0
    %1109 = vmatpush1.msra.mxu0 0.0
    %1110 = vmatprep.subr.mxu0 0.0
    %1111 = vmatpush1.msra.mxu0 0.0
    %1112 = vmatprep.subr.mxu0 0.0
    %1113 = vmatpush1.msra.mxu0 0.0
    %1114 = vmatprep.subr.mxu0 0.0
    %1115 = vmatpush1.msra.mxu0 0.0
    %1116 = vmatprep.subr.mxu0 0.0
    %1117 = vmatpush1.msra.mxu0 0.0
    %1118 = vmatprep.subr.mxu0 0.0
    %1119 = vmatpush1.msra.mxu0 0.0
    %1120 = vmatprep.subr.mxu0 0.0
    %1121 = vmatpush1.msra.mxu0 0.0
    %1122 = vmatprep.subr.mxu0 0.0
    %1123 = vmatpush1.msra.mxu0 0.0
    %1124 = vmatprep.subr.mxu0 0.0
    %1125 = vmatpush1.msra.mxu0 0.0
    %1126 = vmatprep.subr.mxu0 0.0
    %1127 = vmatpush1.msra.mxu0 0.0
    %1128 = vmatprep.subr.mxu0 0.0
    %1129 = vmatpush1.msra.mxu0 0.0
    %1130 = vmatprep.subr.mxu0 0.0
    %1131 = vmatpush1.msra.mxu0 0.0
    %1132 = vmatprep.subr.mxu0 0.0
    %1133 = vmatpush1.msra.mxu0 0.0
    %1134 = vmatprep.mubr.f32.mxu0 0.0
    %1135 = vmatmul.mubr.f32.gmra.mrb[0].mxu0 %v1068
    %v1136 = vpop.f32.mrb[0].mxu0
    %v1137 = vadd.f32 %v1065, %v1136
    %v1138 = vpop.f32.mrb[0].mxu0
    %1139 = vdwg.mxu0
    %1140 = vst [vmem:[#allocation13] sm:$0x3] %v1137
    // Predicated region
    $region86: #{tpu_custom_call.1} parent=1 // pred_check
      _
    $region87: #{tpu_custom_call.1} parent=1 // pred_check_branch
      %1142 = sbr.rel (0) target = $region89
    $region88: #{tpu_custom_call.1} parent=1 // pred_region
      %s1144 = ssub.s32 32, 32
      %1145 = vsyncadd [#allocation4], %s1144
      %s1147 = sshll.u32 [#allocation13], 4
      %s1148 = int_to_ptr.vmem [resolvable:$true] %s1147
      %1150 = dma.vmem_to_hbm [thread:$0]  %s1148, 32, %s15, [#allocation4]
    $region89: #{tpu_custom_call.1} parent=1 // pred_fallthru
      _
    // Predicated region
    $region90: #{tpu_custom_call.1} parent=1 // pred_check
      _
    $region91: #{tpu_custom_call.1} parent=1 // pred_check_branch
      %1152 = sbr.rel (0) target = $region93
    $region92: #{tpu_custom_call.1} parent=1 // pred_region
      %1153 = dma.done [#allocation4], 32
    $region93: #{tpu_custom_call.1} parent=1 // pred_fallthru
      _
    %1154 = vsyncpa [#allocation3], 1
    %1155 = vsyncpa [#allocation6], 1
    %1156 = vsyncpa [#allocation9], 1
    %1157 = vsyncpa [#allocation12], 1
    %1158 = vsyncpa [#allocation4], 1

</llo_original>
